<compile_context>
chip_gen: v5e
topology: v5e:2x2
jax: 0.10.0
libtpu: 0.0.40
codegen_flags: <defaults>
</compile_context>

<pallas_src>
import jax
import jax.numpy as jnp
from jax import lax
from jax.experimental import pallas as pl
from jax.experimental.pallas import tpu as pltpu

MXU_DTYPE = jnp.bfloat16      # MXU operand / intermediate-activation dtype
BN_EPS = 1e-5
MAX_TILE_ROWS = 8192          # cap on matmul M rows per grid step


# ----------------------------------------------------------------------------
# small helpers
# ----------------------------------------------------------------------------
def _divisors_desc(n):
    return [d for d in range(n, 0, -1) if n % d == 0]


def _vmem_limit_bytes():
    """Generation-dependent VMEM limit with headroom: ~3/4 of physical
    (96 MiB on v5e/v6e's 128 MiB, 48 MiB on v7x's 64 MiB); safe fallback."""
    cap = 64 * 1024 * 1024
    try:
        cap = int(getattr(pltpu.get_tpu_info(), "vmem_capacity_bytes", cap))
    except Exception:
        pass
    return (cap // 4) * 3


def _pick_conv_row_tile(H, W, C, Cout, budget):
    """Largest row tile th | H whose per-step VMEM footprint fits the budget."""
    for th in _divisors_desc(H):
        rows = th * W
        if rows > MAX_TILE_ROWS:
            continue
        if rows % 8 and th != H:
            continue
        per_step = (2 * (th + 2) * (W + 2) * C * 2   # double-buffered bf16 slab
                    + rows * 9 * C * 2               # assembled patch operand
                    + rows * Cout * 4                # f32 accumulator
                    + 2 * rows * Cout * 2)           # double-buffered bf16 out
        if per_step <= budget:
            return th
    return 1


def _build_halo_slabs(arrs, th):
    """Concat `arrs` along channels, zero-pad H/W by 1 and cut per-tile halo
    slabs (N*H//th, th+2, W+2, C) in bf16 — a single ~1.1x activation copy
    that replaces the old 9x HBM im2col."""
    N, H, W = arrs[0].shape[:3]
    xs = [jnp.pad(a.astype(MXU_DTYPE), ((0, 0), (1, 1), (1, 1), (0, 0)))
          for a in arrs]
    xp = xs[0] if len(xs) == 1 else jnp.concatenate(xs, axis=-1)
    nt = H // th
    slabs = jnp.stack([xp[:, t * th:t * th + th + 2] for t in range(nt)], axis=1)
    return slabs.reshape(N * nt, th + 2, W + 2, xp.shape[-1])


# ----------------------------------------------------------------------------
# Pallas kernels
# ----------------------------------------------------------------------------
def _matmul_bias_kernel(x_ref, w_ref, b_ref, o_ref):
    """Deconv(k=2,s=2) as one MXU matmul: (tm, Cin) @ (Cin, 4*Cout) + bias."""
    acc = jnp.dot(x_ref[...], w_ref[...], preferred_element_type=jnp.float32)
    o_ref[...] = (acc + b_ref[...]).astype(o_ref.dtype)


def _make_conv3x3_stats_kernel(th, W, C):
    """3x3 conv tile: in-VMEM im2col from a halo slab (9 shifted slices ->
    one (th*W, 9C) operand), single fused K=9C matmul, plus per-tile partial
    BatchNorm sum / sum-of-squares (f32, from the f32 accumulator).
    NOTE: conv bias intentionally omitted (cancels under training-mode BN)."""

    def kernel(slab_ref, w_ref, z_ref, sum_ref, sq_ref):
        taps = [slab_ref[dy:dy + th, dx:dx + W, :]
                for dy in range(3) for dx in range(3)]
        lhs = jnp.concatenate(taps, axis=-1).reshape(th * W, 9 * C)
        acc = jnp.dot(lhs, w_ref[...], preferred_element_type=jnp.float32)
        z_ref[...] = acc.astype(z_ref.dtype)
        sum_ref[...] = jnp.sum(acc, axis=0, keepdims=True)
        sq_ref[...] = jnp.sum(acc * acc, axis=0, keepdims=True)

    return kernel


def _bn_relu_kernel(z_ref, scale_ref, shift_ref, o_ref):
    """y = max(z*scale + shift, 0) on a lane-dense (rows, W*C) slab."""
    y = z_ref[...].astype(jnp.float32) * scale_ref[...] + shift_ref[...]
    o_ref[...] = jnp.maximum(y, 0.0).astype(o_ref.dtype)


# ----------------------------------------------------------------------------
# wrappers
# ----------------------------------------------------------------------------
def _deconv2x2(x_nhwc, up_w, up_b, vmem_limit):
    """ConvTranspose2d(k=2,s=2) as a tiled matmul, bf16 output."""
    N, H, W, Cin = x_nhwc.shape
    Cout = up_b.shape[0]
    M0 = N * H * W

    x_flat = x_nhwc.reshape(M0, Cin).astype(MXU_DTYPE)
    # up_w: (Cin, Cout, 2, 2) -> (Cin, 4*Cout), column = a*2*Cout + b*Cout + d
    w = jnp.transpose(up_w, (0, 2, 3, 1)).reshape(Cin, 4 * Cout).astype(MXU_DTYPE)
    b = jnp.tile(up_b, (4,)).reshape(1, 4 * Cout).astype(jnp.float32)

    budget = vmem_limit // 3
    tm = 1
    for d in _divisors_desc(M0):
        if d > MAX_TILE_ROWS:
            continue
        if d % 8 and d != M0:
            continue
        per_step = d * (2 * Cin * 2 + 2 * 4 * Cout * 2 + 4 * Cout * 4)
        if per_step <= budget:
            tm = d
            break

    y_flat = pl.pallas_call(
        _matmul_bias_kernel,
        grid=(M0 // tm,),
        in_specs=[pl.BlockSpec((tm, Cin), lambda i: (i, 0)),
                  pl.BlockSpec((Cin, 4 * Cout), lambda i: (0, 0)),
                  pl.BlockSpec((1, 4 * Cout), lambda i: (0, 0))],
        out_specs=pl.BlockSpec((tm, 4 * Cout), lambda i: (i, 0)),
        out_shape=jax.ShapeDtypeStruct((M0, 4 * Cout), MXU_DTYPE),
        compiler_params=pltpu.CompilerParams(
            dimension_semantics=("parallel",),
            vmem_limit_bytes=vmem_limit),
    )(x_flat, w, b)

    # Sub-pixel interleave (XLA glue; fuses into the conv1 slab build).
    # TODO(synk): fold into the pallas out_spec layout instead.
    y = y_flat.reshape(N, H, W, 2, 2, Cout)
    y = jnp.transpose(y, (0, 1, 3, 2, 4, 5)).reshape(N, 2 * H, 2 * W, Cout)
    return y


def _conv3x3_with_stats(slab, wmat, th, W, Cout, vmem_limit):
    """Phase 1: conv tiles (bf16 out) + per-tile partial BN stats (f32)."""
    n_tiles = slab.shape[0]
    C = slab.shape[-1]
    rows = th * W
    M = n_tiles * rows

    z, psum, psq = pl.pallas_call(
        _make_conv3x3_stats_kernel(th, W, C),
        grid=(n_tiles,),
        in_specs=[pl.BlockSpec((None, th + 2, W + 2, C), lambda i: (i, 0, 0, 0)),
                  pl.BlockSpec((9 * C, Cout), lambda i: (0, 0))],
        out_specs=(pl.BlockSpec((rows, Cout), lambda i: (i, 0)),
                   pl.BlockSpec((None, 1, Cout), lambda i: (i, 0, 0)),
                   pl.BlockSpec((None, 1, Cout), lambda i: (i, 0, 0))),
        out_shape=(jax.ShapeDtypeStruct((M, Cout), MXU_DTYPE),
                   jax.ShapeDtypeStruct((n_tiles, 1, Cout), jnp.float32),
                   jax.ShapeDtypeStruct((n_tiles, 1, Cout), jnp.float32)),
        compiler_params=pltpu.CompilerParams(
            dimension_semantics=("parallel",),   # no resident block -> megacore OK
            vmem_limit_bytes=vmem_limit),
    )(slab, wmat)
    return z, psum, psq


def _bn_scale_shift(psum, psq, count, gamma, beta):
    """Tiny XLA epilogue: reduce partials, fold into per-channel scale/shift."""
    mean = jnp.sum(psum, axis=(0, 1)) / count
    var = jnp.maximum(jnp.sum(psq, axis=(0, 1)) / count - mean * mean, 0.0)
    scale = gamma * lax.rsqrt(var + BN_EPS)
    shift = beta - mean * scale
    return scale, shift


def _bn_relu_apply(z_flat, scale, shift, N, H, W, Cout, out_dtype, vmem_limit):
    """Phase 2: normalize + ReLU on the lane-dense (N*H, W*Cout) view."""
    rows, wc = N * H, W * Cout
    zv = z_flat.reshape(rows, wc)                     # free row-major view
    scale_t = jnp.tile(scale, (W,)).reshape(1, wc).astype(jnp.float32)
    shift_t = jnp.tile(shift, (W,)).reshape(1, wc).astype(jnp.float32)

    out_bytes = jnp.dtype(out_dtype).itemsize
    budget = vmem_limit // 3
    tr = 1
    for d in _divisors_desc(rows):
        if d > MAX_TILE_ROWS:
            continue
        if d % 8 and d != rows:
            continue
        if d * wc * (2 * 2 + 2 * out_bytes) <= budget:  # dbuf bf16 in + dbuf out
            tr = d
            break

    out = pl.pallas_call(
        _bn_relu_kernel,
        grid=(rows // tr,),
        in_specs=[pl.BlockSpec((tr, wc), lambda i: (i, 0)),
                  pl.BlockSpec((1, wc), lambda i: (0, 0)),
                  pl.BlockSpec((1, wc), lambda i: (0, 0))],
        out_specs=pl.BlockSpec((tr, wc), lambda i: (i, 0)),
        out_shape=jax.ShapeDtypeStruct((rows, wc), out_dtype),
        compiler_params=pltpu.CompilerParams(
            dimension_semantics=("parallel",),
            vmem_limit_bytes=vmem_limit),
    )(zv, scale_t, shift_t)
    return out.reshape(N, H, W, Cout)


def up_block_forward(x_nchw, skip_nchw, p):
    """Pallas implementation of UpBlock.forward.  Inputs/outputs are NCHW."""
    vmem_limit = _vmem_limit_bytes()
    budget = vmem_limit // 3

    x = jnp.transpose(x_nchw, (0, 2, 3, 1))        # NHWC
    skip = jnp.transpose(skip_nchw, (0, 2, 3, 1))  # NHWC
    N, H, W, _ = x.shape
    H2, W2 = 2 * H, 2 * W
    Cout = p["up_b"].shape[0]
    count = N * H2 * W2

    # ConvTranspose2d(k=2, s=2)
    y = _deconv2x2(x, p["up_w"], p["up_b"], vmem_limit)       # (N,H2,W2,Cout) bf16

    # conv1 over cat([y, skip], channels): concat folded into the slab build;
    # conv bias dropped (cancels under training-mode BN).
    Cin1 = Cout + skip.shape[-1]
    th1 = _pick_conv_row_tile(H2, W2, Cin1, Cout, budget)
    slab1 = _build_halo_slabs([y, skip], th1)
    w1 = p["w1"].reshape(9 * Cin1, Cout).astype(MXU_DTYPE)
    z1, s1, q1 = _conv3x3_with_stats(slab1, w1, th1, W2, Cout, vmem_limit)
    scale1, shift1 = _bn_scale_shift(s1, q1, count, p["g1"], p["beta1"])
    h = _bn_relu_apply(z1, scale1, shift1, N, H2, W2, Cout, MXU_DTYPE, vmem_limit)

    # conv2 + BN2 + ReLU
    th2 = _pick_conv_row_tile(H2, W2, Cout, Cout, budget)
    slab2 = _build_halo_slabs([h], th2)
    w2 = p["w2"].reshape(9 * Cout, Cout).astype(MXU_DTYPE)
    z2, s2, q2 = _conv3x3_with_stats(slab2, w2, th2, W2, Cout, vmem_limit)
    scale2, shift2 = _bn_scale_shift(s2, q2, count, p["g2"], p["beta2"])
    out = _bn_relu_apply(z2, scale2, shift2, N, H2, W2, Cout, jnp.float32,
                         vmem_limit)

    return jnp.transpose(out, (0, 3, 1, 2))        # back to NCHW


# ----------------------------------------------------------------------------
# Pure-JAX reference (keeps conv biases and two-pass BN; mirrors the bf16
# MXU-operand casts) — validates the kernel pipeline end to end.
# ----------------------------------------------------------------------------
def up_block_reference(x_nchw, skip_nchw, p):
    x = jnp.transpose(x_nchw, (0, 2, 3, 1))
    skip = jnp.transpose(skip_nchw, (0, 2, 3, 1))
    N, H, W, _ = x.shape
    Cout = p["up_b"].shape[0]

    up = jnp.einsum("nijc,cdab->niajbd",
                    x.astype(MXU_DTYPE), p["up_w"].astype(MXU_DTYPE),
                    preferred_element_type=jnp.float32)
    up = up.reshape(N, 2 * H, 2 * W, Cout) + p["up_b"]

    cat = jnp.concatenate([up, skip], axis=-1)

    def conv(z, w_hwio, b):
        return lax.conv_general_dilated(
            z.astype(MXU_DTYPE), w_hwio.astype(MXU_DTYPE),
            window_strides=(1, 1), padding="SAME",
            dimension_numbers=("NHWC", "HWIO", "NHWC"),
            preferred_element_type=jnp.float32) + b

    def bn_relu(y, gamma, beta):
        mean = jnp.mean(y, axis=(0, 1, 2), keepdims=True)
        var = jnp.mean((y - mean) ** 2, axis=(0, 1, 2), keepdims=True)
        return jnp.maximum((y - mean) * lax.rsqrt(var + BN_EPS) * gamma + beta, 0.0)

    h = bn_relu(conv(cat, p["w1"], p["b1"]), p["g1"], p["beta1"])
    h = bn_relu(conv(h, p["w2"], p["b2"]), p["g2"], p["beta2"])
    return jnp.transpose(h, (0, 3, 1, 2))


# ----------------------------------------------------------------------------
# Deterministic parameter init (PyTorch-like shapes, synthetic values)
# ----------------------------------------------------------------------------
def init_params(key, in_channels, out_channels):
    k = jax.random.split(key, 6)
    Cin, Cout = in_channels, out_channels

    def u(key, shape, fan_in):
        bound = 1.0 / jnp.sqrt(jnp.asarray(fan_in, jnp.float32))
        return jax.random.uniform(key, shape, jnp.float32, -bound, bound)

    up_w = u(k[0], (Cin, Cout, 2, 2), Cout * 4)     # ConvTranspose2d weight layout
    up_b = u(k[1], (Cout,), Cout * 4)
    w1 = u(k[2], (3, 3, Cin, Cout), Cin * 9)        # HWIO, input chans = [up | skip]
    b1 = u(k[3], (Cout,), Cin * 9)
    w2 = u(k[4], (3, 3, Cout, Cout), Cout * 9)      # HWIO
    b2 = u(k[5], (Cout,), Cout * 9)

    return dict(
        up_w=up_w, up_b=up_b,
        w1=w1, b1=b1,
        g1=jnp.ones((Cout,), jnp.float32), beta1=jnp.zeros((Cout,), jnp.float32),
        w2=w2, b2=b2,
        g2=jnp.ones((Cout,), jnp.float32), beta2=jnp.zeros((Cout,), jnp.float32),
    )


# ----------------------------------------------------------------------------
if __name__ == "__main__":
    in_channels, out_channels = 8, 4     # standard U-Net: skip has Cin - Cout channels
    N, H, W = 2, 8, 8

    key = jax.random.PRNGKey(0)
    kx, ks, kp = jax.random.split(key, 3)
    x = jax.random.normal(kx, (N, in_channels, H, W), jnp.float32)                       # NCHW
    skip = jax.random.normal(ks, (N, in_channels - out_channels, 2 * H, 2 * W),
                             jnp.float32)
    params = init_params(kp, in_channels, out_channels)

    out = jax.block_until_ready(jax.jit(up_block_forward)(x, skip, params))
    ref = jax.block_until_ready(jax.jit(up_block_reference)(x, skip, params))

    assert out.shape == (N, out_channels, 2 * H, 2 * W), out.shape
    # bf16 MXU operands + bf16 intermediates: kernel and reference round at
    # independent points, so compare with a bf16-appropriate tolerance.
    assert jnp.allclose(out, ref, atol=4e-2, rtol=4e-2)

    print("KERNEL_OK")
</pallas_src>

<mosaic_0001>
module attributes {stable_mosaic.version = 11 : i64} {
  func.func @_matmul_bias_kernel(%arg0: i32, %arg1: memref<128x8xbf16, #tpu.memory_space<vmem>>, %arg2: memref<8x16xbf16, #tpu.memory_space<vmem>>, %arg3: memref<1x16xf32, #tpu.memory_space<vmem>>, %arg4: memref<128x16xbf16, #tpu.memory_space<vmem>>) attributes {dimension_semantics = [#tpu.dimension_semantics<parallel>], iteration_bounds = array<i64: 1>, scalar_prefetch = 0 : i64, scratch_operands = 0 : i64, tpu.core_type = #tpu.core_type<tc>, window_params = [{transform_indices = @transform_0, window_bounds = array<i64: 128, 8>}, {pipeline_mode = #tpu.pipeline_mode<synchronous>, transform_indices = @transform_1, window_bounds = array<i64: 8, 16>}, {pipeline_mode = #tpu.pipeline_mode<synchronous>, transform_indices = @transform_2, window_bounds = array<i64: 1, 16>}, {transform_indices = @transform_3, window_bounds = array<i64: 128, 16>}]} {
    %c0 = arith.constant 0 : index
    %c0_0 = arith.constant 0 : index
    %0 = vector.load %arg1[%c0, %c0_0] : memref<128x8xbf16, #tpu.memory_space<vmem>>, vector<128x8xbf16>
    %c0_1 = arith.constant 0 : index
    %c0_2 = arith.constant 0 : index
    %1 = vector.load %arg2[%c0_1, %c0_2] : memref<8x16xbf16, #tpu.memory_space<vmem>>, vector<8x16xbf16>
    %cst = arith.constant dense<0.000000e+00> : vector<128x16xf32>
    %2 = tpu.matmul %0, %1, %cst {dimension_numbers = #tpu.dot_dimension_numbers<[1], [0], [0], [1], [0, 0, 1, 1], [], []>} : vector<128x8xbf16>, vector<8x16xbf16>, vector<128x16xf32> -> vector<128x16xf32>
    %c0_3 = arith.constant 0 : index
    %c0_4 = arith.constant 0 : index
    %3 = vector.load %arg3[%c0_3, %c0_4] : memref<1x16xf32, #tpu.memory_space<vmem>>, vector<1x16xf32>
    %4 = vector.broadcast %3 : vector<1x16xf32> to vector<128x16xf32>
    %5 = arith.addf %2, %4 : vector<128x16xf32>
    %6 = arith.truncf %5 : vector<128x16xf32> to vector<128x16xbf16>
    %c0_5 = arith.constant 0 : index
    %c0_6 = arith.constant 0 : index
    %7 = vector.load %arg4[%c0_5, %c0_6] : memref<128x16xbf16, #tpu.memory_space<vmem>>, vector<128x16xbf16>
    tpu.vector_store %arg4[%c0_5, %c0_6], %6 {strides = array<i32>} : memref<128x16xbf16, #tpu.memory_space<vmem>>, vector<128x16xbf16>,
    return
  }
  func.func @transform_0(%arg0: i32) -> (i32, i32) {
    %c0_i32 = arith.constant 0 : i32
    %c0_i32_0 = arith.constant 0 : i32
    return %arg0, %c0_i32 : i32, i32
  }
  func.func @transform_1(%arg0: i32) -> (i32, i32) {
    %c0_i32 = arith.constant 0 : i32
    %c0_i32_0 = arith.constant 0 : i32
    %c0_i32_1 = arith.constant 0 : i32
    return %c0_i32, %c0_i32_0 : i32, i32
  }
  func.func @transform_2(%arg0: i32) -> (i32, i32) {
    %c0_i32 = arith.constant 0 : i32
    %c0_i32_0 = arith.constant 0 : i32
    %c0_i32_1 = arith.constant 0 : i32
    return %c0_i32, %c0_i32_0 : i32, i32
  }
  func.func @transform_3(%arg0: i32) -> (i32, i32) {
    %c0_i32 = arith.constant 0 : i32
    %c0_i32_0 = arith.constant 0 : i32
    return %arg0, %c0_i32 : i32, i32
  }
}

module attributes {stable_mosaic.version = 11 : i64} {
  func.func @kernel(%arg0: i32, %arg1: memref<1x18x18x8xbf16, #tpu.memory_space<vmem>>, %arg2: memref<72x4xbf16, #tpu.memory_space<vmem>>, %arg3: memref<256x4xbf16, #tpu.memory_space<vmem>>, %arg4: memref<1x1x4xf32, #tpu.memory_space<vmem>>, %arg5: memref<1x1x4xf32, #tpu.memory_space<vmem>>) attributes {dimension_semantics = [#tpu.dimension_semantics<parallel>], iteration_bounds = array<i64: 2>, scalar_prefetch = 0 : i64, scratch_operands = 0 : i64, tpu.core_type = #tpu.core_type<tc>, window_params = [{transform_indices = @transform_0, window_bounds = array<i64: 1, 18, 18, 8>}, {pipeline_mode = #tpu.pipeline_mode<synchronous>, transform_indices = @transform_1, window_bounds = array<i64: 72, 4>}, {transform_indices = @transform_2, window_bounds = array<i64: 256, 4>}, {transform_indices = @transform_3, window_bounds = array<i64: 1, 1, 4>}, {transform_indices = @transform_4, window_bounds = array<i64: 1, 1, 4>}]} {
    %c0 = arith.constant 0 : index
    %c0_0 = arith.constant 0 : index
    %c0_1 = arith.constant 0 : index
    %c0_2 = arith.constant 0 : index
    %0 = vector.load %arg1[%c0, %c0_0, %c0_1, %c0_2] : memref<1x18x18x8xbf16, #tpu.memory_space<vmem>>, vector<1x16x16x8xbf16>
    %1 = vector.shape_cast %0 : vector<1x16x16x8xbf16> to vector<16x16x8xbf16>
    %c0_3 = arith.constant 0 : index
    %c0_4 = arith.constant 0 : index
    %c1 = arith.constant 1 : index
    %c0_5 = arith.constant 0 : index
    %2 = vector.load %arg1[%c0_3, %c0_4, %c1, %c0_5] : memref<1x18x18x8xbf16, #tpu.memory_space<vmem>>, vector<1x16x16x8xbf16>
    %3 = vector.shape_cast %2 : vector<1x16x16x8xbf16> to vector<16x16x8xbf16>
    %c0_6 = arith.constant 0 : index
    %c0_7 = arith.constant 0 : index
    %c2 = arith.constant 2 : index
    %c0_8 = arith.constant 0 : index
    %4 = vector.load %arg1[%c0_6, %c0_7, %c2, %c0_8] : memref<1x18x18x8xbf16, #tpu.memory_space<vmem>>, vector<1x16x16x8xbf16>
    %5 = vector.shape_cast %4 : vector<1x16x16x8xbf16> to vector<16x16x8xbf16>
    %c0_9 = arith.constant 0 : index
    %c1_10 = arith.constant 1 : index
    %c0_11 = arith.constant 0 : index
    %c0_12 = arith.constant 0 : index
    %6 = vector.load %arg1[%c0_9, %c1_10, %c0_11, %c0_12] : memref<1x18x18x8xbf16, #tpu.memory_space<vmem>>, vector<1x16x16x8xbf16>
    %7 = vector.shape_cast %6 : vector<1x16x16x8xbf16> to vector<16x16x8xbf16>
    %c0_13 = arith.constant 0 : index
    %c1_14 = arith.constant 1 : index
    %c1_15 = arith.constant 1 : index
    %c0_16 = arith.constant 0 : index
    %8 = vector.load %arg1[%c0_13, %c1_14, %c1_15, %c0_16] : memref<1x18x18x8xbf16, #tpu.memory_space<vmem>>, vector<1x16x16x8xbf16>
    %9 = vector.shape_cast %8 : vector<1x16x16x8xbf16> to vector<16x16x8xbf16>
    %c0_17 = arith.constant 0 : index
    %c1_18 = arith.constant 1 : index
    %c2_19 = arith.constant 2 : index
    %c0_20 = arith.constant 0 : index
    %10 = vector.load %arg1[%c0_17, %c1_18, %c2_19, %c0_20] : memref<1x18x18x8xbf16, #tpu.memory_space<vmem>>, vector<1x16x16x8xbf16>
    %11 = vector.shape_cast %10 : vector<1x16x16x8xbf16> to vector<16x16x8xbf16>
    %c0_21 = arith.constant 0 : index
    %c2_22 = arith.constant 2 : index
    %c0_23 = arith.constant 0 : index
    %c0_24 = arith.constant 0 : index
    %12 = vector.load %arg1[%c0_21, %c2_22, %c0_23, %c0_24] : memref<1x18x18x8xbf16, #tpu.memory_space<vmem>>, vector<1x16x16x8xbf16>
    %13 = vector.shape_cast %12 : vector<1x16x16x8xbf16> to vector<16x16x8xbf16>
    %c0_25 = arith.constant 0 : index
    %c2_26 = arith.constant 2 : index
    %c1_27 = arith.constant 1 : index
    %c0_28 = arith.constant 0 : index
    %14 = vector.load %arg1[%c0_25, %c2_26, %c1_27, %c0_28] : memref<1x18x18x8xbf16, #tpu.memory_space<vmem>>, vector<1x16x16x8xbf16>
    %15 = vector.shape_cast %14 : vector<1x16x16x8xbf16> to vector<16x16x8xbf16>
    %c0_29 = arith.constant 0 : index
    %c2_30 = arith.constant 2 : index
    %c2_31 = arith.constant 2 : index
    %c0_32 = arith.constant 0 : index
    %16 = vector.load %arg1[%c0_29, %c2_30, %c2_31, %c0_32] : memref<1x18x18x8xbf16, #tpu.memory_space<vmem>>, vector<1x16x16x8xbf16>
    %17 = vector.shape_cast %16 : vector<1x16x16x8xbf16> to vector<16x16x8xbf16>
    %18 = tpu.concatenate %1, %3, %5, %7, %9, %11, %13, %15, %17 in 2 : vector<16x16x8xbf16>, vector<16x16x8xbf16>, vector<16x16x8xbf16>, vector<16x16x8xbf16>, vector<16x16x8xbf16>, vector<16x16x8xbf16>, vector<16x16x8xbf16>, vector<16x16x8xbf16>, vector<16x16x8xbf16> -> vector<16x16x72xbf16>
    %19 = vector.shape_cast %18 : vector<16x16x72xbf16> to vector<256x72xbf16>
    %c0_33 = arith.constant 0 : index
    %c0_34 = arith.constant 0 : index
    %20 = vector.load %arg2[%c0_33, %c0_34] : memref<72x4xbf16, #tpu.memory_space<vmem>>, vector<72x4xbf16>
    %cst = arith.constant dense<0.000000e+00> : vector<256x4xf32>
    %21 = tpu.matmul %19, %20, %cst {dimension_numbers = #tpu.dot_dimension_numbers<[1], [0], [0], [1], [0, 0, 1, 1], [], []>} : vector<256x72xbf16>, vector<72x4xbf16>, vector<256x4xf32> -> vector<256x4xf32>
    %22 = arith.truncf %21 : vector<256x4xf32> to vector<256x4xbf16>
    %c0_35 = arith.constant 0 : index
    %c0_36 = arith.constant 0 : index
    %23 = vector.load %arg3[%c0_35, %c0_36] : memref<256x4xbf16, #tpu.memory_space<vmem>>, vector<256x4xbf16>
    tpu.vector_store %arg3[%c0_35, %c0_36], %22 {strides = array<i32>} : memref<256x4xbf16, #tpu.memory_space<vmem>>, vector<256x4xbf16>,
    %cst_37 = arith.constant dense<0.000000e+00> : vector<4xf32>
    %24 = vector.multi_reduction <add>, %21, %cst_37 [0] : vector<256x4xf32> to vector<4xf32>
    %25 = vector.shape_cast %24 : vector<4xf32> to vector<1x4xf32>
    %c0_38 = arith.constant 0 : index
    %c0_39 = arith.constant 0 : index
    %c0_40 = arith.constant 0 : index
    %26 = vector.load %arg4[%c0_38, %c0_39, %c0_40] : memref<1x1x4xf32, #tpu.memory_space<vmem>>, vector<1x1x4xf32>
    %27 = vector.shape_cast %26 : vector<1x1x4xf32> to vector<1x4xf32>
    %28 = vector.shape_cast %25 : vector<1x4xf32> to vector<1x1x4xf32>
    tpu.vector_store %arg4[%c0_38, %c0_39, %c0_40], %28 {strides = array<i32>} : memref<1x1x4xf32, #tpu.memory_space<vmem>>, vector<1x1x4xf32>,
    %29 = arith.mulf %21, %21 : vector<256x4xf32>
    %cst_41 = arith.constant dense<0.000000e+00> : vector<4xf32>
    %30 = vector.multi_reduction <add>, %29, %cst_41 [0] : vector<256x4xf32> to vector<4xf32>
    %31 = vector.shape_cast %30 : vector<4xf32> to vector<1x4xf32>
    %c0_42 = arith.constant 0 : index
    %c0_43 = arith.constant 0 : index
    %c0_44 = arith.constant 0 : index
    %32 = vector.load %arg5[%c0_42, %c0_43, %c0_44] : memref<1x1x4xf32, #tpu.memory_space<vmem>>, vector<1x1x4xf32>
    %33 = vector.shape_cast %32 : vector<1x1x4xf32> to vector<1x4xf32>
    %34 = vector.shape_cast %31 : vector<1x4xf32> to vector<1x1x4xf32>
    tpu.vector_store %arg5[%c0_42, %c0_43, %c0_44], %34 {strides = array<i32>} : memref<1x1x4xf32, #tpu.memory_space<vmem>>, vector<1x1x4xf32>,
    return
  }
  func.func @transform_0(%arg0: i32) -> (i32, i32, i32, i32) {
    %c0_i32 = arith.constant 0 : i32
    %c0_i32_0 = arith.constant 0 : i32
    %c0_i32_1 = arith.constant 0 : i32
    %c0_i32_2 = arith.constant 0 : i32
    return %arg0, %c0_i32, %c0_i32_0, %c0_i32_1 : i32, i32, i32, i32
  }
  func.func @transform_1(%arg0: i32) -> (i32, i32) {
    %c0_i32 = arith.constant 0 : i32
    %c0_i32_0 = arith.constant 0 : i32
    %c0_i32_1 = arith.constant 0 : i32
    return %c0_i32, %c0_i32_0 : i32, i32
  }
  func.func @transform_2(%arg0: i32) -> (i32, i32) {
    %c0_i32 = arith.constant 0 : i32
    %c0_i32_0 = arith.constant 0 : i32
    return %arg0, %c0_i32 : i32, i32
  }
  func.func @transform_3(%arg0: i32) -> (i32, i32, i32) {
    %c0_i32 = arith.constant 0 : i32
    %c0_i32_0 = arith.constant 0 : i32
    %c0_i32_1 = arith.constant 0 : i32
    return %arg0, %c0_i32, %c0_i32_0 : i32, i32, i32
  }
  func.func @transform_4(%arg0: i32) -> (i32, i32, i32) {
    %c0_i32 = arith.constant 0 : i32
    %c0_i32_0 = arith.constant 0 : i32
    %c0_i32_1 = arith.constant 0 : i32
    return %arg0, %c0_i32, %c0_i32_0 : i32, i32, i32
  }
}

module attributes {stable_mosaic.version = 11 : i64} {
  func.func @_bn_relu_kernel(%arg0: i32, %arg1: memref<32x64xbf16, #tpu.memory_space<vmem>>, %arg2: memref<1x64xf32, #tpu.memory_space<vmem>>, %arg3: memref<1x64xf32, #tpu.memory_space<vmem>>, %arg4: memref<32x64xbf16, #tpu.memory_space<vmem>>) attributes {dimension_semantics = [#tpu.dimension_semantics<parallel>], iteration_bounds = array<i64: 1>, scalar_prefetch = 0 : i64, scratch_operands = 0 : i64, tpu.core_type = #tpu.core_type<tc>, window_params = [{transform_indices = @transform_0, window_bounds = array<i64: 32, 64>}, {pipeline_mode = #tpu.pipeline_mode<synchronous>, transform_indices = @transform_1, window_bounds = array<i64: 1, 64>}, {pipeline_mode = #tpu.pipeline_mode<synchronous>, transform_indices = @transform_2, window_bounds = array<i64: 1, 64>}, {transform_indices = @transform_3, window_bounds = array<i64: 32, 64>}]} {
    %c0 = arith.constant 0 : index
    %c0_0 = arith.constant 0 : index
    %0 = vector.load %arg1[%c0, %c0_0] : memref<32x64xbf16, #tpu.memory_space<vmem>>, vector<32x64xbf16>
    %1 = arith.extf %0 : vector<32x64xbf16> to vector<32x64xf32>
    %c0_1 = arith.constant 0 : index
    %c0_2 = arith.constant 0 : index
    %2 = vector.load %arg2[%c0_1, %c0_2] : memref<1x64xf32, #tpu.memory_space<vmem>>, vector<1x64xf32>
    %3 = vector.broadcast %2 : vector<1x64xf32> to vector<32x64xf32>
    %4 = arith.mulf %1, %3 : vector<32x64xf32>
    %c0_3 = arith.constant 0 : index
    %c0_4 = arith.constant 0 : index
    %5 = vector.load %arg3[%c0_3, %c0_4] : memref<1x64xf32, #tpu.memory_space<vmem>>, vector<1x64xf32>
    %6 = vector.broadcast %5 : vector<1x64xf32> to vector<32x64xf32>
    %7 = arith.addf %4, %6 : vector<32x64xf32>
    %cst = arith.constant 0.000000e+00 : f32
    %8 = vector.broadcast %cst : f32 to vector<32x64xf32>
    %9 = arith.maximumf %7, %8 : vector<32x64xf32>
    %10 = arith.truncf %9 : vector<32x64xf32> to vector<32x64xbf16>
    %c0_5 = arith.constant 0 : index
    %c0_6 = arith.constant 0 : index
    %11 = vector.load %arg4[%c0_5, %c0_6] : memref<32x64xbf16, #tpu.memory_space<vmem>>, vector<32x64xbf16>
    tpu.vector_store %arg4[%c0_5, %c0_6], %10 {strides = array<i32>} : memref<32x64xbf16, #tpu.memory_space<vmem>>, vector<32x64xbf16>,
    return
  }
  func.func @transform_0(%arg0: i32) -> (i32, i32) {
    %c0_i32 = arith.constant 0 : i32
    %c0_i32_0 = arith.constant 0 : i32
    return %arg0, %c0_i32 : i32, i32
  }
  func.func @transform_1(%arg0: i32) -> (i32, i32) {
    %c0_i32 = arith.constant 0 : i32
    %c0_i32_0 = arith.constant 0 : i32
    %c0_i32_1 = arith.constant 0 : i32
    return %c0_i32, %c0_i32_0 : i32, i32
  }
  func.func @transform_2(%arg0: i32) -> (i32, i32) {
    %c0_i32 = arith.constant 0 : i32
    %c0_i32_0 = arith.constant 0 : i32
    %c0_i32_1 = arith.constant 0 : i32
    return %c0_i32, %c0_i32_0 : i32, i32
  }
  func.func @transform_3(%arg0: i32) -> (i32, i32) {
    %c0_i32 = arith.constant 0 : i32
    %c0_i32_0 = arith.constant 0 : i32
    return %arg0, %c0_i32 : i32, i32
  }
}

module attributes {stable_mosaic.version = 11 : i64} {
  func.func @kernel(%arg0: i32, %arg1: memref<1x18x18x4xbf16, #tpu.memory_space<vmem>>, %arg2: memref<36x4xbf16, #tpu.memory_space<vmem>>, %arg3: memref<256x4xbf16, #tpu.memory_space<vmem>>, %arg4: memref<1x1x4xf32, #tpu.memory_space<vmem>>, %arg5: memref<1x1x4xf32, #tpu.memory_space<vmem>>) attributes {dimension_semantics = [#tpu.dimension_semantics<parallel>], iteration_bounds = array<i64: 2>, scalar_prefetch = 0 : i64, scratch_operands = 0 : i64, tpu.core_type = #tpu.core_type<tc>, window_params = [{transform_indices = @transform_0, window_bounds = array<i64: 1, 18, 18, 4>}, {pipeline_mode = #tpu.pipeline_mode<synchronous>, transform_indices = @transform_1, window_bounds = array<i64: 36, 4>}, {transform_indices = @transform_2, window_bounds = array<i64: 256, 4>}, {transform_indices = @transform_3, window_bounds = array<i64: 1, 1, 4>}, {transform_indices = @transform_4, window_bounds = array<i64: 1, 1, 4>}]} {
    %c0 = arith.constant 0 : index
    %c0_0 = arith.constant 0 : index
    %c0_1 = arith.constant 0 : index
    %c0_2 = arith.constant 0 : index
    %0 = vector.load %arg1[%c0, %c0_0, %c0_1, %c0_2] : memref<1x18x18x4xbf16, #tpu.memory_space<vmem>>, vector<1x16x16x4xbf16>
    %1 = vector.shape_cast %0 : vector<1x16x16x4xbf16> to vector<16x16x4xbf16>
    %c0_3 = arith.constant 0 : index
    %c0_4 = arith.constant 0 : index
    %c1 = arith.constant 1 : index
    %c0_5 = arith.constant 0 : index
    %2 = vector.load %arg1[%c0_3, %c0_4, %c1, %c0_5] : memref<1x18x18x4xbf16, #tpu.memory_space<vmem>>, vector<1x16x16x4xbf16>
    %3 = vector.shape_cast %2 : vector<1x16x16x4xbf16> to vector<16x16x4xbf16>
    %c0_6 = arith.constant 0 : index
    %c0_7 = arith.constant 0 : index
    %c2 = arith.constant 2 : index
    %c0_8 = arith.constant 0 : index
    %4 = vector.load %arg1[%c0_6, %c0_7, %c2, %c0_8] : memref<1x18x18x4xbf16, #tpu.memory_space<vmem>>, vector<1x16x16x4xbf16>
    %5 = vector.shape_cast %4 : vector<1x16x16x4xbf16> to vector<16x16x4xbf16>
    %c0_9 = arith.constant 0 : index
    %c1_10 = arith.constant 1 : index
    %c0_11 = arith.constant 0 : index
    %c0_12 = arith.constant 0 : index
    %6 = vector.load %arg1[%c0_9, %c1_10, %c0_11, %c0_12] : memref<1x18x18x4xbf16, #tpu.memory_space<vmem>>, vector<1x16x16x4xbf16>
    %7 = vector.shape_cast %6 : vector<1x16x16x4xbf16> to vector<16x16x4xbf16>
    %c0_13 = arith.constant 0 : index
    %c1_14 = arith.constant 1 : index
    %c1_15 = arith.constant 1 : index
    %c0_16 = arith.constant 0 : index
    %8 = vector.load %arg1[%c0_13, %c1_14, %c1_15, %c0_16] : memref<1x18x18x4xbf16, #tpu.memory_space<vmem>>, vector<1x16x16x4xbf16>
    %9 = vector.shape_cast %8 : vector<1x16x16x4xbf16> to vector<16x16x4xbf16>
    %c0_17 = arith.constant 0 : index
    %c1_18 = arith.constant 1 : index
    %c2_19 = arith.constant 2 : index
    %c0_20 = arith.constant 0 : index
    %10 = vector.load %arg1[%c0_17, %c1_18, %c2_19, %c0_20] : memref<1x18x18x4xbf16, #tpu.memory_space<vmem>>, vector<1x16x16x4xbf16>
    %11 = vector.shape_cast %10 : vector<1x16x16x4xbf16> to vector<16x16x4xbf16>
    %c0_21 = arith.constant 0 : index
    %c2_22 = arith.constant 2 : index
    %c0_23 = arith.constant 0 : index
    %c0_24 = arith.constant 0 : index
    %12 = vector.load %arg1[%c0_21, %c2_22, %c0_23, %c0_24] : memref<1x18x18x4xbf16, #tpu.memory_space<vmem>>, vector<1x16x16x4xbf16>
    %13 = vector.shape_cast %12 : vector<1x16x16x4xbf16> to vector<16x16x4xbf16>
    %c0_25 = arith.constant 0 : index
    %c2_26 = arith.constant 2 : index
    %c1_27 = arith.constant 1 : index
    %c0_28 = arith.constant 0 : index
    %14 = vector.load %arg1[%c0_25, %c2_26, %c1_27, %c0_28] : memref<1x18x18x4xbf16, #tpu.memory_space<vmem>>, vector<1x16x16x4xbf16>
    %15 = vector.shape_cast %14 : vector<1x16x16x4xbf16> to vector<16x16x4xbf16>
    %c0_29 = arith.constant 0 : index
    %c2_30 = arith.constant 2 : index
    %c2_31 = arith.constant 2 : index
    %c0_32 = arith.constant 0 : index
    %16 = vector.load %arg1[%c0_29, %c2_30, %c2_31, %c0_32] : memref<1x18x18x4xbf16, #tpu.memory_space<vmem>>, vector<1x16x16x4xbf16>
    %17 = vector.shape_cast %16 : vector<1x16x16x4xbf16> to vector<16x16x4xbf16>
    %18 = tpu.concatenate %1, %3, %5, %7, %9, %11, %13, %15, %17 in 2 : vector<16x16x4xbf16>, vector<16x16x4xbf16>, vector<16x16x4xbf16>, vector<16x16x4xbf16>, vector<16x16x4xbf16>, vector<16x16x4xbf16>, vector<16x16x4xbf16>, vector<16x16x4xbf16>, vector<16x16x4xbf16> -> vector<16x16x36xbf16>
    %19 = vector.shape_cast %18 : vector<16x16x36xbf16> to vector<256x36xbf16>
    %c0_33 = arith.constant 0 : index
    %c0_34 = arith.constant 0 : index
    %20 = vector.load %arg2[%c0_33, %c0_34] : memref<36x4xbf16, #tpu.memory_space<vmem>>, vector<36x4xbf16>
    %cst = arith.constant dense<0.000000e+00> : vector<256x4xf32>
    %21 = tpu.matmul %19, %20, %cst {dimension_numbers = #tpu.dot_dimension_numbers<[1], [0], [0], [1], [0, 0, 1, 1], [], []>} : vector<256x36xbf16>, vector<36x4xbf16>, vector<256x4xf32> -> vector<256x4xf32>
    %22 = arith.truncf %21 : vector<256x4xf32> to vector<256x4xbf16>
    %c0_35 = arith.constant 0 : index
    %c0_36 = arith.constant 0 : index
    %23 = vector.load %arg3[%c0_35, %c0_36] : memref<256x4xbf16, #tpu.memory_space<vmem>>, vector<256x4xbf16>
    tpu.vector_store %arg3[%c0_35, %c0_36], %22 {strides = array<i32>} : memref<256x4xbf16, #tpu.memory_space<vmem>>, vector<256x4xbf16>,
    %cst_37 = arith.constant dense<0.000000e+00> : vector<4xf32>
    %24 = vector.multi_reduction <add>, %21, %cst_37 [0] : vector<256x4xf32> to vector<4xf32>
    %25 = vector.shape_cast %24 : vector<4xf32> to vector<1x4xf32>
    %c0_38 = arith.constant 0 : index
    %c0_39 = arith.constant 0 : index
    %c0_40 = arith.constant 0 : index
    %26 = vector.load %arg4[%c0_38, %c0_39, %c0_40] : memref<1x1x4xf32, #tpu.memory_space<vmem>>, vector<1x1x4xf32>
    %27 = vector.shape_cast %26 : vector<1x1x4xf32> to vector<1x4xf32>
    %28 = vector.shape_cast %25 : vector<1x4xf32> to vector<1x1x4xf32>
    tpu.vector_store %arg4[%c0_38, %c0_39, %c0_40], %28 {strides = array<i32>} : memref<1x1x4xf32, #tpu.memory_space<vmem>>, vector<1x1x4xf32>,
    %29 = arith.mulf %21, %21 : vector<256x4xf32>
    %cst_41 = arith.constant dense<0.000000e+00> : vector<4xf32>
    %30 = vector.multi_reduction <add>, %29, %cst_41 [0] : vector<256x4xf32> to vector<4xf32>
    %31 = vector.shape_cast %30 : vector<4xf32> to vector<1x4xf32>
    %c0_42 = arith.constant 0 : index
    %c0_43 = arith.constant 0 : index
    %c0_44 = arith.constant 0 : index
    %32 = vector.load %arg5[%c0_42, %c0_43, %c0_44] : memref<1x1x4xf32, #tpu.memory_space<vmem>>, vector<1x1x4xf32>
    %33 = vector.shape_cast %32 : vector<1x1x4xf32> to vector<1x4xf32>
    %34 = vector.shape_cast %31 : vector<1x4xf32> to vector<1x1x4xf32>
    tpu.vector_store %arg5[%c0_42, %c0_43, %c0_44], %34 {strides = array<i32>} : memref<1x1x4xf32, #tpu.memory_space<vmem>>, vector<1x1x4xf32>,
    return
  }
  func.func @transform_0(%arg0: i32) -> (i32, i32, i32, i32) {
    %c0_i32 = arith.constant 0 : i32
    %c0_i32_0 = arith.constant 0 : i32
    %c0_i32_1 = arith.constant 0 : i32
    %c0_i32_2 = arith.constant 0 : i32
    return %arg0, %c0_i32, %c0_i32_0, %c0_i32_1 : i32, i32, i32, i32
  }
  func.func @transform_1(%arg0: i32) -> (i32, i32) {
    %c0_i32 = arith.constant 0 : i32
    %c0_i32_0 = arith.constant 0 : i32
    %c0_i32_1 = arith.constant 0 : i32
    return %c0_i32, %c0_i32_0 : i32, i32
  }
  func.func @transform_2(%arg0: i32) -> (i32, i32) {
    %c0_i32 = arith.constant 0 : i32
    %c0_i32_0 = arith.constant 0 : i32
    return %arg0, %c0_i32 : i32, i32
  }
  func.func @transform_3(%arg0: i32) -> (i32, i32, i32) {
    %c0_i32 = arith.constant 0 : i32
    %c0_i32_0 = arith.constant 0 : i32
    %c0_i32_1 = arith.constant 0 : i32
    return %arg0, %c0_i32, %c0_i32_0 : i32, i32, i32
  }
  func.func @transform_4(%arg0: i32) -> (i32, i32, i32) {
    %c0_i32 = arith.constant 0 : i32
    %c0_i32_0 = arith.constant 0 : i32
    %c0_i32_1 = arith.constant 0 : i32
    return %arg0, %c0_i32, %c0_i32_0 : i32, i32, i32
  }
}

module attributes {stable_mosaic.version = 11 : i64} {
  func.func @_bn_relu_kernel(%arg0: i32, %arg1: memref<32x64xbf16, #tpu.memory_space<vmem>>, %arg2: memref<1x64xf32, #tpu.memory_space<vmem>>, %arg3: memref<1x64xf32, #tpu.memory_space<vmem>>, %arg4: memref<32x64xf32, #tpu.memory_space<vmem>>) attributes {dimension_semantics = [#tpu.dimension_semantics<parallel>], iteration_bounds = array<i64: 1>, scalar_prefetch = 0 : i64, scratch_operands = 0 : i64, tpu.core_type = #tpu.core_type<tc>, window_params = [{transform_indices = @transform_0, window_bounds = array<i64: 32, 64>}, {pipeline_mode = #tpu.pipeline_mode<synchronous>, transform_indices = @transform_1, window_bounds = array<i64: 1, 64>}, {pipeline_mode = #tpu.pipeline_mode<synchronous>, transform_indices = @transform_2, window_bounds = array<i64: 1, 64>}, {transform_indices = @transform_3, window_bounds = array<i64: 32, 64>}]} {
    %c0 = arith.constant 0 : index
    %c0_0 = arith.constant 0 : index
    %0 = vector.load %arg1[%c0, %c0_0] : memref<32x64xbf16, #tpu.memory_space<vmem>>, vector<32x64xbf16>
    %1 = arith.extf %0 : vector<32x64xbf16> to vector<32x64xf32>
    %c0_1 = arith.constant 0 : index
    %c0_2 = arith.constant 0 : index
    %2 = vector.load %arg2[%c0_1, %c0_2] : memref<1x64xf32, #tpu.memory_space<vmem>>, vector<1x64xf32>
    %3 = vector.broadcast %2 : vector<1x64xf32> to vector<32x64xf32>
    %4 = arith.mulf %1, %3 : vector<32x64xf32>
    %c0_3 = arith.constant 0 : index
    %c0_4 = arith.constant 0 : index
    %5 = vector.load %arg3[%c0_3, %c0_4] : memref<1x64xf32, #tpu.memory_space<vmem>>, vector<1x64xf32>
    %6 = vector.broadcast %5 : vector<1x64xf32> to vector<32x64xf32>
    %7 = arith.addf %4, %6 : vector<32x64xf32>
    %cst = arith.constant 0.000000e+00 : f32
    %8 = vector.broadcast %cst : f32 to vector<32x64xf32>
    %9 = arith.maximumf %7, %8 : vector<32x64xf32>
    %c0_5 = arith.constant 0 : index
    %c0_6 = arith.constant 0 : index
    %10 = vector.load %arg4[%c0_5, %c0_6] : memref<32x64xf32, #tpu.memory_space<vmem>>, vector<32x64xf32>
    tpu.vector_store %arg4[%c0_5, %c0_6], %9 {strides = array<i32>} : memref<32x64xf32, #tpu.memory_space<vmem>>, vector<32x64xf32>,
    return
  }
  func.func @transform_0(%arg0: i32) -> (i32, i32) {
    %c0_i32 = arith.constant 0 : i32
    %c0_i32_0 = arith.constant 0 : i32
    return %arg0, %c0_i32 : i32, i32
  }
  func.func @transform_1(%arg0: i32) -> (i32, i32) {
    %c0_i32 = arith.constant 0 : i32
    %c0_i32_0 = arith.constant 0 : i32
    %c0_i32_1 = arith.constant 0 : i32
    return %c0_i32, %c0_i32_0 : i32, i32
  }
  func.func @transform_2(%arg0: i32) -> (i32, i32) {
    %c0_i32 = arith.constant 0 : i32
    %c0_i32_0 = arith.constant 0 : i32
    %c0_i32_1 = arith.constant 0 : i32
    return %c0_i32, %c0_i32_0 : i32, i32
  }
  func.func @transform_3(%arg0: i32) -> (i32, i32) {
    %c0_i32 = arith.constant 0 : i32
    %c0_i32_0 = arith.constant 0 : i32
    return %arg0, %c0_i32 : i32, i32
  }
}

</mosaic_0001>

<llo_original>
// kernel: tile.28
$region0: #{tile.28}
  #allocation0 [shape = 's32[1]{0}', space=sflag, size = 0x4, scoped, tag = 'scoped memory for tile.28']
  %s0 = inlined_call_operand.vmem [shape: f32[4], index: 0, kind: input, shape index: {}]
  %s1 = inlined_call_operand.vmem [shape: f32[4,4], index: 1, kind: output, shape index: {}]
  // Predicated region
  $region2: #{tile.28} parent=0 // pred_check
    _
  $region3: #{tile.28} parent=0 // pred_check_branch
    %3 = sbr.rel (0) target = $region5
  $region4: #{tile.28} parent=0 // pred_region
    _
  $region5: #{tile.28} parent=0 // pred_fallthru
    _
  %v4 = vld [vmem:[%s0] ss:$0 sm:$0xff]
  %5 = vst [vmem:[%s1] sm:$0xf] %v4

// kernel: tile.29
$region0: #{tile.29}
  %s0 = inlined_call_operand.vmem [shape: f32[4,4], index: 0, kind: input, shape index: {}]
  %s1 = inlined_call_operand.vmem [shape: f32[1,16], index: 1, kind: output, shape index: {}]
  $region1: #{tile.29} parent=0
    #allocation0 [shape = 'u8[4096]{0}', space=vmem, size = 0x1000, scoped, tag = 'scoped mem for output reshape']
    #allocation1 [shape = 'u8[4096]{0}', space=vmem, size = 0x1000, scoped, tag = 'scoped mem for input reshape']
    %s3 = ssub.s32 16, 1
    %v4 = vld [vmem:[%s0] sm:%s3]
    %5 = vst [vmem:[#allocation1] sm:%s3] %v4
    %v6 = vld [vmem:[#allocation1] sm:$0x1]
    %vm7 = vcmask 31744
    %8 = vst.msk [vmem:[#allocation0] sm:$0x1] %vm7, %v6
    %s9 = scalar_lea.vmem [#allocation1], 3
    %v10 = vld [vmem:[%s9] sm:$0x1]
    %11 = vrot.lane.b32.xlu0 %v10, 12
    %v12 = vpop.permute.xlu0 %11
    %vm13 = vcmask 130144
    %14 = vst.msk [vmem:[#allocation0] sm:$0x1] %vm13, %v12
    %s15 = scalar_lea.vmem [#allocation1], 2
    %v16 = vld [vmem:[%s15] sm:$0x1]
    %17 = vrot.lane.b32.xlu0 %v16, 8
    %v18 = vpop.permute.xlu0 %17
    %vm19 = vcmask 97344
    %20 = vst.msk [vmem:[#allocation0] sm:$0x1] %vm19, %v18
    %s21 = scalar_lea.vmem [#allocation1], 1
    %v22 = vld [vmem:[%s21] sm:$0x1]
    %23 = vrot.lane.b32.xlu0 %v22, 4
    %v24 = vpop.permute.xlu0 %23
    %vm25 = vcmask 64544
    %26 = vst.msk [vmem:[#allocation0] sm:$0x1] %vm25, %v24
    %s28 = ssub.s32 2, 1
    %v29 = vld [vmem:[#allocation0] sm:%s28]
    %s31 = ssub.s32 2, 1
    %32 = vst [vmem:[%s1] sm:%s31] %v29

// kernel: up_block_forward.5
$region0: #{up_block_forward.5}
  #allocation0 [shape = 'u32[]', space=smem, size = 0x4, offset = 0x4, fixed_abs, tag = 'smem constant byte address 0x4 - core index']
  #allocation1 [shape = 'u32[72,128]{1,0:T(1,128)}', space=vmem, size = 0x9000, scoped, tag = 'internal scratch']
  %s0 = inlined_call_operand.vmem [shape: bf16[128,8], index: 0, kind: input, shape index: {}]
  %s1 = inlined_call_operand.vmem [shape: bf16[8,16], index: 1, kind: input, shape index: {}]
  %s2 = inlined_call_operand.vmem [shape: f32[1,16], index: 2, kind: input, shape index: {}]
  %s3 = inlined_call_operand.vmem [shape: bf16[128,16], index: 3, kind: output, shape index: {}]
  %s4 = sld [smem:[#allocation0]]
  $region22: #{up_block_forward.5} parent=0
    _
  %s6 = ssub.s32 1, %s4
  %s7 = scalar_select 0, %s6, %s4
  // Predicated region
  $region2: #{up_block_forward.5} parent=0 // pred_check
    _
  $region3: #{up_block_forward.5} parent=0 // pred_check_branch
    %9 = sbr.rel (0) target = $region5
  $region4: #{up_block_forward.5} parent=0 // pred_region
    _
  $region5: #{up_block_forward.5} parent=0 // pred_fallthru
    _
  // Predicated region
  $region6: #{up_block_forward.5} parent=0 // pred_check
    _
  $region7: #{up_block_forward.5} parent=0 // pred_check_branch
    %11 = sbr.rel (0) target = $region9
  $region8: #{up_block_forward.5} parent=0 // pred_region
    _
  $region9: #{up_block_forward.5} parent=0 // pred_fallthru
    _
  // Predicated region
  $region10: #{up_block_forward.5} parent=0 // pred_check
    _
  $region11: #{up_block_forward.5} parent=0 // pred_check_branch
    %13 = sbr.rel (0) target = $region13
  $region12: #{up_block_forward.5} parent=0 // pred_region
    _
  $region13: #{up_block_forward.5} parent=0 // pred_fallthru
    _
  %v15 = vld [vmem:[%s0] sm:$0xf]
  %v16 = vld [vmem:[%s0 + $0x4] sm:$0xf]
  %v17 = vld [vmem:[%s0 + $0x8] sm:$0xf]
  %v18 = vld [vmem:[%s0 + $0xc] sm:$0xf]
  %v19 = vld [vmem:[%s0 + $0x10] sm:$0xf]
  %v20 = vld [vmem:[%s0 + $0x14] sm:$0xf]
  %v21 = vld [vmem:[%s0 + $0x18] sm:$0xf]
  %v22 = vld [vmem:[%s0 + $0x1c] sm:$0xf]
  %v23 = vld [vmem:[%s0 + $0x20] sm:$0xf]
  %v24 = vld [vmem:[%s0 + $0x24] sm:$0xf]
  %v25 = vld [vmem:[%s0 + $0x28] sm:$0xf]
  %v26 = vld [vmem:[%s0 + $0x2c] sm:$0xf]
  %v27 = vld [vmem:[%s0 + $0x30] sm:$0xf]
  %v28 = vld [vmem:[%s0 + $0x34] sm:$0xf]
  %v29 = vld [vmem:[%s0 + $0x38] sm:$0xf]
  %v30 = vld [vmem:[%s0 + $0x3c] sm:$0xf]
  %v31 = vld [vmem:[%s1] sm:$0xf]
  %v32 = vld [vmem:[%s2] sm:$0x1]
  %v34 = vperm.slane %v32, 0
  %v52 = vunpack.c.l.b16 %v15
  %v53 = vunpack.c.l.b16 %v16
  %v54 = vunpack.c.l.b16 %v17
  %v55 = vunpack.c.l.b16 %v18
  %v56 = vunpack.c.l.b16 %v19
  %v57 = vunpack.c.l.b16 %v20
  %v58 = vunpack.c.l.b16 %v21
  %v59 = vunpack.c.l.b16 %v22
  %v60 = vunpack.c.l.b16 %v23
  %v61 = vunpack.c.l.b16 %v24
  %v62 = vunpack.c.l.b16 %v25
  %v63 = vunpack.c.l.b16 %v26
  %v64 = vunpack.c.l.b16 %v27
  %v65 = vunpack.c.l.b16 %v28
  %v66 = vunpack.c.l.b16 %v29
  %v67 = vunpack.c.l.b16 %v30
  %v68 = vpack.c.b16 %v53, %v52
  %v69 = vpack.c.b16 %v55, %v54
  %v70 = vpack.c.b16 %v57, %v56
  %v71 = vpack.c.b16 %v59, %v58
  %v72 = vpack.c.b16 %v61, %v60
  %v73 = vpack.c.b16 %v63, %v62
  %v74 = vpack.c.b16 %v65, %v64
  %v75 = vpack.c.b16 %v67, %v66
  %vm76 = vcmask 64512
  %v78 = vsel %vm76, %v68, 0
  %v81 = vsel %vm76, %v69, 0
  %v84 = vsel %vm76, %v70, 0
  %v87 = vsel %vm76, %v71, 0
  %v90 = vsel %vm76, %v72, 0
  %v93 = vsel %vm76, %v73, 0
  %v96 = vsel %vm76, %v74, 0
  %v99 = vsel %vm76, %v75, 0
  %vm101 = vcmask 1043456
  %v103 = vsel %vm101, %v31, 0
  %105 = vmatpush.bf16.msra.mxu0 0
  %106 = vmatpush.bf16.msra.mxu0 0
  %107 = vmatpush.bf16.msra.mxu0 0
  %108 = vmatpush.bf16.msra.mxu0 0
  %109 = vmatpush.bf16.msra.mxu0 0
  %110 = vmatpush.bf16.msra.mxu0 0
  %111 = vmatpush.bf16.msra.mxu0 0
  %112 = vmatpush.bf16.msra.mxu0 %v103
  %113 = vmatmul.bf16.gmra.mxu0 %v78
  %v114 = vpop.f32.mrf.mxu0
  %v115 = vadd.f32 %v34, %v114
  %v116 = vpop.f32.mrf.mxu0
  %v117 = vadd.f32 %v34, %v116
  %118 = vmatmul.bf16.gmra.mxu0 %v81
  %v119 = vpop.f32.mrf.mxu0
  %v120 = vadd.f32 %v34, %v119
  %v121 = vpop.f32.mrf.mxu0
  %v122 = vadd.f32 %v34, %v121
  %123 = vmatmul.bf16.gmra.mxu0 %v84
  %v124 = vpop.f32.mrf.mxu0
  %v125 = vadd.f32 %v34, %v124
  %v126 = vpop.f32.mrf.mxu0
  %v127 = vadd.f32 %v34, %v126
  %128 = vmatmul.bf16.gmra.mxu0 %v87
  %v129 = vpop.f32.mrf.mxu0
  %v130 = vadd.f32 %v34, %v129
  %v131 = vpop.f32.mrf.mxu0
  %v132 = vadd.f32 %v34, %v131
  %133 = vmatmul.bf16.gmra.mxu0 %v90
  %v134 = vpop.f32.mrf.mxu0
  %v135 = vadd.f32 %v34, %v134
  %v136 = vpop.f32.mrf.mxu0
  %v137 = vadd.f32 %v34, %v136
  %138 = vmatmul.bf16.gmra.mxu0 %v93
  %v139 = vpop.f32.mrf.mxu0
  %v140 = vadd.f32 %v34, %v139
  %v141 = vpop.f32.mrf.mxu0
  %v142 = vadd.f32 %v34, %v141
  %143 = vmatmul.bf16.gmra.mxu0 %v96
  %v144 = vpop.f32.mrf.mxu0
  %v145 = vadd.f32 %v34, %v144
  %v146 = vpop.f32.mrf.mxu0
  %v147 = vadd.f32 %v34, %v146
  %148 = vmatmul.bf16.gmra.mxu0 %v99
  %v149 = vpop.f32.mrf.mxu0
  %v150 = vadd.f32 %v34, %v149
  %v151 = vpop.f32.mrf.mxu0
  %v152 = vadd.f32 %v34, %v151
  %153 = vdwg.mxu0
  %v154 = vpack.c.bf16 %v115, %v115
  %v155 = vpack.c.bf16 %v117, %v117
  %v156 = vpack.c.bf16 %v120, %v120
  %v157 = vpack.c.bf16 %v122, %v122
  %v158 = vpack.c.bf16 %v125, %v125
  %v159 = vpack.c.bf16 %v127, %v127
  %v160 = vpack.c.bf16 %v130, %v130
  %v161 = vpack.c.bf16 %v132, %v132
  %v162 = vpack.c.bf16 %v135, %v135
  %v163 = vpack.c.bf16 %v137, %v137
  %v164 = vpack.c.bf16 %v140, %v140
  %v165 = vpack.c.bf16 %v142, %v142
  %v166 = vpack.c.bf16 %v145, %v145
  %v167 = vpack.c.bf16 %v147, %v147
  %v168 = vpack.c.bf16 %v150, %v150
  %v169 = vpack.c.bf16 %v152, %v152
  %vm170 = vcmask 125952
  %171 = vst.msk [vmem:[%s3] sm:$0xf] %vm170, %v154
  %172 = vst.msk [vmem:[%s3 + $0x4] sm:$0xf] %vm170, %v155
  %173 = vst.msk [vmem:[%s3 + $0x8] sm:$0xf] %vm170, %v156
  %174 = vst.msk [vmem:[%s3 + $0xc] sm:$0xf] %vm170, %v157
  %175 = vst.msk [vmem:[%s3 + $0x10] sm:$0xf] %vm170, %v158
  %176 = vst.msk [vmem:[%s3 + $0x14] sm:$0xf] %vm170, %v159
  %177 = vst.msk [vmem:[%s3 + $0x18] sm:$0xf] %vm170, %v160
  %178 = vst.msk [vmem:[%s3 + $0x1c] sm:$0xf] %vm170, %v161
  %179 = vst.msk [vmem:[%s3 + $0x20] sm:$0xf] %vm170, %v162
  %180 = vst.msk [vmem:[%s3 + $0x24] sm:$0xf] %vm170, %v163
  %181 = vst.msk [vmem:[%s3 + $0x28] sm:$0xf] %vm170, %v164
  %182 = vst.msk [vmem:[%s3 + $0x2c] sm:$0xf] %vm170, %v165
  %183 = vst.msk [vmem:[%s3 + $0x30] sm:$0xf] %vm170, %v166
  %184 = vst.msk [vmem:[%s3 + $0x34] sm:$0xf] %vm170, %v167
  %185 = vst.msk [vmem:[%s3 + $0x38] sm:$0xf] %vm170, %v168
  %186 = vst.msk [vmem:[%s3 + $0x3c] sm:$0xf] %vm170, %v169
  // Predicated region
  $region14: #{up_block_forward.5} parent=0 // pred_check
    _
  $region15: #{up_block_forward.5} parent=0 // pred_check_branch
    %188 = sbr.rel (0) target = $region17
  $region16: #{up_block_forward.5} parent=0 // pred_region
    _
  $region17: #{up_block_forward.5} parent=0 // pred_fallthru
    _
  // Predicated region
  $region18: #{up_block_forward.5} parent=0 // pred_check
    _
  $region19: #{up_block_forward.5} parent=0 // pred_check_branch
    %190 = sbr.rel (0) target = $region21
  $region20: #{up_block_forward.5} parent=0 // pred_region
    _
  $region21: #{up_block_forward.5} parent=0 // pred_fallthru
    _

// kernel: tile.33
$region0: #{tile.33}
  #allocation0 [shape = 's32[1]{0}', space=sflag, size = 0x4, scoped, tag = 'scoped memory for tile.33']
  %s0 = inlined_call_operand.vmem [shape: f32[4], index: 0, kind: input, shape index: {}]
  %s1 = inlined_call_operand.vmem [shape: f32[16,4], index: 1, kind: output, shape index: {}]
  // Predicated region
  $region2: #{tile.33} parent=0 // pred_check
    _
  $region3: #{tile.33} parent=0 // pred_check_branch
    %3 = sbr.rel (0) target = $region5
  $region4: #{tile.33} parent=0 // pred_region
    _
  $region5: #{tile.33} parent=0 // pred_fallthru
    _
  %v4 = vld [vmem:[%s0] ss:$0 sm:$0xff]
  %5 = vst [vmem:[%s1] sm:$0xff] %v4
  %s6 = scalar_lea.vmem %s1, 8
  %7 = vst [vmem:[%s6] sm:$0xff] %v4

// kernel: tile.34
$region0: #{tile.34}
  %s0 = inlined_call_operand.vmem [shape: f32[16,4], index: 0, kind: input, shape index: {}]
  %s1 = inlined_call_operand.vmem [shape: f32[1,64], index: 1, kind: output, shape index: {}]
  $region1: #{tile.34} parent=0
    #allocation0 [shape = 'u8[4096]{0}', space=vmem, size = 0x1000, scoped, tag = 'scoped mem for output reshape']
    %v2 = vld [vmem:[%s0] sm:$0x1]
    %vm3 = vcmask 31744
    %4 = vst.msk [vmem:[#allocation0] sm:$0x1] %vm3, %v2
    %s5 = scalar_lea.vmem %s0, 15
    %v6 = vld [vmem:[%s5] sm:$0x1]
    %7 = vrot.lane.b32.xlu0 %v6, 60
    %v8 = vpop.permute.xlu0 %7
    %vm9 = vcmask 523744
    %10 = vst.msk [vmem:[#allocation0] sm:$0x1] %vm9, %v8
    %s11 = scalar_lea.vmem %s0, 14
    %v12 = vld [vmem:[%s11] sm:$0x1]
    %13 = vrot.lane.b32.xlu0 %v12, 56
    %v14 = vpop.permute.xlu0 %13
    %vm15 = vcmask 490944
    %16 = vst.msk [vmem:[#allocation0] sm:$0x1] %vm15, %v14
    %s17 = scalar_lea.vmem %s0, 13
    %v18 = vld [vmem:[%s17] sm:$0x1]
    %19 = vrot.lane.b32.xlu0 %v18, 52
    %v20 = vpop.permute.xlu0 %19
    %vm21 = vcmask 458144
    %22 = vst.msk [vmem:[#allocation0] sm:$0x1] %vm21, %v20
    %s23 = scalar_lea.vmem %s0, 12
    %v24 = vld [vmem:[%s23] sm:$0x1]
    %25 = vrot.lane.b32.xlu0 %v24, 48
    %v26 = vpop.permute.xlu0 %25
    %vm27 = vcmask 425344
    %28 = vst.msk [vmem:[#allocation0] sm:$0x1] %vm27, %v26
    %s29 = scalar_lea.vmem %s0, 11
    %v30 = vld [vmem:[%s29] sm:$0x1]
    %31 = vrot.lane.b32.xlu0 %v30, 44
    %v32 = vpop.permute.xlu0 %31
    %vm33 = vcmask 392544
    %34 = vst.msk [vmem:[#allocation0] sm:$0x1] %vm33, %v32
    %s35 = scalar_lea.vmem %s0, 10
    %v36 = vld [vmem:[%s35] sm:$0x1]
    %37 = vrot.lane.b32.xlu0 %v36, 40
    %v38 = vpop.permute.xlu0 %37
    %vm39 = vcmask 359744
    %40 = vst.msk [vmem:[#allocation0] sm:$0x1] %vm39, %v38
    %s41 = scalar_lea.vmem %s0, 9
    %v42 = vld [vmem:[%s41] sm:$0x1]
    %43 = vrot.lane.b32.xlu0 %v42, 36
    %v44 = vpop.permute.xlu0 %43
    %vm45 = vcmask 326944
    %46 = vst.msk [vmem:[#allocation0] sm:$0x1] %vm45, %v44
    %s47 = scalar_lea.vmem %s0, 8
    %v48 = vld [vmem:[%s47] sm:$0x1]
    %49 = vrot.lane.b32.xlu0 %v48, 32
    %v50 = vpop.permute.xlu0 %49
    %vm51 = vcmask 294144
    %52 = vst.msk [vmem:[#allocation0] sm:$0x1] %vm51, %v50
    %s53 = scalar_lea.vmem %s0, 7
    %v54 = vld [vmem:[%s53] sm:$0x1]
    %55 = vrot.lane.b32.xlu0 %v54, 28
    %v56 = vpop.permute.xlu0 %55
    %vm57 = vcmask 261344
    %58 = vst.msk [vmem:[#allocation0] sm:$0x1] %vm57, %v56
    %s59 = scalar_lea.vmem %s0, 6
    %v60 = vld [vmem:[%s59] sm:$0x1]
    %61 = vrot.lane.b32.xlu0 %v60, 24
    %v62 = vpop.permute.xlu0 %61
    %vm63 = vcmask 228544
    %64 = vst.msk [vmem:[#allocation0] sm:$0x1] %vm63, %v62
    %s65 = scalar_lea.vmem %s0, 5
    %v66 = vld [vmem:[%s65] sm:$0x1]
    %67 = vrot.lane.b32.xlu0 %v66, 20
    %v68 = vpop.permute.xlu0 %67
    %vm69 = vcmask 195744
    %70 = vst.msk [vmem:[#allocation0] sm:$0x1] %vm69, %v68
    %s71 = scalar_lea.vmem %s0, 4
    %v72 = vld [vmem:[%s71] sm:$0x1]
    %73 = vrot.lane.b32.xlu0 %v72, 16
    %v74 = vpop.permute.xlu0 %73
    %vm75 = vcmask 162944
    %76 = vst.msk [vmem:[#allocation0] sm:$0x1] %vm75, %v74
    %s77 = scalar_lea.vmem %s0, 3
    %v78 = vld [vmem:[%s77] sm:$0x1]
    %79 = vrot.lane.b32.xlu0 %v78, 12
    %v80 = vpop.permute.xlu0 %79
    %vm81 = vcmask 130144
    %82 = vst.msk [vmem:[#allocation0] sm:$0x1] %vm81, %v80
    %s83 = scalar_lea.vmem %s0, 2
    %v84 = vld [vmem:[%s83] sm:$0x1]
    %85 = vrot.lane.b32.xlu0 %v84, 8
    %v86 = vpop.permute.xlu0 %85
    %vm87 = vcmask 97344
    %88 = vst.msk [vmem:[#allocation0] sm:$0x1] %vm87, %v86
    %s89 = scalar_lea.vmem %s0, 1
    %v90 = vld [vmem:[%s89] sm:$0x1]
    %91 = vrot.lane.b32.xlu0 %v90, 4
    %v92 = vpop.permute.xlu0 %91
    %vm93 = vcmask 64544
    %94 = vst.msk [vmem:[#allocation0] sm:$0x1] %vm93, %v92
    %s96 = ssub.s32 2, 1
    %v97 = vld [vmem:[#allocation0] sm:%s96]
    %s99 = ssub.s32 2, 1
    %100 = vst [vmem:[%s1] sm:%s99] %v97

// kernel: up_block_forward.7
$region0: #{up_block_forward.7}
  #allocation0 [shape = 'u32[]', space=smem, size = 0x4, offset = 0x4, fixed_abs, tag = 'smem constant byte address 0x4 - core index']
  #allocation1 [shape = 'u32[72,128]{1,0:T(1,128)}', space=vmem, size = 0x9000, scoped, tag = 'internal scratch']
  %s0 = inlined_call_operand.vmem [shape: bf16[32,64], index: 0, kind: input, shape index: {}]
  %s1 = inlined_call_operand.vmem [shape: f32[1,64], index: 1, kind: input, shape index: {}]
  %s2 = inlined_call_operand.vmem [shape: f32[1,64], index: 2, kind: input, shape index: {}]
  %s3 = inlined_call_operand.vmem [shape: bf16[32,64], index: 3, kind: output, shape index: {}]
  %s4 = sld [smem:[#allocation0]]
  $region22: #{up_block_forward.7} parent=0
    _
  %s6 = ssub.s32 1, %s4
  %s7 = scalar_select 0, %s6, %s4
  // Predicated region
  $region2: #{up_block_forward.7} parent=0 // pred_check
    _
  $region3: #{up_block_forward.7} parent=0 // pred_check_branch
    %9 = sbr.rel (0) target = $region5
  $region4: #{up_block_forward.7} parent=0 // pred_region
    _
  $region5: #{up_block_forward.7} parent=0 // pred_fallthru
    _
  // Predicated region
  $region6: #{up_block_forward.7} parent=0 // pred_check
    _
  $region7: #{up_block_forward.7} parent=0 // pred_check_branch
    %11 = sbr.rel (0) target = $region9
  $region8: #{up_block_forward.7} parent=0 // pred_region
    _
  $region9: #{up_block_forward.7} parent=0 // pred_fallthru
    _
  // Predicated region
  $region10: #{up_block_forward.7} parent=0 // pred_check
    _
  $region11: #{up_block_forward.7} parent=0 // pred_check_branch
    %13 = sbr.rel (0) target = $region13
  $region12: #{up_block_forward.7} parent=0 // pred_region
    _
  $region13: #{up_block_forward.7} parent=0 // pred_fallthru
    _
  %v14 = vld [vmem:[%s0] sm:$0xf]
  %v15 = vld [vmem:[%s0 + $0x4] sm:$0xf]
  %v16 = vld [vmem:[%s0 + $0x8] sm:$0xf]
  %v17 = vld [vmem:[%s0 + $0xc] sm:$0xf]
  %v18 = vunpack.c.l.bf16 %v14
  %v19 = vunpack.c.l.bf16 %v15
  %v20 = vunpack.c.l.bf16 %v16
  %v21 = vunpack.c.l.bf16 %v17
  %v22 = vld [vmem:[%s1] sm:$0x1]
  %v24 = vperm.slane %v22, 0
  %v26 = vmul.f32 %v18, %v24
  %v27 = vmul.f32 %v19, %v24
  %v28 = vmul.f32 %v20, %v24
  %v29 = vmul.f32 %v21, %v24
  %v30 = vld [vmem:[%s2] sm:$0x1]
  %v32 = vperm.slane %v30, 0
  %v34 = vadd.f32 %v26, %v32
  %v35 = vadd.f32 %v27, %v32
  %v36 = vadd.f32 %v28, %v32
  %v37 = vadd.f32 %v29, %v32
  %v38 = vmax.f32 %v34, 0.0
  %v39 = vmax.f32 %v35, 0.0
  %v40 = vmax.f32 %v36, 0.0
  %v41 = vmax.f32 %v37, 0.0
  %v42 = vpack.c.bf16 %v38, %v38
  %v43 = vpack.c.bf16 %v39, %v39
  %v44 = vpack.c.bf16 %v40, %v40
  %v45 = vpack.c.bf16 %v41, %v41
  %vm46 = vcmask 519168
  %47 = vst.msk [vmem:[%s3] sm:$0xf] %vm46, %v42
  %48 = vst.msk [vmem:[%s3 + $0x4] sm:$0xf] %vm46, %v43
  %49 = vst.msk [vmem:[%s3 + $0x8] sm:$0xf] %vm46, %v44
  %50 = vst.msk [vmem:[%s3 + $0xc] sm:$0xf] %vm46, %v45
  // Predicated region
  $region14: #{up_block_forward.7} parent=0 // pred_check
    _
  $region15: #{up_block_forward.7} parent=0 // pred_check_branch
    %52 = sbr.rel (0) target = $region17
  $region16: #{up_block_forward.7} parent=0 // pred_region
    _
  $region17: #{up_block_forward.7} parent=0 // pred_fallthru
    _
  // Predicated region
  $region18: #{up_block_forward.7} parent=0 // pred_check
    _
  $region19: #{up_block_forward.7} parent=0 // pred_check_branch
    %54 = sbr.rel (0) target = $region21
  $region20: #{up_block_forward.7} parent=0 // pred_region
    _
  $region21: #{up_block_forward.7} parent=0 // pred_fallthru
    _

// kernel: up_block_forward.9
$region0: #{up_block_forward.9}
  #allocation0 [shape = 'u32[]', space=smem, size = 0x4, offset = 0x4, fixed_abs, tag = 'smem constant byte address 0x4 - core index']
  #allocation1 [shape = 'u32[72,128]{1,0:T(1,128)}', space=vmem, size = 0x9000, scoped, tag = 'internal scratch']
  %s0 = inlined_call_operand.vmem [shape: bf16[32,64], index: 0, kind: input, shape index: {}]
  %s1 = inlined_call_operand.vmem [shape: f32[1,64], index: 1, kind: input, shape index: {}]
  %s2 = inlined_call_operand.vmem [shape: f32[1,64], index: 2, kind: input, shape index: {}]
  %s3 = inlined_call_operand.vmem [shape: f32[32,64], index: 3, kind: output, shape index: {}]
  %s4 = sld [smem:[#allocation0]]
  $region22: #{up_block_forward.9} parent=0
    _
  %s6 = ssub.s32 1, %s4
  %s7 = scalar_select 0, %s6, %s4
  // Predicated region
  $region2: #{up_block_forward.9} parent=0 // pred_check
    _
  $region3: #{up_block_forward.9} parent=0 // pred_check_branch
    %9 = sbr.rel (0) target = $region5
  $region4: #{up_block_forward.9} parent=0 // pred_region
    _
  $region5: #{up_block_forward.9} parent=0 // pred_fallthru
    _
  // Predicated region
  $region6: #{up_block_forward.9} parent=0 // pred_check
    _
  $region7: #{up_block_forward.9} parent=0 // pred_check_branch
    %11 = sbr.rel (0) target = $region9
  $region8: #{up_block_forward.9} parent=0 // pred_region
    _
  $region9: #{up_block_forward.9} parent=0 // pred_fallthru
    _
  // Predicated region
  $region10: #{up_block_forward.9} parent=0 // pred_check
    _
  $region11: #{up_block_forward.9} parent=0 // pred_check_branch
    %13 = sbr.rel (0) target = $region13
  $region12: #{up_block_forward.9} parent=0 // pred_region
    _
  $region13: #{up_block_forward.9} parent=0 // pred_fallthru
    _
  %v14 = vld [vmem:[%s0] sm:$0xf]
  %v15 = vld [vmem:[%s0 + $0x4] sm:$0xf]
  %v16 = vld [vmem:[%s0 + $0x8] sm:$0xf]
  %v17 = vld [vmem:[%s0 + $0xc] sm:$0xf]
  %v18 = vunpack.c.l.bf16 %v14
  %v19 = vunpack.c.l.bf16 %v15
  %v20 = vunpack.c.l.bf16 %v16
  %v21 = vunpack.c.l.bf16 %v17
  %v22 = vld [vmem:[%s1] sm:$0x1]
  %v24 = vperm.slane %v22, 0
  %v26 = vmul.f32 %v18, %v24
  %v27 = vmul.f32 %v19, %v24
  %v28 = vmul.f32 %v20, %v24
  %v29 = vmul.f32 %v21, %v24
  %v30 = vld [vmem:[%s2] sm:$0x1]
  %v32 = vperm.slane %v30, 0
  %v34 = vadd.f32 %v26, %v32
  %v35 = vadd.f32 %v27, %v32
  %v36 = vadd.f32 %v28, %v32
  %v37 = vadd.f32 %v29, %v32
  %v38 = vmax.f32 %v34, 0.0
  %v39 = vmax.f32 %v35, 0.0
  %v40 = vmax.f32 %v36, 0.0
  %v41 = vmax.f32 %v37, 0.0
  %vm42 = vcmask 523264
  %43 = vst.msk [vmem:[%s3] sm:$0xff] %vm42, %v38
  %44 = vst.msk [vmem:[%s3 + $0x8] sm:$0xff] %vm42, %v39
  %45 = vst.msk [vmem:[%s3 + $0x10] sm:$0xff] %vm42, %v40
  %46 = vst.msk [vmem:[%s3 + $0x18] sm:$0xff] %vm42, %v41
  // Predicated region
  $region14: #{up_block_forward.9} parent=0 // pred_check
    _
  $region15: #{up_block_forward.9} parent=0 // pred_check_branch
    %48 = sbr.rel (0) target = $region17
  $region16: #{up_block_forward.9} parent=0 // pred_region
    _
  $region17: #{up_block_forward.9} parent=0 // pred_fallthru
    _
  // Predicated region
  $region18: #{up_block_forward.9} parent=0 // pred_check
    _
  $region19: #{up_block_forward.9} parent=0 // pred_check_branch
    %50 = sbr.rel (0) target = $region21
  $region20: #{up_block_forward.9} parent=0 // pred_region
    _
  $region21: #{up_block_forward.9} parent=0 // pred_fallthru
    _

// kernel: up_block_forward.6
$region0: #{up_block_forward.6}
  #allocation0 [shape = 'u32[]', space=smem, size = 0x4, offset = 0x4, fixed_abs, tag = 'smem constant byte address 0x4 - core index']
  #allocation1 [shape = 'u32[72,128]{1,0:T(1,128)}', space=vmem, size = 0x9000, scoped, tag = 'internal scratch']
  %s0 = inlined_call_operand.vmem [shape: bf16[2,18,18,8], index: 0, kind: input, shape index: {}]
  %s1 = inlined_call_operand.vmem [shape: bf16[72,4], index: 1, kind: input, shape index: {}]
  %s2 = inlined_call_operand.vmem [shape: bf16[512,4], index: 2, kind: output, shape index: {0}]
  %s3 = inlined_call_operand.vmem [shape: f32[2,1,4], index: 3, kind: output, shape index: {1}]
  %s4 = inlined_call_operand.vmem [shape: f32[2,1,4], index: 4, kind: output, shape index: {2}]
  %5 = xla_tuple %s2, %s3, %s4
  %s6 = sld [smem:[#allocation0]]
  $region57: #{up_block_forward.6} parent=0
    _
  %s8 = ssub.s32 1, %s6
  %s9 = scalar_select 0, %s8, %s6
  loop: start=0, step=1, limit=4
  $region2: #{up_block_forward.6} parent=0 // loop_pre_header
    _
  $region3: #{up_block_forward.6} parent=0 // loop_header
    %s11 = sphi 0, %s15
    %p12 = scmp.ge.s32.totalorder %s11, 4
    %s21 = sphi 0, %s23
    %s24 = sphi 0, %s21
    %s25 = sphi 0, %s24
    %s41 = sphi 0, %s25
    %s45 = sphi 0, %s45
    %s47 = sphi 0, %s45
    %s48 = sphi 0, %s47
    %s62 = sphi 0, %s48
    %s68 = sphi 0, %s70
    %s71 = sphi 0, %s68
    %s72 = sphi 0, %s71
    %s88 = sphi 0, %s72
    %s94 = sphi 0, %s96
    %s97 = sphi 0, %s94
    %s98 = sphi 0, %s97
    %s114 = sphi 0, %s98
    %s120 = sphi 0, %s122
    %s123 = sphi 0, %s120
    %s124 = sphi 0, %s123
    %s140 = sphi 0, %s124
  $region4: #{up_block_forward.6} parent=0 // loop_header_branch
    %14 = sbr.rel (%p12) target = $region8
  $region5: #{up_block_forward.6} parent=0 // loop_body
    %s16 = ssub.s32 %s11, 1
    %s17 = ssub.s32 %s11, 2
    %s18 = sadd.s32 %s11, 1
    %s19 = ssub.s32 %s11, %s18
    %p20 = scmp.eq.s32.totalorder %s19, 0
    %s22 = sadd.s32 %s21, 1
    %s23 = scalar_select %p20, %s21, %s22
    %p26 = pneg %p20
    %p27 = scmp.eq.s32.totalorder %s11, 1
    %p28 = por %p26, %p27
    %p29 = scmp.ne.s32.totalorder %s21, %s24
    %p30 = scmp.eq.s32.totalorder %s11, 0
    %p31 = por %p29, %p30
    %p32 = scmp.ne.s32.totalorder %s21, %s24
    %p33 = scmp.eq.s32.totalorder %s16, 1
    %p34 = por %p32, %p33
    %p35 = scmp.ne.s32.totalorder %s24, %s25
    %p36 = scmp.eq.s32.totalorder %s16, 0
    %p37 = por %p35, %p36
    %p38 = scmp.ne.s32.totalorder %s24, %s25
    %p39 = scmp.eq.s32.totalorder %s17, 1
    %p40 = por %p38, %p39
    %p42 = scmp.ne.s32.totalorder %s25, %s41
    %p43 = scmp.eq.s32.totalorder %s17, 0
    %p44 = por %p42, %p43
    %s46 = sadd.s32 %s45, 1
    %p49 = scmp.eq.s32.totalorder %s11, 1
    %p50 = scmp.ne.s32.totalorder %s45, %s47
    %p51 = scmp.eq.s32.totalorder %s11, 0
    %p52 = por %p50, %p51
    %p53 = scmp.ne.s32.totalorder %s45, %s47
    %p54 = scmp.eq.s32.totalorder %s16, 1
    %p55 = por %p53, %p54
    %p56 = scmp.ne.s32.totalorder %s47, %s48
    %p57 = scmp.eq.s32.totalorder %s16, 0
    %p58 = por %p56, %p57
    %p59 = scmp.ne.s32.totalorder %s47, %s48
    %p60 = scmp.eq.s32.totalorder %s17, 1
    %p61 = por %p59, %p60
    %p63 = scmp.ne.s32.totalorder %s48, %s62
    %p64 = scmp.eq.s32.totalorder %s17, 0
    %p65 = por %p63, %p64
    %s66 = ssub.s32 %s11, %s18
    %p67 = scmp.eq.s32.totalorder %s66, 0
    %s69 = sadd.s32 %s68, 1
    %s70 = scalar_select %p67, %s68, %s69
    %p73 = pneg %p67
    %p74 = scmp.eq.s32.totalorder %s11, 1
    %p75 = por %p73, %p74
    %p76 = scmp.ne.s32.totalorder %s68, %s71
    %p77 = scmp.eq.s32.totalorder %s11, 0
    %p78 = por %p76, %p77
    %p79 = scmp.ne.s32.totalorder %s68, %s71
    %p80 = scmp.eq.s32.totalorder %s16, 1
    %p81 = por %p79, %p80
    %p82 = scmp.ne.s32.totalorder %s71, %s72
    %p83 = scmp.eq.s32.totalorder %s16, 0
    %p84 = por %p82, %p83
    %p85 = scmp.ne.s32.totalorder %s71, %s72
    %p86 = scmp.eq.s32.totalorder %s17, 1
    %p87 = por %p85, %p86
    %p89 = scmp.ne.s32.totalorder %s72, %s88
    %p90 = scmp.eq.s32.totalorder %s17, 0
    %p91 = por %p89, %p90
    %s92 = ssub.s32 %s11, %s18
    %p93 = scmp.eq.s32.totalorder %s92, 0
    %s95 = sadd.s32 %s94, 1
    %s96 = scalar_select %p93, %s94, %s95
    %p99 = pneg %p93
    %p100 = scmp.eq.s32.totalorder %s11, 1
    %p101 = por %p99, %p100
    %p102 = scmp.ne.s32.totalorder %s94, %s97
    %p103 = scmp.eq.s32.totalorder %s11, 0
    %p104 = por %p102, %p103
    %p105 = scmp.ne.s32.totalorder %s94, %s97
    %p106 = scmp.eq.s32.totalorder %s16, 1
    %p107 = por %p105, %p106
    %p108 = scmp.ne.s32.totalorder %s97, %s98
    %p109 = scmp.eq.s32.totalorder %s16, 0
    %p110 = por %p108, %p109
    %p111 = scmp.ne.s32.totalorder %s97, %s98
    %p112 = scmp.eq.s32.totalorder %s17, 1
    %p113 = por %p111, %p112
    %p115 = scmp.ne.s32.totalorder %s98, %s114
    %p116 = scmp.eq.s32.totalorder %s17, 0
    %p117 = por %p115, %p116
    %s118 = ssub.s32 %s11, %s18
    %p119 = scmp.eq.s32.totalorder %s118, 0
    %s121 = sadd.s32 %s120, 1
    %s122 = scalar_select %p119, %s120, %s121
    %p125 = pneg %p119
    %p126 = scmp.eq.s32.totalorder %s11, 1
    %p127 = por %p125, %p126
    %p128 = scmp.ne.s32.totalorder %s120, %s123
    %p129 = scmp.eq.s32.totalorder %s11, 0
    %p130 = por %p128, %p129
    %p131 = scmp.ne.s32.totalorder %s120, %s123
    %p132 = scmp.eq.s32.totalorder %s16, 1
    %p133 = por %p131, %p132
    %p134 = scmp.ne.s32.totalorder %s123, %s124
    %p135 = scmp.eq.s32.totalorder %s16, 0
    %p136 = por %p134, %p135
    %p137 = scmp.ne.s32.totalorder %s123, %s124
    %p138 = scmp.eq.s32.totalorder %s17, 1
    %p139 = por %p137, %p138
    %p141 = scmp.ne.s32.totalorder %s124, %s140
    %p142 = scmp.eq.s32.totalorder %s17, 0
    %p143 = por %p141, %p142
    %p144 = scmp.le.s32.totalorder 1, %s11
    %p145 = scmp.lt.s32.totalorder %s11, 3
    %p146 = pnand %p144, %p145
    %p147 = pneg %p146
    // Predicated region
    $region9: #{up_block_forward.6} parent=5 // pred_check
      _
    $region10: #{up_block_forward.6} parent=5 // pred_check_branch
      %149 = sbr.rel (%p146) target = $region12
    $region11: #{up_block_forward.6} parent=5 // pred_region
      %s150 = ssub.s32 %s11, 1
      // Predicated region
      $region13: #{up_block_forward.6} parent=11 // pred_check
        %p151 = pneg %p58
      $region14: #{up_block_forward.6} parent=11 // pred_check_branch
        %153 = sbr.rel (%p151) target = $region16
      $region15: #{up_block_forward.6} parent=11 // pred_region
        _
      $region16: #{up_block_forward.6} parent=11 // pred_fallthru
        _
    $region12: #{up_block_forward.6} parent=5 // pred_fallthru
      _
    %p154 = scmp.lt.s32.totalorder %s11, 2
    // Predicated region
    $region17: #{up_block_forward.6} parent=5 // pred_check
      %p155 = pneg %p154
    $region18: #{up_block_forward.6} parent=5 // pred_check_branch
      %157 = sbr.rel (%p155) target = $region20
    $region19: #{up_block_forward.6} parent=5 // pred_region
      // Predicated region
      $region21: #{up_block_forward.6} parent=19 // pred_check
        %p158 = pneg %p31
      $region22: #{up_block_forward.6} parent=19 // pred_check_branch
        %160 = sbr.rel (%p158) target = $region24
      $region23: #{up_block_forward.6} parent=19 // pred_region
        %p161 = scmp.lt.s32.totalorder %s11, 1
        %s162 = scalar_select %p161, %s11, 1
        %s163 = smul.addr %s162, 54
        %s164 = smul.addr %s163, 4
        %s165 = scalar_lea.vmem %s0, %s164
      $region24: #{up_block_forward.6} parent=19 // pred_fallthru
        _
    $region20: #{up_block_forward.6} parent=5 // pred_fallthru
      _
    %p166 = scmp.le.s32.totalorder 1, %s11
    %p167 = scmp.lt.s32.totalorder %s11, 3
    %p168 = pnand %p166, %p167
    %p169 = pneg %p168
    // Predicated region
    $region25: #{up_block_forward.6} parent=5 // pred_check
      _
    $region26: #{up_block_forward.6} parent=5 // pred_check_branch
      %171 = sbr.rel (%p168) target = $region28
    $region27: #{up_block_forward.6} parent=5 // pred_region
      %s172 = ssub.s32 %s11, 1
      %p173 = scmp.lt.s32.totalorder %s16, 1
      %s174 = scalar_select %p173, %s16, 1
      %s175 = smul.addr %s174, 54
      %s176 = smul.addr %s175, 4
      %s177 = scalar_lea.vmem %s0, %s176
      %p178 = pneg %p37
      %p179 = pneg %p34
      %p180 = pneg %p58
      %p181 = pneg %p55
      %p182 = pneg %p84
      %p183 = pneg %p81
      %s184 = smul.u32 32, %s16
      %p185 = scmp.lt.s32.totalorder %s184, 63
      %s186 = scalar_select %p185, %s184, 63
      %s187 = smul.addr %s186, 4
      %s188 = scalar_lea.vmem %s2, %s187
      %p189 = pneg %p110
      %p190 = pneg %p107
      %p191 = scmp.lt.s32.totalorder %s16, 1
      %s192 = scalar_select %p191, %s16, 1
      %s193 = scalar_lea.vmem %s3, %s192
      %p194 = pneg %p136
      %p195 = pneg %p133
      %p196 = scmp.lt.s32.totalorder %s16, 1
      %s197 = scalar_select %p196, %s16, 1
      %s198 = scalar_lea.vmem %s4, %s197
      %p199 = scmp.lt.s32.totalorder %s16, 1
      %s200 = scalar_select %p199, %s16, 1
      %s201 = smul.addr %s200, 54
      %s202 = smul.addr %s201, 4
      %s203 = scalar_lea.vmem %s0, %s202
      %s204 = smul.u32 32, %s16
      %p205 = scmp.lt.s32.totalorder %s204, 63
      %s206 = scalar_select %p205, %s204, 63
      %s207 = smul.addr %s206, 4
      %s208 = scalar_lea.vmem %s2, %s207
      %s209 = smul.u32 32, %s16
      %p210 = scmp.lt.s32.totalorder %s16, 1
      %s211 = scalar_select %p210, %s16, 1
      %s212 = scalar_lea.vmem %s3, %s211
      %p213 = scmp.lt.s32.totalorder %s16, 1
      %s214 = scalar_select %p213, %s16, 1
      %s215 = scalar_lea.vmem %s4, %s214
      %v217 = vld [vmem:[%s203] sm:$0xf]
      %v218 = vld [vmem:[%s203 + $0x4] sm:$0xf]
      %v219 = vld [vmem:[%s203 + $0xc] sm:$0xf]
      %v220 = vld [vmem:[%s203 + $0x10] sm:$0xf]
      %v221 = vld [vmem:[%s203 + $0x18] sm:$0xf]
      %v222 = vld [vmem:[%s203 + $0x1c] sm:$0xf]
      %v223 = vld [vmem:[%s203 + $0x24] sm:$0xf]
      %v224 = vld [vmem:[%s203 + $0x28] sm:$0xf]
      %v225 = vld [vmem:[%s203 + $0x30] sm:$0xf]
      %v226 = vld [vmem:[%s203 + $0x34] sm:$0xf]
      %v227 = vld [vmem:[%s203 + $0x3c] sm:$0xf]
      %v228 = vld [vmem:[%s203 + $0x40] sm:$0xf]
      %v229 = vld [vmem:[%s203 + $0x48] sm:$0xf]
      %v230 = vld [vmem:[%s203 + $0x4c] sm:$0xf]
      %v231 = vld [vmem:[%s203 + $0x54] sm:$0xf]
      %v232 = vld [vmem:[%s203 + $0x58] sm:$0xf]
      %v233 = vld [vmem:[%s203 + $0x60] sm:$0xf]
      %v234 = vld [vmem:[%s203 + $0x64] sm:$0xf]
      %v235 = vld [vmem:[%s203 + $0x6c] sm:$0xf]
      %v236 = vld [vmem:[%s203 + $0x70] sm:$0xf]
      %v237 = vld [vmem:[%s203 + $0x78] sm:$0xf]
      %v238 = vld [vmem:[%s203 + $0x7c] sm:$0xf]
      %v239 = vld [vmem:[%s203 + $0x84] sm:$0xf]
      %v240 = vld [vmem:[%s203 + $0x88] sm:$0xf]
      %v241 = vld [vmem:[%s203 + $0x90] sm:$0xf]
      %v242 = vld [vmem:[%s203 + $0x94] sm:$0xf]
      %v243 = vld [vmem:[%s203 + $0x9c] sm:$0xf]
      %v244 = vld [vmem:[%s203 + $0xa0] sm:$0xf]
      %v245 = vld [vmem:[%s203 + $0xa8] sm:$0xf]
      %v246 = vld [vmem:[%s203 + $0xac] sm:$0xf]
      %v247 = vld [vmem:[%s203 + $0xb4] sm:$0xf]
      %v248 = vld [vmem:[%s203 + $0xb8] sm:$0xf]
      %v249 = vld [vmem:[%s203 + $0x8] sm:$0x1]
      %v250 = vld [vmem:[%s203 + $0x14] sm:$0x1]
      %v251 = vld [vmem:[%s203 + $0x20] sm:$0x1]
      %v252 = vld [vmem:[%s203 + $0x2c] sm:$0x1]
      %v253 = vld [vmem:[%s203 + $0x38] sm:$0x1]
      %v254 = vld [vmem:[%s203 + $0x44] sm:$0x1]
      %v255 = vld [vmem:[%s203 + $0x50] sm:$0x1]
      %v256 = vld [vmem:[%s203 + $0x5c] sm:$0x1]
      %v257 = vld [vmem:[%s203 + $0x68] sm:$0x1]
      %v258 = vld [vmem:[%s203 + $0x74] sm:$0x1]
      %v259 = vld [vmem:[%s203 + $0x80] sm:$0x1]
      %v260 = vld [vmem:[%s203 + $0x8c] sm:$0x1]
      %v261 = vld [vmem:[%s203 + $0x98] sm:$0x1]
      %v262 = vld [vmem:[%s203 + $0xa4] sm:$0x1]
      %v263 = vld [vmem:[%s203 + $0xb0] sm:$0x1]
      %v264 = vld [vmem:[%s203 + $0xbc] sm:$0x1]
      %v265 = vld [vmem:[%s203] sm:$0xe]
      %v266 = vld [vmem:[%s203 + $0xc] sm:$0xe]
      %v267 = vld [vmem:[%s203 + $0x18] sm:$0xe]
      %v268 = vld [vmem:[%s203 + $0x24] sm:$0xe]
      %v269 = vld [vmem:[%s203 + $0x30] sm:$0xe]
      %v270 = vld [vmem:[%s203 + $0x3c] sm:$0xe]
      %v271 = vld [vmem:[%s203 + $0x48] sm:$0xe]
      %v272 = vld [vmem:[%s203 + $0x54] sm:$0xe]
      %v273 = vld [vmem:[%s203 + $0x60] sm:$0xe]
      %v274 = vld [vmem:[%s203 + $0x6c] sm:$0xe]
      %v275 = vld [vmem:[%s203 + $0x78] sm:$0xe]
      %v276 = vld [vmem:[%s203 + $0x84] sm:$0xe]
      %v277 = vld [vmem:[%s203 + $0x90] sm:$0xe]
      %v278 = vld [vmem:[%s203 + $0x9c] sm:$0xe]
      %v279 = vld [vmem:[%s203 + $0xa8] sm:$0xe]
      %v280 = vld [vmem:[%s203 + $0xb4] sm:$0xe]
      %s281 = scalar_lea.vmem %s203, 12
      %v282 = vld [vmem:[%s281] sm:$0xf]
      %v283 = vld [vmem:[%s281 + $0x4] sm:$0xf]
      %v284 = vld [vmem:[%s281 + $0xc] sm:$0xf]
      %v285 = vld [vmem:[%s281 + $0x10] sm:$0xf]
      %v286 = vld [vmem:[%s281 + $0x18] sm:$0xf]
      %v287 = vld [vmem:[%s281 + $0x1c] sm:$0xf]
      %v288 = vld [vmem:[%s281 + $0x24] sm:$0xf]
      %v289 = vld [vmem:[%s281 + $0x28] sm:$0xf]
      %v290 = vld [vmem:[%s281 + $0x30] sm:$0xf]
      %v291 = vld [vmem:[%s281 + $0x34] sm:$0xf]
      %v292 = vld [vmem:[%s281 + $0x3c] sm:$0xf]
      %v293 = vld [vmem:[%s281 + $0x40] sm:$0xf]
      %v294 = vld [vmem:[%s281 + $0x48] sm:$0xf]
      %v295 = vld [vmem:[%s281 + $0x4c] sm:$0xf]
      %v296 = vld [vmem:[%s281 + $0x54] sm:$0xf]
      %v297 = vld [vmem:[%s281 + $0x58] sm:$0xf]
      %v298 = vld [vmem:[%s281 + $0x60] sm:$0xf]
      %v299 = vld [vmem:[%s281 + $0x64] sm:$0xf]
      %v300 = vld [vmem:[%s281 + $0x6c] sm:$0xf]
      %v301 = vld [vmem:[%s281 + $0x70] sm:$0xf]
      %v302 = vld [vmem:[%s281 + $0x78] sm:$0xf]
      %v303 = vld [vmem:[%s281 + $0x7c] sm:$0xf]
      %v304 = vld [vmem:[%s281 + $0x84] sm:$0xf]
      %v305 = vld [vmem:[%s281 + $0x88] sm:$0xf]
      %v306 = vld [vmem:[%s281 + $0x90] sm:$0xf]
      %v307 = vld [vmem:[%s281 + $0x94] sm:$0xf]
      %v308 = vld [vmem:[%s281 + $0x9c] sm:$0xf]
      %v309 = vld [vmem:[%s281 + $0xa0] sm:$0xf]
      %v310 = vld [vmem:[%s281 + $0xa8] sm:$0xf]
      %v311 = vld [vmem:[%s281 + $0xac] sm:$0xf]
      %v312 = vld [vmem:[%s281 + $0xb4] sm:$0xf]
      %v313 = vld [vmem:[%s281 + $0xb8] sm:$0xf]
      %v314 = vld [vmem:[%s281 + $0x8] sm:$0x1]
      %v315 = vld [vmem:[%s281 + $0x14] sm:$0x1]
      %v316 = vld [vmem:[%s281 + $0x20] sm:$0x1]
      %v317 = vld [vmem:[%s281 + $0x2c] sm:$0x1]
      %v318 = vld [vmem:[%s281 + $0x38] sm:$0x1]
      %v319 = vld [vmem:[%s281 + $0x44] sm:$0x1]
      %v320 = vld [vmem:[%s281 + $0x50] sm:$0x1]
      %v321 = vld [vmem:[%s281 + $0x5c] sm:$0x1]
      %v322 = vld [vmem:[%s281 + $0x68] sm:$0x1]
      %v323 = vld [vmem:[%s281 + $0x74] sm:$0x1]
      %v324 = vld [vmem:[%s281 + $0x80] sm:$0x1]
      %v325 = vld [vmem:[%s281 + $0x8c] sm:$0x1]
      %v326 = vld [vmem:[%s281 + $0x98] sm:$0x1]
      %v327 = vld [vmem:[%s281 + $0xa4] sm:$0x1]
      %v328 = vld [vmem:[%s281 + $0xb0] sm:$0x1]
      %v329 = vld [vmem:[%s281 + $0xbc] sm:$0x1]
      %v330 = vld [vmem:[%s281] sm:$0xe]
      %v331 = vld [vmem:[%s281 + $0xc] sm:$0xe]
      %v332 = vld [vmem:[%s281 + $0x18] sm:$0xe]
      %v333 = vld [vmem:[%s281 + $0x24] sm:$0xe]
      %v334 = vld [vmem:[%s281 + $0x30] sm:$0xe]
      %v335 = vld [vmem:[%s281 + $0x3c] sm:$0xe]
      %v336 = vld [vmem:[%s281 + $0x48] sm:$0xe]
      %v337 = vld [vmem:[%s281 + $0x54] sm:$0xe]
      %v338 = vld [vmem:[%s281 + $0x60] sm:$0xe]
      %v339 = vld [vmem:[%s281 + $0x6c] sm:$0xe]
      %v340 = vld [vmem:[%s281 + $0x78] sm:$0xe]
      %v341 = vld [vmem:[%s281 + $0x84] sm:$0xe]
      %v342 = vld [vmem:[%s281 + $0x90] sm:$0xe]
      %v343 = vld [vmem:[%s281 + $0x9c] sm:$0xe]
      %v344 = vld [vmem:[%s281 + $0xa8] sm:$0xe]
      %v345 = vld [vmem:[%s281 + $0xb4] sm:$0xe]
      %s346 = scalar_lea.vmem %s203, 24
      %v347 = vld [vmem:[%s346] sm:$0xf]
      %v348 = vld [vmem:[%s346 + $0x4] sm:$0xf]
      %v349 = vld [vmem:[%s346 + $0xc] sm:$0xf]
      %v350 = vld [vmem:[%s346 + $0x10] sm:$0xf]
      %v351 = vld [vmem:[%s346 + $0x18] sm:$0xf]
      %v352 = vld [vmem:[%s346 + $0x1c] sm:$0xf]
      %v353 = vld [vmem:[%s346 + $0x24] sm:$0xf]
      %v354 = vld [vmem:[%s346 + $0x28] sm:$0xf]
      %v355 = vld [vmem:[%s346 + $0x30] sm:$0xf]
      %v356 = vld [vmem:[%s346 + $0x34] sm:$0xf]
      %v357 = vld [vmem:[%s346 + $0x3c] sm:$0xf]
      %v358 = vld [vmem:[%s346 + $0x40] sm:$0xf]
      %v359 = vld [vmem:[%s346 + $0x48] sm:$0xf]
      %v360 = vld [vmem:[%s346 + $0x4c] sm:$0xf]
      %v361 = vld [vmem:[%s346 + $0x54] sm:$0xf]
      %v362 = vld [vmem:[%s346 + $0x58] sm:$0xf]
      %v363 = vld [vmem:[%s346 + $0x60] sm:$0xf]
      %v364 = vld [vmem:[%s346 + $0x64] sm:$0xf]
      %v365 = vld [vmem:[%s346 + $0x6c] sm:$0xf]
      %v366 = vld [vmem:[%s346 + $0x70] sm:$0xf]
      %v367 = vld [vmem:[%s346 + $0x78] sm:$0xf]
      %v368 = vld [vmem:[%s346 + $0x7c] sm:$0xf]
      %v369 = vld [vmem:[%s346 + $0x84] sm:$0xf]
      %v370 = vld [vmem:[%s346 + $0x88] sm:$0xf]
      %v371 = vld [vmem:[%s346 + $0x90] sm:$0xf]
      %v372 = vld [vmem:[%s346 + $0x94] sm:$0xf]
      %v373 = vld [vmem:[%s346 + $0x9c] sm:$0xf]
      %v374 = vld [vmem:[%s346 + $0xa0] sm:$0xf]
      %v375 = vld [vmem:[%s346 + $0xa8] sm:$0xf]
      %v376 = vld [vmem:[%s346 + $0xac] sm:$0xf]
      %v377 = vld [vmem:[%s346 + $0xb4] sm:$0xf]
      %v378 = vld [vmem:[%s346 + $0xb8] sm:$0xf]
      %v379 = vld [vmem:[%s346 + $0x8] sm:$0x1]
      %v380 = vld [vmem:[%s346 + $0x14] sm:$0x1]
      %v381 = vld [vmem:[%s346 + $0x20] sm:$0x1]
      %v382 = vld [vmem:[%s346 + $0x2c] sm:$0x1]
      %v383 = vld [vmem:[%s346 + $0x38] sm:$0x1]
      %v384 = vld [vmem:[%s346 + $0x44] sm:$0x1]
      %v385 = vld [vmem:[%s346 + $0x50] sm:$0x1]
      %v386 = vld [vmem:[%s346 + $0x5c] sm:$0x1]
      %v387 = vld [vmem:[%s346 + $0x68] sm:$0x1]
      %v388 = vld [vmem:[%s346 + $0x74] sm:$0x1]
      %v389 = vld [vmem:[%s346 + $0x80] sm:$0x1]
      %v390 = vld [vmem:[%s346 + $0x8c] sm:$0x1]
      %v391 = vld [vmem:[%s346 + $0x98] sm:$0x1]
      %v392 = vld [vmem:[%s346 + $0xa4] sm:$0x1]
      %v393 = vld [vmem:[%s346 + $0xb0] sm:$0x1]
      %v394 = vld [vmem:[%s346 + $0xbc] sm:$0x1]
      %v395 = vld [vmem:[%s346] sm:$0xe]
      %v396 = vld [vmem:[%s346 + $0xc] sm:$0xe]
      %v397 = vld [vmem:[%s346 + $0x18] sm:$0xe]
      %v398 = vld [vmem:[%s346 + $0x24] sm:$0xe]
      %v399 = vld [vmem:[%s346 + $0x30] sm:$0xe]
      %v400 = vld [vmem:[%s346 + $0x3c] sm:$0xe]
      %v401 = vld [vmem:[%s346 + $0x48] sm:$0xe]
      %v402 = vld [vmem:[%s346 + $0x54] sm:$0xe]
      %v403 = vld [vmem:[%s346 + $0x60] sm:$0xe]
      %v404 = vld [vmem:[%s346 + $0x6c] sm:$0xe]
      %v405 = vld [vmem:[%s346 + $0x78] sm:$0xe]
      %v406 = vld [vmem:[%s346 + $0x84] sm:$0xe]
      %v407 = vld [vmem:[%s346 + $0x90] sm:$0xe]
      %v408 = vld [vmem:[%s346 + $0x9c] sm:$0xe]
      %v409 = vld [vmem:[%s346 + $0xa8] sm:$0xe]
      %v410 = vld [vmem:[%s346 + $0xb4] sm:$0xe]
      %v443 = vunpack.c.l.b16 %v217
      %v444 = vunpack.c.l.b16 %v218
      %v445 = vunpack.c.l.b16 %v219
      %v446 = vunpack.c.l.b16 %v220
      %v447 = vunpack.c.l.b16 %v221
      %v448 = vunpack.c.l.b16 %v222
      %v449 = vunpack.c.l.b16 %v223
      %v450 = vunpack.c.l.b16 %v224
      %v451 = vunpack.c.l.b16 %v225
      %v452 = vunpack.c.l.b16 %v226
      %v453 = vunpack.c.l.b16 %v227
      %v454 = vunpack.c.l.b16 %v228
      %v455 = vunpack.c.l.b16 %v229
      %v456 = vunpack.c.l.b16 %v230
      %v457 = vunpack.c.l.b16 %v231
      %v458 = vunpack.c.l.b16 %v232
      %v459 = vunpack.c.l.b16 %v233
      %v460 = vunpack.c.l.b16 %v234
      %v461 = vunpack.c.l.b16 %v235
      %v462 = vunpack.c.l.b16 %v236
      %v463 = vunpack.c.l.b16 %v237
      %v464 = vunpack.c.l.b16 %v238
      %v465 = vunpack.c.l.b16 %v239
      %v466 = vunpack.c.l.b16 %v240
      %v467 = vunpack.c.l.b16 %v241
      %v468 = vunpack.c.l.b16 %v242
      %v469 = vunpack.c.l.b16 %v243
      %v470 = vunpack.c.l.b16 %v244
      %v471 = vunpack.c.l.b16 %v245
      %v472 = vunpack.c.l.b16 %v246
      %v473 = vunpack.c.l.b16 %v247
      %v474 = vunpack.c.l.b16 %v248
      %v475 = vpack.c.b16 %v444, %v443
      %v476 = vpack.c.b16 %v446, %v445
      %v477 = vpack.c.b16 %v448, %v447
      %v478 = vpack.c.b16 %v450, %v449
      %v479 = vpack.c.b16 %v452, %v451
      %v480 = vpack.c.b16 %v454, %v453
      %v481 = vpack.c.b16 %v456, %v455
      %v482 = vpack.c.b16 %v458, %v457
      %v483 = vpack.c.b16 %v460, %v459
      %v484 = vpack.c.b16 %v462, %v461
      %v485 = vpack.c.b16 %v464, %v463
      %v486 = vpack.c.b16 %v466, %v465
      %v487 = vpack.c.b16 %v468, %v467
      %v488 = vpack.c.b16 %v470, %v469
      %v489 = vpack.c.b16 %v472, %v471
      %v490 = vpack.c.b16 %v474, %v473
      %v507 = vunpack.c.l.b16 %v249
      %v508 = vunpack.c.l.b16 %v250
      %v509 = vunpack.c.l.b16 %v251
      %v510 = vunpack.c.l.b16 %v252
      %v511 = vunpack.c.l.b16 %v253
      %v512 = vunpack.c.l.b16 %v254
      %v513 = vunpack.c.l.b16 %v255
      %v514 = vunpack.c.l.b16 %v256
      %v515 = vunpack.c.l.b16 %v257
      %v516 = vunpack.c.l.b16 %v258
      %v517 = vunpack.c.l.b16 %v259
      %v518 = vunpack.c.l.b16 %v260
      %v519 = vunpack.c.l.b16 %v261
      %v520 = vunpack.c.l.b16 %v262
      %v521 = vunpack.c.l.b16 %v263
      %v522 = vunpack.c.l.b16 %v264
      %v523 = vpack.c.b16 %v507, %v507
      %v524 = vpack.c.b16 %v508, %v508
      %v525 = vpack.c.b16 %v509, %v509
      %v526 = vpack.c.b16 %v510, %v510
      %v527 = vpack.c.b16 %v511, %v511
      %v528 = vpack.c.b16 %v512, %v512
      %v529 = vpack.c.b16 %v513, %v513
      %v530 = vpack.c.b16 %v514, %v514
      %v531 = vpack.c.b16 %v515, %v515
      %v532 = vpack.c.b16 %v516, %v516
      %v533 = vpack.c.b16 %v517, %v517
      %v534 = vpack.c.b16 %v518, %v518
      %v535 = vpack.c.b16 %v519, %v519
      %v536 = vpack.c.b16 %v520, %v520
      %v537 = vpack.c.b16 %v521, %v521
      %v538 = vpack.c.b16 %v522, %v522
      %vm539 = vsmask.f32 7424
      %v541 = vshrl.u32 %v475, 16
      %v543 = vshll.u32 %v475, 16
      %v545 = vrot.slane %v543, 1
      %v546 = vor.u32 %v541, %v545
      %v548 = vshll.u32 %v523, 16
      %v550 = vrot.slane %v548, 1
      %v551 = vsel %vm539, %v546, %v550
      %v553 = vshrl.u32 %v476, 16
      %v555 = vshll.u32 %v476, 16
      %v557 = vrot.slane %v555, 1
      %v558 = vor.u32 %v553, %v557
      %v560 = vshll.u32 %v524, 16
      %v562 = vrot.slane %v560, 1
      %v563 = vsel %vm539, %v558, %v562
      %v565 = vshrl.u32 %v477, 16
      %v567 = vshll.u32 %v477, 16
      %v569 = vrot.slane %v567, 1
      %v570 = vor.u32 %v565, %v569
      %v572 = vshll.u32 %v525, 16
      %v574 = vrot.slane %v572, 1
      %v575 = vsel %vm539, %v570, %v574
      %v577 = vshrl.u32 %v478, 16
      %v579 = vshll.u32 %v478, 16
      %v581 = vrot.slane %v579, 1
      %v582 = vor.u32 %v577, %v581
      %v584 = vshll.u32 %v526, 16
      %v586 = vrot.slane %v584, 1
      %v587 = vsel %vm539, %v582, %v586
      %v589 = vshrl.u32 %v479, 16
      %v591 = vshll.u32 %v479, 16
      %v593 = vrot.slane %v591, 1
      %v594 = vor.u32 %v589, %v593
      %v596 = vshll.u32 %v527, 16
      %v598 = vrot.slane %v596, 1
      %v599 = vsel %vm539, %v594, %v598
      %v601 = vshrl.u32 %v480, 16
      %v603 = vshll.u32 %v480, 16
      %v605 = vrot.slane %v603, 1
      %v606 = vor.u32 %v601, %v605
      %v608 = vshll.u32 %v528, 16
      %v610 = vrot.slane %v608, 1
      %v611 = vsel %vm539, %v606, %v610
      %v613 = vshrl.u32 %v481, 16
      %v615 = vshll.u32 %v481, 16
      %v617 = vrot.slane %v615, 1
      %v618 = vor.u32 %v613, %v617
      %v620 = vshll.u32 %v529, 16
      %v622 = vrot.slane %v620, 1
      %v623 = vsel %vm539, %v618, %v622
      %v625 = vshrl.u32 %v482, 16
      %v627 = vshll.u32 %v482, 16
      %v629 = vrot.slane %v627, 1
      %v630 = vor.u32 %v625, %v629
      %v632 = vshll.u32 %v530, 16
      %v634 = vrot.slane %v632, 1
      %v635 = vsel %vm539, %v630, %v634
      %v637 = vshrl.u32 %v483, 16
      %v639 = vshll.u32 %v483, 16
      %v641 = vrot.slane %v639, 1
      %v642 = vor.u32 %v637, %v641
      %v644 = vshll.u32 %v531, 16
      %v646 = vrot.slane %v644, 1
      %v647 = vsel %vm539, %v642, %v646
      %v649 = vshrl.u32 %v484, 16
      %v651 = vshll.u32 %v484, 16
      %v653 = vrot.slane %v651, 1
      %v654 = vor.u32 %v649, %v653
      %v656 = vshll.u32 %v532, 16
      %v658 = vrot.slane %v656, 1
      %v659 = vsel %vm539, %v654, %v658
      %v661 = vshrl.u32 %v485, 16
      %v663 = vshll.u32 %v485, 16
      %v665 = vrot.slane %v663, 1
      %v666 = vor.u32 %v661, %v665
      %v668 = vshll.u32 %v533, 16
      %v670 = vrot.slane %v668, 1
      %v671 = vsel %vm539, %v666, %v670
      %v673 = vshrl.u32 %v486, 16
      %v675 = vshll.u32 %v486, 16
      %v677 = vrot.slane %v675, 1
      %v678 = vor.u32 %v673, %v677
      %v680 = vshll.u32 %v534, 16
      %v682 = vrot.slane %v680, 1
      %v683 = vsel %vm539, %v678, %v682
      %v685 = vshrl.u32 %v487, 16
      %v687 = vshll.u32 %v487, 16
      %v689 = vrot.slane %v687, 1
      %v690 = vor.u32 %v685, %v689
      %v692 = vshll.u32 %v535, 16
      %v694 = vrot.slane %v692, 1
      %v695 = vsel %vm539, %v690, %v694
      %v697 = vshrl.u32 %v488, 16
      %v699 = vshll.u32 %v488, 16
      %v701 = vrot.slane %v699, 1
      %v702 = vor.u32 %v697, %v701
      %v704 = vshll.u32 %v536, 16
      %v706 = vrot.slane %v704, 1
      %v707 = vsel %vm539, %v702, %v706
      %v709 = vshrl.u32 %v489, 16
      %v711 = vshll.u32 %v489, 16
      %v713 = vrot.slane %v711, 1
      %v714 = vor.u32 %v709, %v713
      %v716 = vshll.u32 %v537, 16
      %v718 = vrot.slane %v716, 1
      %v719 = vsel %vm539, %v714, %v718
      %v721 = vshrl.u32 %v490, 16
      %v723 = vshll.u32 %v490, 16
      %v725 = vrot.slane %v723, 1
      %v726 = vor.u32 %v721, %v725
      %v728 = vshll.u32 %v538, 16
      %v730 = vrot.slane %v728, 1
      %v731 = vsel %vm539, %v726, %v730
      %732 = vrot.lane.b32.xlu0 %v551, 8
      %v733 = vpop.permute.xlu0 %732
      %734 = vrot.lane.b32.xlu0 %v563, 8
      %v735 = vpop.permute.xlu0 %734
      %736 = vrot.lane.b32.xlu0 %v575, 8
      %v737 = vpop.permute.xlu0 %736
      %738 = vrot.lane.b32.xlu0 %v587, 8
      %v739 = vpop.permute.xlu0 %738
      %740 = vrot.lane.b32.xlu0 %v599, 8
      %v741 = vpop.permute.xlu0 %740
      %742 = vrot.lane.b32.xlu0 %v611, 8
      %v743 = vpop.permute.xlu0 %742
      %744 = vrot.lane.b32.xlu0 %v623, 8
      %v745 = vpop.permute.xlu0 %744
      %746 = vrot.lane.b32.xlu0 %v635, 8
      %v747 = vpop.permute.xlu0 %746
      %748 = vrot.lane.b32.xlu0 %v647, 8
      %v749 = vpop.permute.xlu0 %748
      %750 = vrot.lane.b32.xlu0 %v659, 8
      %v751 = vpop.permute.xlu0 %750
      %752 = vrot.lane.b32.xlu0 %v671, 8
      %v753 = vpop.permute.xlu0 %752
      %754 = vrot.lane.b32.xlu0 %v683, 8
      %v755 = vpop.permute.xlu0 %754
      %756 = vrot.lane.b32.xlu0 %v695, 8
      %v757 = vpop.permute.xlu0 %756
      %758 = vrot.lane.b32.xlu0 %v707, 8
      %v759 = vpop.permute.xlu0 %758
      %760 = vrot.lane.b32.xlu0 %v719, 8
      %v761 = vpop.permute.xlu0 %760
      %762 = vrot.lane.b32.xlu0 %v731, 8
      %v763 = vpop.permute.xlu0 %762
      %v780 = vunpack.c.l.b16 %v265
      %v781 = vunpack.c.l.b16 %v266
      %v782 = vunpack.c.l.b16 %v267
      %v783 = vunpack.c.l.b16 %v268
      %v784 = vunpack.c.l.b16 %v269
      %v785 = vunpack.c.l.b16 %v270
      %v786 = vunpack.c.l.b16 %v271
      %v787 = vunpack.c.l.b16 %v272
      %v788 = vunpack.c.l.b16 %v273
      %v789 = vunpack.c.l.b16 %v274
      %v790 = vunpack.c.l.b16 %v275
      %v791 = vunpack.c.l.b16 %v276
      %v792 = vunpack.c.l.b16 %v277
      %v793 = vunpack.c.l.b16 %v278
      %v794 = vunpack.c.l.b16 %v279
      %v795 = vunpack.c.l.b16 %v280
      %v796 = vpack.c.b16 %v444, %v780
      %v797 = vpack.c.b16 %v446, %v781
      %v798 = vpack.c.b16 %v448, %v782
      %v799 = vpack.c.b16 %v450, %v783
      %v800 = vpack.c.b16 %v452, %v784
      %v801 = vpack.c.b16 %v454, %v785
      %v802 = vpack.c.b16 %v456, %v786
      %v803 = vpack.c.b16 %v458, %v787
      %v804 = vpack.c.b16 %v460, %v788
      %v805 = vpack.c.b16 %v462, %v789
      %v806 = vpack.c.b16 %v464, %v790
      %v807 = vpack.c.b16 %v466, %v791
      %v808 = vpack.c.b16 %v468, %v792
      %v809 = vpack.c.b16 %v470, %v793
      %v810 = vpack.c.b16 %v472, %v794
      %v811 = vpack.c.b16 %v474, %v795
      %vm812 = vcmask 1046528
      %v813 = vrot.slane %v796, 1
      %v814 = vrot.slane %v523, 1
      %v815 = vsel %vm812, %v813, %v814
      %v816 = vrot.slane %v797, 1
      %v817 = vrot.slane %v524, 1
      %v818 = vsel %vm812, %v816, %v817
      %v819 = vrot.slane %v798, 1
      %v820 = vrot.slane %v525, 1
      %v821 = vsel %vm812, %v819, %v820
      %v822 = vrot.slane %v799, 1
      %v823 = vrot.slane %v526, 1
      %v824 = vsel %vm812, %v822, %v823
      %v825 = vrot.slane %v800, 1
      %v826 = vrot.slane %v527, 1
      %v827 = vsel %vm812, %v825, %v826
      %v828 = vrot.slane %v801, 1
      %v829 = vrot.slane %v528, 1
      %v830 = vsel %vm812, %v828, %v829
      %v831 = vrot.slane %v802, 1
      %v832 = vrot.slane %v529, 1
      %v833 = vsel %vm812, %v831, %v832
      %v834 = vrot.slane %v803, 1
      %v835 = vrot.slane %v530, 1
      %v836 = vsel %vm812, %v834, %v835
      %v837 = vrot.slane %v804, 1
      %v838 = vrot.slane %v531, 1
      %v839 = vsel %vm812, %v837, %v838
      %v840 = vrot.slane %v805, 1
      %v841 = vrot.slane %v532, 1
      %v842 = vsel %vm812, %v840, %v841
      %v843 = vrot.slane %v806, 1
      %v844 = vrot.slane %v533, 1
      %v845 = vsel %vm812, %v843, %v844
      %v846 = vrot.slane %v807, 1
      %v847 = vrot.slane %v534, 1
      %v848 = vsel %vm812, %v846, %v847
      %v849 = vrot.slane %v808, 1
      %v850 = vrot.slane %v535, 1
      %v851 = vsel %vm812, %v849, %v850
      %v852 = vrot.slane %v809, 1
      %v853 = vrot.slane %v536, 1
      %v854 = vsel %vm812, %v852, %v853
      %v855 = vrot.slane %v810, 1
      %v856 = vrot.slane %v537, 1
      %v857 = vsel %vm812, %v855, %v856
      %v858 = vrot.slane %v811, 1
      %v859 = vrot.slane %v538, 1
      %v860 = vsel %vm812, %v858, %v859
      %861 = vrot.lane.b32.xlu0 %v815, 16
      %v862 = vpop.permute.xlu0 %861
      %863 = vrot.lane.b32.xlu0 %v818, 16
      %v864 = vpop.permute.xlu0 %863
      %865 = vrot.lane.b32.xlu0 %v821, 16
      %v866 = vpop.permute.xlu0 %865
      %867 = vrot.lane.b32.xlu0 %v824, 16
      %v868 = vpop.permute.xlu0 %867
      %869 = vrot.lane.b32.xlu0 %v827, 16
      %v870 = vpop.permute.xlu0 %869
      %871 = vrot.lane.b32.xlu0 %v830, 16
      %v872 = vpop.permute.xlu0 %871
      %873 = vrot.lane.b32.xlu0 %v833, 16
      %v874 = vpop.permute.xlu0 %873
      %875 = vrot.lane.b32.xlu0 %v836, 16
      %v876 = vpop.permute.xlu0 %875
      %877 = vrot.lane.b32.xlu0 %v839, 16
      %v878 = vpop.permute.xlu0 %877
      %879 = vrot.lane.b32.xlu0 %v842, 16
      %v880 = vpop.permute.xlu0 %879
      %881 = vrot.lane.b32.xlu0 %v845, 16
      %v882 = vpop.permute.xlu0 %881
      %883 = vrot.lane.b32.xlu0 %v848, 16
      %v884 = vpop.permute.xlu0 %883
      %885 = vrot.lane.b32.xlu0 %v851, 16
      %v886 = vpop.permute.xlu0 %885
      %887 = vrot.lane.b32.xlu0 %v854, 16
      %v888 = vpop.permute.xlu0 %887
      %889 = vrot.lane.b32.xlu0 %v857, 16
      %v890 = vpop.permute.xlu0 %889
      %891 = vrot.lane.b32.xlu0 %v860, 16
      %v892 = vpop.permute.xlu0 %891
      %v925 = vunpack.c.l.b16 %v282
      %v926 = vunpack.c.l.b16 %v283
      %v927 = vunpack.c.l.b16 %v284
      %v928 = vunpack.c.l.b16 %v285
      %v929 = vunpack.c.l.b16 %v286
      %v930 = vunpack.c.l.b16 %v287
      %v931 = vunpack.c.l.b16 %v288
      %v932 = vunpack.c.l.b16 %v289
      %v933 = vunpack.c.l.b16 %v290
      %v934 = vunpack.c.l.b16 %v291
      %v935 = vunpack.c.l.b16 %v292
      %v936 = vunpack.c.l.b16 %v293
      %v937 = vunpack.c.l.b16 %v294
      %v938 = vunpack.c.l.b16 %v295
      %v939 = vunpack.c.l.b16 %v296
      %v940 = vunpack.c.l.b16 %v297
      %v941 = vunpack.c.l.b16 %v298
      %v942 = vunpack.c.l.b16 %v299
      %v943 = vunpack.c.l.b16 %v300
      %v944 = vunpack.c.l.b16 %v301
      %v945 = vunpack.c.l.b16 %v302
      %v946 = vunpack.c.l.b16 %v303
      %v947 = vunpack.c.l.b16 %v304
      %v948 = vunpack.c.l.b16 %v305
      %v949 = vunpack.c.l.b16 %v306
      %v950 = vunpack.c.l.b16 %v307
      %v951 = vunpack.c.l.b16 %v308
      %v952 = vunpack.c.l.b16 %v309
      %v953 = vunpack.c.l.b16 %v310
      %v954 = vunpack.c.l.b16 %v311
      %v955 = vunpack.c.l.b16 %v312
      %v956 = vunpack.c.l.b16 %v313
      %v957 = vpack.c.b16 %v926, %v925
      %v958 = vpack.c.b16 %v928, %v927
      %v959 = vpack.c.b16 %v930, %v929
      %v960 = vpack.c.b16 %v932, %v931
      %v961 = vpack.c.b16 %v934, %v933
      %v962 = vpack.c.b16 %v936, %v935
      %v963 = vpack.c.b16 %v938, %v937
      %v964 = vpack.c.b16 %v940, %v939
      %v965 = vpack.c.b16 %v942, %v941
      %v966 = vpack.c.b16 %v944, %v943
      %v967 = vpack.c.b16 %v946, %v945
      %v968 = vpack.c.b16 %v948, %v947
      %v969 = vpack.c.b16 %v950, %v949
      %v970 = vpack.c.b16 %v952, %v951
      %v971 = vpack.c.b16 %v954, %v953
      %v972 = vpack.c.b16 %v956, %v955
      %973 = vrot.lane.b32.xlu0 %v957, 24
      %v974 = vpop.permute.xlu0 %973
      %975 = vrot.lane.b32.xlu0 %v958, 24
      %v976 = vpop.permute.xlu0 %975
      %977 = vrot.lane.b32.xlu0 %v959, 24
      %v978 = vpop.permute.xlu0 %977
      %979 = vrot.lane.b32.xlu0 %v960, 24
      %v980 = vpop.permute.xlu0 %979
      %981 = vrot.lane.b32.xlu0 %v961, 24
      %v982 = vpop.permute.xlu0 %981
      %983 = vrot.lane.b32.xlu0 %v962, 24
      %v984 = vpop.permute.xlu0 %983
      %985 = vrot.lane.b32.xlu0 %v963, 24
      %v986 = vpop.permute.xlu0 %985
      %987 = vrot.lane.b32.xlu0 %v964, 24
      %v988 = vpop.permute.xlu0 %987
      %989 = vrot.lane.b32.xlu0 %v965, 24
      %v990 = vpop.permute.xlu0 %989
      %991 = vrot.lane.b32.xlu0 %v966, 24
      %v992 = vpop.permute.xlu0 %991
      %993 = vrot.lane.b32.xlu0 %v967, 24
      %v994 = vpop.permute.xlu0 %993
      %995 = vrot.lane.b32.xlu0 %v968, 24
      %v996 = vpop.permute.xlu0 %995
      %997 = vrot.lane.b32.xlu0 %v969, 24
      %v998 = vpop.permute.xlu0 %997
      %999 = vrot.lane.b32.xlu0 %v970, 24
      %v1000 = vpop.permute.xlu0 %999
      %1001 = vrot.lane.b32.xlu0 %v971, 24
      %v1002 = vpop.permute.xlu0 %1001
      %1003 = vrot.lane.b32.xlu0 %v972, 24
      %v1004 = vpop.permute.xlu0 %1003
      %v1021 = vunpack.c.l.b16 %v314
      %v1022 = vunpack.c.l.b16 %v315
      %v1023 = vunpack.c.l.b16 %v316
      %v1024 = vunpack.c.l.b16 %v317
      %v1025 = vunpack.c.l.b16 %v318
      %v1026 = vunpack.c.l.b16 %v319
      %v1027 = vunpack.c.l.b16 %v320
      %v1028 = vunpack.c.l.b16 %v321
      %v1029 = vunpack.c.l.b16 %v322
      %v1030 = vunpack.c.l.b16 %v323
      %v1031 = vunpack.c.l.b16 %v324
      %v1032 = vunpack.c.l.b16 %v325
      %v1033 = vunpack.c.l.b16 %v326
      %v1034 = vunpack.c.l.b16 %v327
      %v1035 = vunpack.c.l.b16 %v328
      %v1036 = vunpack.c.l.b16 %v329
      %v1037 = vpack.c.b16 %v1021, %v1021
      %v1038 = vpack.c.b16 %v1022, %v1022
      %v1039 = vpack.c.b16 %v1023, %v1023
      %v1040 = vpack.c.b16 %v1024, %v1024
      %v1041 = vpack.c.b16 %v1025, %v1025
      %v1042 = vpack.c.b16 %v1026, %v1026
      %v1043 = vpack.c.b16 %v1027, %v1027
      %v1044 = vpack.c.b16 %v1028, %v1028
      %v1045 = vpack.c.b16 %v1029, %v1029
      %v1046 = vpack.c.b16 %v1030, %v1030
      %v1047 = vpack.c.b16 %v1031, %v1031
      %v1048 = vpack.c.b16 %v1032, %v1032
      %v1049 = vpack.c.b16 %v1033, %v1033
      %v1050 = vpack.c.b16 %v1034, %v1034
      %v1051 = vpack.c.b16 %v1035, %v1035
      %v1052 = vpack.c.b16 %v1036, %v1036
      %v1054 = vshrl.u32 %v957, 16
      %v1056 = vshll.u32 %v957, 16
      %v1058 = vrot.slane %v1056, 1
      %v1059 = vor.u32 %v1054, %v1058
      %v1061 = vshll.u32 %v1037, 16
      %v1063 = vrot.slane %v1061, 1
      %v1064 = vsel %vm539, %v1059, %v1063
      %v1066 = vshrl.u32 %v958, 16
      %v1068 = vshll.u32 %v958, 16
      %v1070 = vrot.slane %v1068, 1
      %v1071 = vor.u32 %v1066, %v1070
      %v1073 = vshll.u32 %v1038, 16
      %v1075 = vrot.slane %v1073, 1
      %v1076 = vsel %vm539, %v1071, %v1075
      %v1078 = vshrl.u32 %v959, 16
      %v1080 = vshll.u32 %v959, 16
      %v1082 = vrot.slane %v1080, 1
      %v1083 = vor.u32 %v1078, %v1082
      %v1085 = vshll.u32 %v1039, 16
      %v1087 = vrot.slane %v1085, 1
      %v1088 = vsel %vm539, %v1083, %v1087
      %v1090 = vshrl.u32 %v960, 16
      %v1092 = vshll.u32 %v960, 16
      %v1094 = vrot.slane %v1092, 1
      %v1095 = vor.u32 %v1090, %v1094
      %v1097 = vshll.u32 %v1040, 16
      %v1099 = vrot.slane %v1097, 1
      %v1100 = vsel %vm539, %v1095, %v1099
      %v1102 = vshrl.u32 %v961, 16
      %v1104 = vshll.u32 %v961, 16
      %v1106 = vrot.slane %v1104, 1
      %v1107 = vor.u32 %v1102, %v1106
      %v1109 = vshll.u32 %v1041, 16
      %v1111 = vrot.slane %v1109, 1
      %v1112 = vsel %vm539, %v1107, %v1111
      %v1114 = vshrl.u32 %v962, 16
      %v1116 = vshll.u32 %v962, 16
      %v1118 = vrot.slane %v1116, 1
      %v1119 = vor.u32 %v1114, %v1118
      %v1121 = vshll.u32 %v1042, 16
      %v1123 = vrot.slane %v1121, 1
      %v1124 = vsel %vm539, %v1119, %v1123
      %v1126 = vshrl.u32 %v963, 16
      %v1128 = vshll.u32 %v963, 16
      %v1130 = vrot.slane %v1128, 1
      %v1131 = vor.u32 %v1126, %v1130
      %v1133 = vshll.u32 %v1043, 16
      %v1135 = vrot.slane %v1133, 1
      %v1136 = vsel %vm539, %v1131, %v1135
      %v1138 = vshrl.u32 %v964, 16
      %v1140 = vshll.u32 %v964, 16
      %v1142 = vrot.slane %v1140, 1
      %v1143 = vor.u32 %v1138, %v1142
      %v1145 = vshll.u32 %v1044, 16
      %v1147 = vrot.slane %v1145, 1
      %v1148 = vsel %vm539, %v1143, %v1147
      %v1150 = vshrl.u32 %v965, 16
      %v1152 = vshll.u32 %v965, 16
      %v1154 = vrot.slane %v1152, 1
      %v1155 = vor.u32 %v1150, %v1154
      %v1157 = vshll.u32 %v1045, 16
      %v1159 = vrot.slane %v1157, 1
      %v1160 = vsel %vm539, %v1155, %v1159
      %v1162 = vshrl.u32 %v966, 16
      %v1164 = vshll.u32 %v966, 16
      %v1166 = vrot.slane %v1164, 1
      %v1167 = vor.u32 %v1162, %v1166
      %v1169 = vshll.u32 %v1046, 16
      %v1171 = vrot.slane %v1169, 1
      %v1172 = vsel %vm539, %v1167, %v1171
      %v1174 = vshrl.u32 %v967, 16
      %v1176 = vshll.u32 %v967, 16
      %v1178 = vrot.slane %v1176, 1
      %v1179 = vor.u32 %v1174, %v1178
      %v1181 = vshll.u32 %v1047, 16
      %v1183 = vrot.slane %v1181, 1
      %v1184 = vsel %vm539, %v1179, %v1183
      %v1186 = vshrl.u32 %v968, 16
      %v1188 = vshll.u32 %v968, 16
      %v1190 = vrot.slane %v1188, 1
      %v1191 = vor.u32 %v1186, %v1190
      %v1193 = vshll.u32 %v1048, 16
      %v1195 = vrot.slane %v1193, 1
      %v1196 = vsel %vm539, %v1191, %v1195
      %v1198 = vshrl.u32 %v969, 16
      %v1200 = vshll.u32 %v969, 16
      %v1202 = vrot.slane %v1200, 1
      %v1203 = vor.u32 %v1198, %v1202
      %v1205 = vshll.u32 %v1049, 16
      %v1207 = vrot.slane %v1205, 1
      %v1208 = vsel %vm539, %v1203, %v1207
      %v1210 = vshrl.u32 %v970, 16
      %v1212 = vshll.u32 %v970, 16
      %v1214 = vrot.slane %v1212, 1
      %v1215 = vor.u32 %v1210, %v1214
      %v1217 = vshll.u32 %v1050, 16
      %v1219 = vrot.slane %v1217, 1
      %v1220 = vsel %vm539, %v1215, %v1219
      %v1222 = vshrl.u32 %v971, 16
      %v1224 = vshll.u32 %v971, 16
      %v1226 = vrot.slane %v1224, 1
      %v1227 = vor.u32 %v1222, %v1226
      %v1229 = vshll.u32 %v1051, 16
      %v1231 = vrot.slane %v1229, 1
      %v1232 = vsel %vm539, %v1227, %v1231
      %v1234 = vshrl.u32 %v972, 16
      %v1236 = vshll.u32 %v972, 16
      %v1238 = vrot.slane %v1236, 1
      %v1239 = vor.u32 %v1234, %v1238
      %v1241 = vshll.u32 %v1052, 16
      %v1243 = vrot.slane %v1241, 1
      %v1244 = vsel %vm539, %v1239, %v1243
      %1245 = vrot.lane.b32.xlu0 %v1064, 32
      %v1246 = vpop.permute.xlu0 %1245
      %1247 = vrot.lane.b32.xlu0 %v1076, 32
      %v1248 = vpop.permute.xlu0 %1247
      %1249 = vrot.lane.b32.xlu0 %v1088, 32
      %v1250 = vpop.permute.xlu0 %1249
      %1251 = vrot.lane.b32.xlu0 %v1100, 32
      %v1252 = vpop.permute.xlu0 %1251
      %1253 = vrot.lane.b32.xlu0 %v1112, 32
      %v1254 = vpop.permute.xlu0 %1253
      %1255 = vrot.lane.b32.xlu0 %v1124, 32
      %v1256 = vpop.permute.xlu0 %1255
      %1257 = vrot.lane.b32.xlu0 %v1136, 32
      %v1258 = vpop.permute.xlu0 %1257
      %1259 = vrot.lane.b32.xlu0 %v1148, 32
      %v1260 = vpop.permute.xlu0 %1259
      %1261 = vrot.lane.b32.xlu0 %v1160, 32
      %v1262 = vpop.permute.xlu0 %1261
      %1263 = vrot.lane.b32.xlu0 %v1172, 32
      %v1264 = vpop.permute.xlu0 %1263
      %1265 = vrot.lane.b32.xlu0 %v1184, 32
      %v1266 = vpop.permute.xlu0 %1265
      %1267 = vrot.lane.b32.xlu0 %v1196, 32
      %v1268 = vpop.permute.xlu0 %1267
      %1269 = vrot.lane.b32.xlu0 %v1208, 32
      %v1270 = vpop.permute.xlu0 %1269
      %1271 = vrot.lane.b32.xlu0 %v1220, 32
      %v1272 = vpop.permute.xlu0 %1271
      %1273 = vrot.lane.b32.xlu0 %v1232, 32
      %v1274 = vpop.permute.xlu0 %1273
      %1275 = vrot.lane.b32.xlu0 %v1244, 32
      %v1276 = vpop.permute.xlu0 %1275
      %v1293 = vunpack.c.l.b16 %v330
      %v1294 = vunpack.c.l.b16 %v331
      %v1295 = vunpack.c.l.b16 %v332
      %v1296 = vunpack.c.l.b16 %v333
      %v1297 = vunpack.c.l.b16 %v334
      %v1298 = vunpack.c.l.b16 %v335
      %v1299 = vunpack.c.l.b16 %v336
      %v1300 = vunpack.c.l.b16 %v337
      %v1301 = vunpack.c.l.b16 %v338
      %v1302 = vunpack.c.l.b16 %v339
      %v1303 = vunpack.c.l.b16 %v340
      %v1304 = vunpack.c.l.b16 %v341
      %v1305 = vunpack.c.l.b16 %v342
      %v1306 = vunpack.c.l.b16 %v343
      %v1307 = vunpack.c.l.b16 %v344
      %v1308 = vunpack.c.l.b16 %v345
      %v1309 = vpack.c.b16 %v926, %v1293
      %v1310 = vpack.c.b16 %v928, %v1294
      %v1311 = vpack.c.b16 %v930, %v1295
      %v1312 = vpack.c.b16 %v932, %v1296
      %v1313 = vpack.c.b16 %v934, %v1297
      %v1314 = vpack.c.b16 %v936, %v1298
      %v1315 = vpack.c.b16 %v938, %v1299
      %v1316 = vpack.c.b16 %v940, %v1300
      %v1317 = vpack.c.b16 %v942, %v1301
      %v1318 = vpack.c.b16 %v944, %v1302
      %v1319 = vpack.c.b16 %v946, %v1303
      %v1320 = vpack.c.b16 %v948, %v1304
      %v1321 = vpack.c.b16 %v950, %v1305
      %v1322 = vpack.c.b16 %v952, %v1306
      %v1323 = vpack.c.b16 %v954, %v1307
      %v1324 = vpack.c.b16 %v956, %v1308
      %v1325 = vrot.slane %v1309, 1
      %v1326 = vrot.slane %v1037, 1
      %v1327 = vsel %vm812, %v1325, %v1326
      %v1328 = vrot.slane %v1310, 1
      %v1329 = vrot.slane %v1038, 1
      %v1330 = vsel %vm812, %v1328, %v1329
      %v1331 = vrot.slane %v1311, 1
      %v1332 = vrot.slane %v1039, 1
      %v1333 = vsel %vm812, %v1331, %v1332
      %v1334 = vrot.slane %v1312, 1
      %v1335 = vrot.slane %v1040, 1
      %v1336 = vsel %vm812, %v1334, %v1335
      %v1337 = vrot.slane %v1313, 1
      %v1338 = vrot.slane %v1041, 1
      %v1339 = vsel %vm812, %v1337, %v1338
      %v1340 = vrot.slane %v1314, 1
      %v1341 = vrot.slane %v1042, 1
      %v1342 = vsel %vm812, %v1340, %v1341
      %v1343 = vrot.slane %v1315, 1
      %v1344 = vrot.slane %v1043, 1
      %v1345 = vsel %vm812, %v1343, %v1344
      %v1346 = vrot.slane %v1316, 1
      %v1347 = vrot.slane %v1044, 1
      %v1348 = vsel %vm812, %v1346, %v1347
      %v1349 = vrot.slane %v1317, 1
      %v1350 = vrot.slane %v1045, 1
      %v1351 = vsel %vm812, %v1349, %v1350
      %v1352 = vrot.slane %v1318, 1
      %v1353 = vrot.slane %v1046, 1
      %v1354 = vsel %vm812, %v1352, %v1353
      %v1355 = vrot.slane %v1319, 1
      %v1356 = vrot.slane %v1047, 1
      %v1357 = vsel %vm812, %v1355, %v1356
      %v1358 = vrot.slane %v1320, 1
      %v1359 = vrot.slane %v1048, 1
      %v1360 = vsel %vm812, %v1358, %v1359
      %v1361 = vrot.slane %v1321, 1
      %v1362 = vrot.slane %v1049, 1
      %v1363 = vsel %vm812, %v1361, %v1362
      %v1364 = vrot.slane %v1322, 1
      %v1365 = vrot.slane %v1050, 1
      %v1366 = vsel %vm812, %v1364, %v1365
      %v1367 = vrot.slane %v1323, 1
      %v1368 = vrot.slane %v1051, 1
      %v1369 = vsel %vm812, %v1367, %v1368
      %v1370 = vrot.slane %v1324, 1
      %v1371 = vrot.slane %v1052, 1
      %v1372 = vsel %vm812, %v1370, %v1371
      %1373 = vrot.lane.b32.xlu0 %v1327, 40
      %v1374 = vpop.permute.xlu0 %1373
      %1375 = vrot.lane.b32.xlu0 %v1330, 40
      %v1376 = vpop.permute.xlu0 %1375
      %1377 = vrot.lane.b32.xlu0 %v1333, 40
      %v1378 = vpop.permute.xlu0 %1377
      %1379 = vrot.lane.b32.xlu0 %v1336, 40
      %v1380 = vpop.permute.xlu0 %1379
      %1381 = vrot.lane.b32.xlu0 %v1339, 40
      %v1382 = vpop.permute.xlu0 %1381
      %1383 = vrot.lane.b32.xlu0 %v1342, 40
      %v1384 = vpop.permute.xlu0 %1383
      %1385 = vrot.lane.b32.xlu0 %v1345, 40
      %v1386 = vpop.permute.xlu0 %1385
      %1387 = vrot.lane.b32.xlu0 %v1348, 40
      %v1388 = vpop.permute.xlu0 %1387
      %1389 = vrot.lane.b32.xlu0 %v1351, 40
      %v1390 = vpop.permute.xlu0 %1389
      %1391 = vrot.lane.b32.xlu0 %v1354, 40
      %v1392 = vpop.permute.xlu0 %1391
      %1393 = vrot.lane.b32.xlu0 %v1357, 40
      %v1394 = vpop.permute.xlu0 %1393
      %1395 = vrot.lane.b32.xlu0 %v1360, 40
      %v1396 = vpop.permute.xlu0 %1395
      %1397 = vrot.lane.b32.xlu0 %v1363, 40
      %v1398 = vpop.permute.xlu0 %1397
      %1399 = vrot.lane.b32.xlu0 %v1366, 40
      %v1400 = vpop.permute.xlu0 %1399
      %1401 = vrot.lane.b32.xlu0 %v1369, 40
      %v1402 = vpop.permute.xlu0 %1401
      %1403 = vrot.lane.b32.xlu0 %v1372, 40
      %v1404 = vpop.permute.xlu0 %1403
      %v1437 = vunpack.c.l.b16 %v347
      %v1438 = vunpack.c.l.b16 %v348
      %v1439 = vunpack.c.l.b16 %v349
      %v1440 = vunpack.c.l.b16 %v350
      %v1441 = vunpack.c.l.b16 %v351
      %v1442 = vunpack.c.l.b16 %v352
      %v1443 = vunpack.c.l.b16 %v353
      %v1444 = vunpack.c.l.b16 %v354
      %v1445 = vunpack.c.l.b16 %v355
      %v1446 = vunpack.c.l.b16 %v356
      %v1447 = vunpack.c.l.b16 %v357
      %v1448 = vunpack.c.l.b16 %v358
      %v1449 = vunpack.c.l.b16 %v359
      %v1450 = vunpack.c.l.b16 %v360
      %v1451 = vunpack.c.l.b16 %v361
      %v1452 = vunpack.c.l.b16 %v362
      %v1453 = vunpack.c.l.b16 %v363
      %v1454 = vunpack.c.l.b16 %v364
      %v1455 = vunpack.c.l.b16 %v365
      %v1456 = vunpack.c.l.b16 %v366
      %v1457 = vunpack.c.l.b16 %v367
      %v1458 = vunpack.c.l.b16 %v368
      %v1459 = vunpack.c.l.b16 %v369
      %v1460 = vunpack.c.l.b16 %v370
      %v1461 = vunpack.c.l.b16 %v371
      %v1462 = vunpack.c.l.b16 %v372
      %v1463 = vunpack.c.l.b16 %v373
      %v1464 = vunpack.c.l.b16 %v374
      %v1465 = vunpack.c.l.b16 %v375
      %v1466 = vunpack.c.l.b16 %v376
      %v1467 = vunpack.c.l.b16 %v377
      %v1468 = vunpack.c.l.b16 %v378
      %v1469 = vpack.c.b16 %v1438, %v1437
      %v1470 = vpack.c.b16 %v1440, %v1439
      %v1471 = vpack.c.b16 %v1442, %v1441
      %v1472 = vpack.c.b16 %v1444, %v1443
      %v1473 = vpack.c.b16 %v1446, %v1445
      %v1474 = vpack.c.b16 %v1448, %v1447
      %v1475 = vpack.c.b16 %v1450, %v1449
      %v1476 = vpack.c.b16 %v1452, %v1451
      %v1477 = vpack.c.b16 %v1454, %v1453
      %v1478 = vpack.c.b16 %v1456, %v1455
      %v1479 = vpack.c.b16 %v1458, %v1457
      %v1480 = vpack.c.b16 %v1460, %v1459
      %v1481 = vpack.c.b16 %v1462, %v1461
      %v1482 = vpack.c.b16 %v1464, %v1463
      %v1483 = vpack.c.b16 %v1466, %v1465
      %v1484 = vpack.c.b16 %v1468, %v1467
      %1485 = vrot.lane.b32.xlu0 %v1469, 48
      %v1486 = vpop.permute.xlu0 %1485
      %1487 = vrot.lane.b32.xlu0 %v1470, 48
      %v1488 = vpop.permute.xlu0 %1487
      %1489 = vrot.lane.b32.xlu0 %v1471, 48
      %v1490 = vpop.permute.xlu0 %1489
      %1491 = vrot.lane.b32.xlu0 %v1472, 48
      %v1492 = vpop.permute.xlu0 %1491
      %1493 = vrot.lane.b32.xlu0 %v1473, 48
      %v1494 = vpop.permute.xlu0 %1493
      %1495 = vrot.lane.b32.xlu0 %v1474, 48
      %v1496 = vpop.permute.xlu0 %1495
      %1497 = vrot.lane.b32.xlu0 %v1475, 48
      %v1498 = vpop.permute.xlu0 %1497
      %1499 = vrot.lane.b32.xlu0 %v1476, 48
      %v1500 = vpop.permute.xlu0 %1499
      %1501 = vrot.lane.b32.xlu0 %v1477, 48
      %v1502 = vpop.permute.xlu0 %1501
      %1503 = vrot.lane.b32.xlu0 %v1478, 48
      %v1504 = vpop.permute.xlu0 %1503
      %1505 = vrot.lane.b32.xlu0 %v1479, 48
      %v1506 = vpop.permute.xlu0 %1505
      %1507 = vrot.lane.b32.xlu0 %v1480, 48
      %v1508 = vpop.permute.xlu0 %1507
      %1509 = vrot.lane.b32.xlu0 %v1481, 48
      %v1510 = vpop.permute.xlu0 %1509
      %1511 = vrot.lane.b32.xlu0 %v1482, 48
      %v1512 = vpop.permute.xlu0 %1511
      %1513 = vrot.lane.b32.xlu0 %v1483, 48
      %v1514 = vpop.permute.xlu0 %1513
      %1515 = vrot.lane.b32.xlu0 %v1484, 48
      %v1516 = vpop.permute.xlu0 %1515
      %v1533 = vunpack.c.l.b16 %v379
      %v1534 = vunpack.c.l.b16 %v380
      %v1535 = vunpack.c.l.b16 %v381
      %v1536 = vunpack.c.l.b16 %v382
      %v1537 = vunpack.c.l.b16 %v383
      %v1538 = vunpack.c.l.b16 %v384
      %v1539 = vunpack.c.l.b16 %v385
      %v1540 = vunpack.c.l.b16 %v386
      %v1541 = vunpack.c.l.b16 %v387
      %v1542 = vunpack.c.l.b16 %v388
      %v1543 = vunpack.c.l.b16 %v389
      %v1544 = vunpack.c.l.b16 %v390
      %v1545 = vunpack.c.l.b16 %v391
      %v1546 = vunpack.c.l.b16 %v392
      %v1547 = vunpack.c.l.b16 %v393
      %v1548 = vunpack.c.l.b16 %v394
      %v1549 = vpack.c.b16 %v1533, %v1533
      %v1550 = vpack.c.b16 %v1534, %v1534
      %v1551 = vpack.c.b16 %v1535, %v1535
      %v1552 = vpack.c.b16 %v1536, %v1536
      %v1553 = vpack.c.b16 %v1537, %v1537
      %v1554 = vpack.c.b16 %v1538, %v1538
      %v1555 = vpack.c.b16 %v1539, %v1539
      %v1556 = vpack.c.b16 %v1540, %v1540
      %v1557 = vpack.c.b16 %v1541, %v1541
      %v1558 = vpack.c.b16 %v1542, %v1542
      %v1559 = vpack.c.b16 %v1543, %v1543
      %v1560 = vpack.c.b16 %v1544, %v1544
      %v1561 = vpack.c.b16 %v1545, %v1545
      %v1562 = vpack.c.b16 %v1546, %v1546
      %v1563 = vpack.c.b16 %v1547, %v1547
      %v1564 = vpack.c.b16 %v1548, %v1548
      %v1566 = vshrl.u32 %v1469, 16
      %v1568 = vshll.u32 %v1469, 16
      %v1570 = vrot.slane %v1568, 1
      %v1571 = vor.u32 %v1566, %v1570
      %v1573 = vshll.u32 %v1549, 16
      %v1575 = vrot.slane %v1573, 1
      %v1576 = vsel %vm539, %v1571, %v1575
      %v1578 = vshrl.u32 %v1470, 16
      %v1580 = vshll.u32 %v1470, 16
      %v1582 = vrot.slane %v1580, 1
      %v1583 = vor.u32 %v1578, %v1582
      %v1585 = vshll.u32 %v1550, 16
      %v1587 = vrot.slane %v1585, 1
      %v1588 = vsel %vm539, %v1583, %v1587
      %v1590 = vshrl.u32 %v1471, 16
      %v1592 = vshll.u32 %v1471, 16
      %v1594 = vrot.slane %v1592, 1
      %v1595 = vor.u32 %v1590, %v1594
      %v1597 = vshll.u32 %v1551, 16
      %v1599 = vrot.slane %v1597, 1
      %v1600 = vsel %vm539, %v1595, %v1599
      %v1602 = vshrl.u32 %v1472, 16
      %v1604 = vshll.u32 %v1472, 16
      %v1606 = vrot.slane %v1604, 1
      %v1607 = vor.u32 %v1602, %v1606
      %v1609 = vshll.u32 %v1552, 16
      %v1611 = vrot.slane %v1609, 1
      %v1612 = vsel %vm539, %v1607, %v1611
      %v1614 = vshrl.u32 %v1473, 16
      %v1616 = vshll.u32 %v1473, 16
      %v1618 = vrot.slane %v1616, 1
      %v1619 = vor.u32 %v1614, %v1618
      %v1621 = vshll.u32 %v1553, 16
      %v1623 = vrot.slane %v1621, 1
      %v1624 = vsel %vm539, %v1619, %v1623
      %v1626 = vshrl.u32 %v1474, 16
      %v1628 = vshll.u32 %v1474, 16
      %v1630 = vrot.slane %v1628, 1
      %v1631 = vor.u32 %v1626, %v1630
      %v1633 = vshll.u32 %v1554, 16
      %v1635 = vrot.slane %v1633, 1
      %v1636 = vsel %vm539, %v1631, %v1635
      %v1638 = vshrl.u32 %v1475, 16
      %v1640 = vshll.u32 %v1475, 16
      %v1642 = vrot.slane %v1640, 1
      %v1643 = vor.u32 %v1638, %v1642
      %v1645 = vshll.u32 %v1555, 16
      %v1647 = vrot.slane %v1645, 1
      %v1648 = vsel %vm539, %v1643, %v1647
      %v1650 = vshrl.u32 %v1476, 16
      %v1652 = vshll.u32 %v1476, 16
      %v1654 = vrot.slane %v1652, 1
      %v1655 = vor.u32 %v1650, %v1654
      %v1657 = vshll.u32 %v1556, 16
      %v1659 = vrot.slane %v1657, 1
      %v1660 = vsel %vm539, %v1655, %v1659
      %v1662 = vshrl.u32 %v1477, 16
      %v1664 = vshll.u32 %v1477, 16
      %v1666 = vrot.slane %v1664, 1
      %v1667 = vor.u32 %v1662, %v1666
      %v1669 = vshll.u32 %v1557, 16
      %v1671 = vrot.slane %v1669, 1
      %v1672 = vsel %vm539, %v1667, %v1671
      %v1674 = vshrl.u32 %v1478, 16
      %v1676 = vshll.u32 %v1478, 16
      %v1678 = vrot.slane %v1676, 1
      %v1679 = vor.u32 %v1674, %v1678
      %v1681 = vshll.u32 %v1558, 16
      %v1683 = vrot.slane %v1681, 1
      %v1684 = vsel %vm539, %v1679, %v1683
      %v1686 = vshrl.u32 %v1479, 16
      %v1688 = vshll.u32 %v1479, 16
      %v1690 = vrot.slane %v1688, 1
      %v1691 = vor.u32 %v1686, %v1690
      %v1693 = vshll.u32 %v1559, 16
      %v1695 = vrot.slane %v1693, 1
      %v1696 = vsel %vm539, %v1691, %v1695
      %v1698 = vshrl.u32 %v1480, 16
      %v1700 = vshll.u32 %v1480, 16
      %v1702 = vrot.slane %v1700, 1
      %v1703 = vor.u32 %v1698, %v1702
      %v1705 = vshll.u32 %v1560, 16
      %v1707 = vrot.slane %v1705, 1
      %v1708 = vsel %vm539, %v1703, %v1707
      %v1710 = vshrl.u32 %v1481, 16
      %v1712 = vshll.u32 %v1481, 16
      %v1714 = vrot.slane %v1712, 1
      %v1715 = vor.u32 %v1710, %v1714
      %v1717 = vshll.u32 %v1561, 16
      %v1719 = vrot.slane %v1717, 1
      %v1720 = vsel %vm539, %v1715, %v1719
      %v1722 = vshrl.u32 %v1482, 16
      %v1724 = vshll.u32 %v1482, 16
      %v1726 = vrot.slane %v1724, 1
      %v1727 = vor.u32 %v1722, %v1726
      %v1729 = vshll.u32 %v1562, 16
      %v1731 = vrot.slane %v1729, 1
      %v1732 = vsel %vm539, %v1727, %v1731
      %v1734 = vshrl.u32 %v1483, 16
      %v1736 = vshll.u32 %v1483, 16
      %v1738 = vrot.slane %v1736, 1
      %v1739 = vor.u32 %v1734, %v1738
      %v1741 = vshll.u32 %v1563, 16
      %v1743 = vrot.slane %v1741, 1
      %v1744 = vsel %vm539, %v1739, %v1743
      %v1746 = vshrl.u32 %v1484, 16
      %v1748 = vshll.u32 %v1484, 16
      %v1750 = vrot.slane %v1748, 1
      %v1751 = vor.u32 %v1746, %v1750
      %v1753 = vshll.u32 %v1564, 16
      %v1755 = vrot.slane %v1753, 1
      %v1756 = vsel %vm539, %v1751, %v1755
      %1757 = vrot.lane.b32.xlu0 %v1576, 56
      %v1758 = vpop.permute.xlu0 %1757
      %1759 = vrot.lane.b32.xlu0 %v1588, 56
      %v1760 = vpop.permute.xlu0 %1759
      %1761 = vrot.lane.b32.xlu0 %v1600, 56
      %v1762 = vpop.permute.xlu0 %1761
      %1763 = vrot.lane.b32.xlu0 %v1612, 56
      %v1764 = vpop.permute.xlu0 %1763
      %1765 = vrot.lane.b32.xlu0 %v1624, 56
      %v1766 = vpop.permute.xlu0 %1765
      %1767 = vrot.lane.b32.xlu0 %v1636, 56
      %v1768 = vpop.permute.xlu0 %1767
      %1769 = vrot.lane.b32.xlu0 %v1648, 56
      %v1770 = vpop.permute.xlu0 %1769
      %1771 = vrot.lane.b32.xlu0 %v1660, 56
      %v1772 = vpop.permute.xlu0 %1771
      %1773 = vrot.lane.b32.xlu0 %v1672, 56
      %v1774 = vpop.permute.xlu0 %1773
      %1775 = vrot.lane.b32.xlu0 %v1684, 56
      %v1776 = vpop.permute.xlu0 %1775
      %1777 = vrot.lane.b32.xlu0 %v1696, 56
      %v1778 = vpop.permute.xlu0 %1777
      %1779 = vrot.lane.b32.xlu0 %v1708, 56
      %v1780 = vpop.permute.xlu0 %1779
      %1781 = vrot.lane.b32.xlu0 %v1720, 56
      %v1782 = vpop.permute.xlu0 %1781
      %1783 = vrot.lane.b32.xlu0 %v1732, 56
      %v1784 = vpop.permute.xlu0 %1783
      %1785 = vrot.lane.b32.xlu0 %v1744, 56
      %v1786 = vpop.permute.xlu0 %1785
      %1787 = vrot.lane.b32.xlu0 %v1756, 56
      %v1788 = vpop.permute.xlu0 %1787
      %v1805 = vunpack.c.l.b16 %v395
      %v1806 = vunpack.c.l.b16 %v396
      %v1807 = vunpack.c.l.b16 %v397
      %v1808 = vunpack.c.l.b16 %v398
      %v1809 = vunpack.c.l.b16 %v399
      %v1810 = vunpack.c.l.b16 %v400
      %v1811 = vunpack.c.l.b16 %v401
      %v1812 = vunpack.c.l.b16 %v402
      %v1813 = vunpack.c.l.b16 %v403
      %v1814 = vunpack.c.l.b16 %v404
      %v1815 = vunpack.c.l.b16 %v405
      %v1816 = vunpack.c.l.b16 %v406
      %v1817 = vunpack.c.l.b16 %v407
      %v1818 = vunpack.c.l.b16 %v408
      %v1819 = vunpack.c.l.b16 %v409
      %v1820 = vunpack.c.l.b16 %v410
      %v1821 = vpack.c.b16 %v1438, %v1805
      %v1822 = vpack.c.b16 %v1440, %v1806
      %v1823 = vpack.c.b16 %v1442, %v1807
      %v1824 = vpack.c.b16 %v1444, %v1808
      %v1825 = vpack.c.b16 %v1446, %v1809
      %v1826 = vpack.c.b16 %v1448, %v1810
      %v1827 = vpack.c.b16 %v1450, %v1811
      %v1828 = vpack.c.b16 %v1452, %v1812
      %v1829 = vpack.c.b16 %v1454, %v1813
      %v1830 = vpack.c.b16 %v1456, %v1814
      %v1831 = vpack.c.b16 %v1458, %v1815
      %v1832 = vpack.c.b16 %v1460, %v1816
      %v1833 = vpack.c.b16 %v1462, %v1817
      %v1834 = vpack.c.b16 %v1464, %v1818
      %v1835 = vpack.c.b16 %v1466, %v1819
      %v1836 = vpack.c.b16 %v1468, %v1820
      %v1837 = vrot.slane %v1821, 1
      %v1838 = vrot.slane %v1549, 1
      %v1839 = vsel %vm812, %v1837, %v1838
      %v1840 = vrot.slane %v1822, 1
      %v1841 = vrot.slane %v1550, 1
      %v1842 = vsel %vm812, %v1840, %v1841
      %v1843 = vrot.slane %v1823, 1
      %v1844 = vrot.slane %v1551, 1
      %v1845 = vsel %vm812, %v1843, %v1844
      %v1846 = vrot.slane %v1824, 1
      %v1847 = vrot.slane %v1552, 1
      %v1848 = vsel %vm812, %v1846, %v1847
      %v1849 = vrot.slane %v1825, 1
      %v1850 = vrot.slane %v1553, 1
      %v1851 = vsel %vm812, %v1849, %v1850
      %v1852 = vrot.slane %v1826, 1
      %v1853 = vrot.slane %v1554, 1
      %v1854 = vsel %vm812, %v1852, %v1853
      %v1855 = vrot.slane %v1827, 1
      %v1856 = vrot.slane %v1555, 1
      %v1857 = vsel %vm812, %v1855, %v1856
      %v1858 = vrot.slane %v1828, 1
      %v1859 = vrot.slane %v1556, 1
      %v1860 = vsel %vm812, %v1858, %v1859
      %v1861 = vrot.slane %v1829, 1
      %v1862 = vrot.slane %v1557, 1
      %v1863 = vsel %vm812, %v1861, %v1862
      %v1864 = vrot.slane %v1830, 1
      %v1865 = vrot.slane %v1558, 1
      %v1866 = vsel %vm812, %v1864, %v1865
      %v1867 = vrot.slane %v1831, 1
      %v1868 = vrot.slane %v1559, 1
      %v1869 = vsel %vm812, %v1867, %v1868
      %v1870 = vrot.slane %v1832, 1
      %v1871 = vrot.slane %v1560, 1
      %v1872 = vsel %vm812, %v1870, %v1871
      %v1873 = vrot.slane %v1833, 1
      %v1874 = vrot.slane %v1561, 1
      %v1875 = vsel %vm812, %v1873, %v1874
      %v1876 = vrot.slane %v1834, 1
      %v1877 = vrot.slane %v1562, 1
      %v1878 = vsel %vm812, %v1876, %v1877
      %v1879 = vrot.slane %v1835, 1
      %v1880 = vrot.slane %v1563, 1
      %v1881 = vsel %vm812, %v1879, %v1880
      %v1882 = vrot.slane %v1836, 1
      %v1883 = vrot.slane %v1564, 1
      %v1884 = vsel %vm812, %v1882, %v1883
      %1885 = vrot.lane.b32.xlu0 %v1839, 64
      %v1886 = vpop.permute.xlu0 %1885
      %1887 = vrot.lane.b32.xlu0 %v1842, 64
      %v1888 = vpop.permute.xlu0 %1887
      %1889 = vrot.lane.b32.xlu0 %v1845, 64
      %v1890 = vpop.permute.xlu0 %1889
      %1891 = vrot.lane.b32.xlu0 %v1848, 64
      %v1892 = vpop.permute.xlu0 %1891
      %1893 = vrot.lane.b32.xlu0 %v1851, 64
      %v1894 = vpop.permute.xlu0 %1893
      %1895 = vrot.lane.b32.xlu0 %v1854, 64
      %v1896 = vpop.permute.xlu0 %1895
      %1897 = vrot.lane.b32.xlu0 %v1857, 64
      %v1898 = vpop.permute.xlu0 %1897
      %1899 = vrot.lane.b32.xlu0 %v1860, 64
      %v1900 = vpop.permute.xlu0 %1899
      %1901 = vrot.lane.b32.xlu0 %v1863, 64
      %v1902 = vpop.permute.xlu0 %1901
      %1903 = vrot.lane.b32.xlu0 %v1866, 64
      %v1904 = vpop.permute.xlu0 %1903
      %1905 = vrot.lane.b32.xlu0 %v1869, 64
      %v1906 = vpop.permute.xlu0 %1905
      %1907 = vrot.lane.b32.xlu0 %v1872, 64
      %v1908 = vpop.permute.xlu0 %1907
      %1909 = vrot.lane.b32.xlu0 %v1875, 64
      %v1910 = vpop.permute.xlu0 %1909
      %1911 = vrot.lane.b32.xlu0 %v1878, 64
      %v1912 = vpop.permute.xlu0 %1911
      %1913 = vrot.lane.b32.xlu0 %v1881, 64
      %v1914 = vpop.permute.xlu0 %1913
      %1915 = vrot.lane.b32.xlu0 %v1884, 64
      %v1916 = vpop.permute.xlu0 %1915
      %vm1917 = vcmask 64512
      %v1919 = vsel %vm1917, %v475, %v733
      %v1921 = vsel %vm1917, %v476, %v735
      %v1923 = vsel %vm1917, %v477, %v737
      %v1925 = vsel %vm1917, %v478, %v739
      %v1927 = vsel %vm1917, %v479, %v741
      %v1929 = vsel %vm1917, %v480, %v743
      %v1931 = vsel %vm1917, %v481, %v745
      %v1933 = vsel %vm1917, %v482, %v747
      %v1935 = vsel %vm1917, %v483, %v749
      %v1937 = vsel %vm1917, %v484, %v751
      %v1939 = vsel %vm1917, %v485, %v753
      %v1941 = vsel %vm1917, %v486, %v755
      %v1943 = vsel %vm1917, %v487, %v757
      %v1945 = vsel %vm1917, %v488, %v759
      %v1947 = vsel %vm1917, %v489, %v761
      %v1949 = vsel %vm1917, %v490, %v763
      %vm1950 = vcmask 130048
      %v1952 = vsel %vm1950, %v1919, %v862
      %v1954 = vsel %vm1950, %v1921, %v864
      %v1956 = vsel %vm1950, %v1923, %v866
      %v1958 = vsel %vm1950, %v1925, %v868
      %v1960 = vsel %vm1950, %v1927, %v870
      %v1962 = vsel %vm1950, %v1929, %v872
      %v1964 = vsel %vm1950, %v1931, %v874
      %v1966 = vsel %vm1950, %v1933, %v876
      %v1968 = vsel %vm1950, %v1935, %v878
      %v1970 = vsel %vm1950, %v1937, %v880
      %v1972 = vsel %vm1950, %v1939, %v882
      %v1974 = vsel %vm1950, %v1941, %v884
      %v1976 = vsel %vm1950, %v1943, %v886
      %v1978 = vsel %vm1950, %v1945, %v888
      %v1980 = vsel %vm1950, %v1947, %v890
      %v1982 = vsel %vm1950, %v1949, %v892
      %vm1983 = vcmask 195584
      %v1985 = vsel %vm1983, %v1952, %v974
      %v1987 = vsel %vm1983, %v1954, %v976
      %v1989 = vsel %vm1983, %v1956, %v978
      %v1991 = vsel %vm1983, %v1958, %v980
      %v1993 = vsel %vm1983, %v1960, %v982
      %v1995 = vsel %vm1983, %v1962, %v984
      %v1997 = vsel %vm1983, %v1964, %v986
      %v1999 = vsel %vm1983, %v1966, %v988
      %v2001 = vsel %vm1983, %v1968, %v990
      %v2003 = vsel %vm1983, %v1970, %v992
      %v2005 = vsel %vm1983, %v1972, %v994
      %v2007 = vsel %vm1983, %v1974, %v996
      %v2009 = vsel %vm1983, %v1976, %v998
      %v2011 = vsel %vm1983, %v1978, %v1000
      %v2013 = vsel %vm1983, %v1980, %v1002
      %v2015 = vsel %vm1983, %v1982, %v1004
      %vm2016 = vcmask 261120
      %v2018 = vsel %vm2016, %v1985, %v1246
      %v2020 = vsel %vm2016, %v1987, %v1248
      %v2022 = vsel %vm2016, %v1989, %v1250
      %v2024 = vsel %vm2016, %v1991, %v1252
      %v2026 = vsel %vm2016, %v1993, %v1254
      %v2028 = vsel %vm2016, %v1995, %v1256
      %v2030 = vsel %vm2016, %v1997, %v1258
      %v2032 = vsel %vm2016, %v1999, %v1260
      %v2034 = vsel %vm2016, %v2001, %v1262
      %v2036 = vsel %vm2016, %v2003, %v1264
      %v2038 = vsel %vm2016, %v2005, %v1266
      %v2040 = vsel %vm2016, %v2007, %v1268
      %v2042 = vsel %vm2016, %v2009, %v1270
      %v2044 = vsel %vm2016, %v2011, %v1272
      %v2046 = vsel %vm2016, %v2013, %v1274
      %v2048 = vsel %vm2016, %v2015, %v1276
      %vm2049 = vcmask 326656
      %v2051 = vsel %vm2049, %v2018, %v1374
      %v2053 = vsel %vm2049, %v2020, %v1376
      %v2055 = vsel %vm2049, %v2022, %v1378
      %v2057 = vsel %vm2049, %v2024, %v1380
      %v2059 = vsel %vm2049, %v2026, %v1382
      %v2061 = vsel %vm2049, %v2028, %v1384
      %v2063 = vsel %vm2049, %v2030, %v1386
      %v2065 = vsel %vm2049, %v2032, %v1388
      %v2067 = vsel %vm2049, %v2034, %v1390
      %v2069 = vsel %vm2049, %v2036, %v1392
      %v2071 = vsel %vm2049, %v2038, %v1394
      %v2073 = vsel %vm2049, %v2040, %v1396
      %v2075 = vsel %vm2049, %v2042, %v1398
      %v2077 = vsel %vm2049, %v2044, %v1400
      %v2079 = vsel %vm2049, %v2046, %v1402
      %v2081 = vsel %vm2049, %v2048, %v1404
      %vm2082 = vcmask 392192
      %v2084 = vsel %vm2082, %v2051, %v1486
      %v2086 = vsel %vm2082, %v2053, %v1488
      %v2088 = vsel %vm2082, %v2055, %v1490
      %v2090 = vsel %vm2082, %v2057, %v1492
      %v2092 = vsel %vm2082, %v2059, %v1494
      %v2094 = vsel %vm2082, %v2061, %v1496
      %v2096 = vsel %vm2082, %v2063, %v1498
      %v2098 = vsel %vm2082, %v2065, %v1500
      %v2100 = vsel %vm2082, %v2067, %v1502
      %v2102 = vsel %vm2082, %v2069, %v1504
      %v2104 = vsel %vm2082, %v2071, %v1506
      %v2106 = vsel %vm2082, %v2073, %v1508
      %v2108 = vsel %vm2082, %v2075, %v1510
      %v2110 = vsel %vm2082, %v2077, %v1512
      %v2112 = vsel %vm2082, %v2079, %v1514
      %v2114 = vsel %vm2082, %v2081, %v1516
      %vm2115 = vcmask 457728
      %v2117 = vsel %vm2115, %v2084, %v1758
      %v2119 = vsel %vm2115, %v2086, %v1760
      %v2121 = vsel %vm2115, %v2088, %v1762
      %v2123 = vsel %vm2115, %v2090, %v1764
      %v2125 = vsel %vm2115, %v2092, %v1766
      %v2127 = vsel %vm2115, %v2094, %v1768
      %v2129 = vsel %vm2115, %v2096, %v1770
      %v2131 = vsel %vm2115, %v2098, %v1772
      %v2133 = vsel %vm2115, %v2100, %v1774
      %v2135 = vsel %vm2115, %v2102, %v1776
      %v2137 = vsel %vm2115, %v2104, %v1778
      %v2139 = vsel %vm2115, %v2106, %v1780
      %v2141 = vsel %vm2115, %v2108, %v1782
      %v2143 = vsel %vm2115, %v2110, %v1784
      %v2145 = vsel %vm2115, %v2112, %v1786
      %v2147 = vsel %vm2115, %v2114, %v1788
      %vm2148 = vcmask 523264
      %v2150 = vsel %vm2148, %v2117, %v1886
      %v2152 = vsel %vm2148, %v2119, %v1888
      %v2154 = vsel %vm2148, %v2121, %v1890
      %v2156 = vsel %vm2148, %v2123, %v1892
      %v2158 = vsel %vm2148, %v2125, %v1894
      %v2160 = vsel %vm2148, %v2127, %v1896
      %v2162 = vsel %vm2148, %v2129, %v1898
      %v2164 = vsel %vm2148, %v2131, %v1900
      %v2166 = vsel %vm2148, %v2133, %v1902
      %v2168 = vsel %vm2148, %v2135, %v1904
      %v2170 = vsel %vm2148, %v2137, %v1906
      %v2172 = vsel %vm2148, %v2139, %v1908
      %v2174 = vsel %vm2148, %v2141, %v1910
      %v2176 = vsel %vm2148, %v2143, %v1912
      %v2178 = vsel %vm2148, %v2145, %v1914
      %v2180 = vsel %vm2148, %v2147, %v1916
      %v2181 = vld [vmem:[%s1] sm:$0xf]
      %v2182 = vld [vmem:[%s1 + $0x4] sm:$0xf]
      %v2183 = vld [vmem:[%s1 + $0x8] sm:$0xf]
      %v2184 = vld [vmem:[%s1 + $0xc] sm:$0xf]
      %v2185 = vld [vmem:[%s1 + $0x10] sm:$0xf]
      %v2186 = vld [vmem:[%s1 + $0x14] sm:$0xf]
      %v2187 = vld [vmem:[%s1 + $0x18] sm:$0xf]
      %v2188 = vld [vmem:[%s1 + $0x1c] sm:$0xf]
      %v2189 = vld [vmem:[%s1 + $0x20] sm:$0xf]
      %v2199 = vunpack.c.l.b16 %v2181
      %v2200 = vunpack.c.l.b16 %v2182
      %v2201 = vunpack.c.l.b16 %v2183
      %v2202 = vunpack.c.l.b16 %v2184
      %v2203 = vunpack.c.l.b16 %v2185
      %v2204 = vunpack.c.l.b16 %v2186
      %v2205 = vunpack.c.l.b16 %v2187
      %v2206 = vunpack.c.l.b16 %v2188
      %v2207 = vunpack.c.l.b16 %v2189
      %v2208 = vpack.c.b16 %v2200, %v2199
      %v2209 = vpack.c.b16 %v2202, %v2201
      %v2210 = vpack.c.b16 %v2204, %v2203
      %v2211 = vpack.c.b16 %v2206, %v2205
      %v2212 = vpack.c.b16 %v2207, %v2207
      %vm2217 = vcmask 588800
      %v2218 = vsel %vm2217, %v2150, 0
      %v2220 = vsel %vm2217, %v2152, 0
      %v2222 = vsel %vm2217, %v2154, 0
      %v2224 = vsel %vm2217, %v2156, 0
      %v2226 = vsel %vm2217, %v2158, 0
      %v2228 = vsel %vm2217, %v2160, 0
      %v2230 = vsel %vm2217, %v2162, 0
      %v2232 = vsel %vm2217, %v2164, 0
      %v2234 = vsel %vm2217, %v2166, 0
      %v2236 = vsel %vm2217, %v2168, 0
      %v2238 = vsel %vm2217, %v2170, 0
      %v2240 = vsel %vm2217, %v2172, 0
      %v2242 = vsel %vm2217, %v2174, 0
      %v2244 = vsel %vm2217, %v2176, 0
      %v2246 = vsel %vm2217, %v2178, 0
      %v2248 = vsel %vm2217, %v2180, 0
      %vm2250 = vcmask 1043456
      %v2252 = vsel %vm2250, %v2212, 0
      %2254 = vmatpush.bf16.msra.mxu0 0
      %2255 = vmatpush.bf16.msra.mxu0 0
      %2256 = vmatpush.bf16.msra.mxu0 0
      %2257 = vmatpush.bf16.msra.mxu0 %v2252
      %2258 = vmatpush.bf16.msra.mxu0 %v2211
      %2259 = vmatpush.bf16.msra.mxu0 %v2210
      %2260 = vmatpush.bf16.msra.mxu0 %v2209
      %2261 = vmatpush.bf16.msra.mxu0 %v2208
      %2262 = vmatmul.bf16.gmra.mxu0 %v2218
      %v2263 = vpop.f32.mrf.mxu0
      %v2264 = vadd.f32 0.0, %v2263
      %v2265 = vpop.f32.mrf.mxu0
      %v2266 = vadd.f32 0.0, %v2265
      %2267 = vmatmul.bf16.gmra.mxu0 %v2220
      %v2268 = vpop.f32.mrf.mxu0
      %v2269 = vadd.f32 0.0, %v2268
      %v2270 = vpop.f32.mrf.mxu0
      %v2271 = vadd.f32 0.0, %v2270
      %2272 = vmatmul.bf16.gmra.mxu0 %v2222
      %v2273 = vpop.f32.mrf.mxu0
      %v2274 = vadd.f32 0.0, %v2273
      %v2275 = vpop.f32.mrf.mxu0
      %v2276 = vadd.f32 0.0, %v2275
      %2277 = vmatmul.bf16.gmra.mxu0 %v2224
      %v2278 = vpop.f32.mrf.mxu0
      %v2279 = vadd.f32 0.0, %v2278
      %v2280 = vpop.f32.mrf.mxu0
      %v2281 = vadd.f32 0.0, %v2280
      %2282 = vmatmul.bf16.gmra.mxu0 %v2226
      %v2283 = vpop.f32.mrf.mxu0
      %v2284 = vadd.f32 0.0, %v2283
      %v2285 = vpop.f32.mrf.mxu0
      %v2286 = vadd.f32 0.0, %v2285
      %2287 = vmatmul.bf16.gmra.mxu0 %v2228
      %v2288 = vpop.f32.mrf.mxu0
      %v2289 = vadd.f32 0.0, %v2288
      %v2290 = vpop.f32.mrf.mxu0
      %v2291 = vadd.f32 0.0, %v2290
      %2292 = vmatmul.bf16.gmra.mxu0 %v2230
      %v2293 = vpop.f32.mrf.mxu0
      %v2294 = vadd.f32 0.0, %v2293
      %v2295 = vpop.f32.mrf.mxu0
      %v2296 = vadd.f32 0.0, %v2295
      %2297 = vmatmul.bf16.gmra.mxu0 %v2232
      %v2298 = vpop.f32.mrf.mxu0
      %v2299 = vadd.f32 0.0, %v2298
      %v2300 = vpop.f32.mrf.mxu0
      %v2301 = vadd.f32 0.0, %v2300
      %2302 = vmatmul.bf16.gmra.mxu0 %v2234
      %v2303 = vpop.f32.mrf.mxu0
      %v2304 = vadd.f32 0.0, %v2303
      %v2305 = vpop.f32.mrf.mxu0
      %v2306 = vadd.f32 0.0, %v2305
      %2307 = vmatmul.bf16.gmra.mxu0 %v2236
      %v2308 = vpop.f32.mrf.mxu0
      %v2309 = vadd.f32 0.0, %v2308
      %v2310 = vpop.f32.mrf.mxu0
      %v2311 = vadd.f32 0.0, %v2310
      %2312 = vmatmul.bf16.gmra.mxu0 %v2238
      %v2313 = vpop.f32.mrf.mxu0
      %v2314 = vadd.f32 0.0, %v2313
      %v2315 = vpop.f32.mrf.mxu0
      %v2316 = vadd.f32 0.0, %v2315
      %2317 = vmatmul.bf16.gmra.mxu0 %v2240
      %v2318 = vpop.f32.mrf.mxu0
      %v2319 = vadd.f32 0.0, %v2318
      %v2320 = vpop.f32.mrf.mxu0
      %v2321 = vadd.f32 0.0, %v2320
      %2322 = vmatmul.bf16.gmra.mxu0 %v2242
      %v2323 = vpop.f32.mrf.mxu0
      %v2324 = vadd.f32 0.0, %v2323
      %v2325 = vpop.f32.mrf.mxu0
      %v2326 = vadd.f32 0.0, %v2325
      %2327 = vmatmul.bf16.gmra.mxu0 %v2244
      %v2328 = vpop.f32.mrf.mxu0
      %v2329 = vadd.f32 0.0, %v2328
      %v2330 = vpop.f32.mrf.mxu0
      %v2331 = vadd.f32 0.0, %v2330
      %2332 = vmatmul.bf16.gmra.mxu0 %v2246
      %v2333 = vpop.f32.mrf.mxu0
      %v2334 = vadd.f32 0.0, %v2333
      %v2335 = vpop.f32.mrf.mxu0
      %v2336 = vadd.f32 0.0, %v2335
      %2337 = vmatmul.bf16.gmra.mxu0 %v2248
      %v2338 = vpop.f32.mrf.mxu0
      %v2339 = vadd.f32 0.0, %v2338
      %v2340 = vpop.f32.mrf.mxu0
      %v2341 = vadd.f32 0.0, %v2340
      %2342 = vdwg.mxu0
      %v2343 = vpack.c.bf16 %v2264, %v2264
      %v2344 = vpack.c.bf16 %v2266, %v2266
      %v2345 = vpack.c.bf16 %v2269, %v2269
      %v2346 = vpack.c.bf16 %v2271, %v2271
      %v2347 = vpack.c.bf16 %v2274, %v2274
      %v2348 = vpack.c.bf16 %v2276, %v2276
      %v2349 = vpack.c.bf16 %v2279, %v2279
      %v2350 = vpack.c.bf16 %v2281, %v2281
      %v2351 = vpack.c.bf16 %v2284, %v2284
      %v2352 = vpack.c.bf16 %v2286, %v2286
      %v2353 = vpack.c.bf16 %v2289, %v2289
      %v2354 = vpack.c.bf16 %v2291, %v2291
      %v2355 = vpack.c.bf16 %v2294, %v2294
      %v2356 = vpack.c.bf16 %v2296, %v2296
      %v2357 = vpack.c.bf16 %v2299, %v2299
      %v2358 = vpack.c.bf16 %v2301, %v2301
      %v2359 = vpack.c.bf16 %v2304, %v2304
      %v2360 = vpack.c.bf16 %v2306, %v2306
      %v2361 = vpack.c.bf16 %v2309, %v2309
      %v2362 = vpack.c.bf16 %v2311, %v2311
      %v2363 = vpack.c.bf16 %v2314, %v2314
      %v2364 = vpack.c.bf16 %v2316, %v2316
      %v2365 = vpack.c.bf16 %v2319, %v2319
      %v2366 = vpack.c.bf16 %v2321, %v2321
      %v2367 = vpack.c.bf16 %v2324, %v2324
      %v2368 = vpack.c.bf16 %v2326, %v2326
      %v2369 = vpack.c.bf16 %v2329, %v2329
      %v2370 = vpack.c.bf16 %v2331, %v2331
      %v2371 = vpack.c.bf16 %v2334, %v2334
      %v2372 = vpack.c.bf16 %v2336, %v2336
      %v2373 = vpack.c.bf16 %v2339, %v2339
      %v2374 = vpack.c.bf16 %v2341, %v2341
      %vm2375 = vcmask 27648
      %2376 = vst.msk [vmem:[%s208] sm:$0xf] %vm2375, %v2343
      %2377 = vst.msk [vmem:[%s208 + $0x4] sm:$0xf] %vm2375, %v2344
      %2378 = vst.msk [vmem:[%s208 + $0x8] sm:$0xf] %vm2375, %v2345
      %2379 = vst.msk [vmem:[%s208 + $0xc] sm:$0xf] %vm2375, %v2346
      %2380 = vst.msk [vmem:[%s208 + $0x10] sm:$0xf] %vm2375, %v2347
      %2381 = vst.msk [vmem:[%s208 + $0x14] sm:$0xf] %vm2375, %v2348
      %2382 = vst.msk [vmem:[%s208 + $0x18] sm:$0xf] %vm2375, %v2349
      %2383 = vst.msk [vmem:[%s208 + $0x1c] sm:$0xf] %vm2375, %v2350
      %2384 = vst.msk [vmem:[%s208 + $0x20] sm:$0xf] %vm2375, %v2351
      %2385 = vst.msk [vmem:[%s208 + $0x24] sm:$0xf] %vm2375, %v2352
      %2386 = vst.msk [vmem:[%s208 + $0x28] sm:$0xf] %vm2375, %v2353
      %2387 = vst.msk [vmem:[%s208 + $0x2c] sm:$0xf] %vm2375, %v2354
      %2388 = vst.msk [vmem:[%s208 + $0x30] sm:$0xf] %vm2375, %v2355
      %2389 = vst.msk [vmem:[%s208 + $0x34] sm:$0xf] %vm2375, %v2356
      %2390 = vst.msk [vmem:[%s208 + $0x38] sm:$0xf] %vm2375, %v2357
      %2391 = vst.msk [vmem:[%s208 + $0x3c] sm:$0xf] %vm2375, %v2358
      %2392 = vst.msk [vmem:[%s208 + $0x40] sm:$0xf] %vm2375, %v2359
      %2393 = vst.msk [vmem:[%s208 + $0x44] sm:$0xf] %vm2375, %v2360
      %2394 = vst.msk [vmem:[%s208 + $0x48] sm:$0xf] %vm2375, %v2361
      %2395 = vst.msk [vmem:[%s208 + $0x4c] sm:$0xf] %vm2375, %v2362
      %2396 = vst.msk [vmem:[%s208 + $0x50] sm:$0xf] %vm2375, %v2363
      %2397 = vst.msk [vmem:[%s208 + $0x54] sm:$0xf] %vm2375, %v2364
      %2398 = vst.msk [vmem:[%s208 + $0x58] sm:$0xf] %vm2375, %v2365
      %2399 = vst.msk [vmem:[%s208 + $0x5c] sm:$0xf] %vm2375, %v2366
      %2400 = vst.msk [vmem:[%s208 + $0x60] sm:$0xf] %vm2375, %v2367
      %2401 = vst.msk [vmem:[%s208 + $0x64] sm:$0xf] %vm2375, %v2368
      %2402 = vst.msk [vmem:[%s208 + $0x68] sm:$0xf] %vm2375, %v2369
      %2403 = vst.msk [vmem:[%s208 + $0x6c] sm:$0xf] %vm2375, %v2370
      %2404 = vst.msk [vmem:[%s208 + $0x70] sm:$0xf] %vm2375, %v2371
      %2405 = vst.msk [vmem:[%s208 + $0x74] sm:$0xf] %vm2375, %v2372
      %2406 = vst.msk [vmem:[%s208 + $0x78] sm:$0xf] %vm2375, %v2373
      %2407 = vst.msk [vmem:[%s208 + $0x7c] sm:$0xf] %vm2375, %v2374
      %vm2408 = vcmask 31744
      %v2409 = vsel %vm2408, %v2264, 0.0
      %v2410 = vsel %vm2408, %v2266, 0.0
      %v2411 = vadd.f32 %v2409, %v2410
      %v2412 = vsel %vm2408, %v2269, 0.0
      %v2413 = vadd.f32 %v2411, %v2412
      %v2414 = vsel %vm2408, %v2271, 0.0
      %v2415 = vadd.f32 %v2413, %v2414
      %v2416 = vsel %vm2408, %v2274, 0.0
      %v2417 = vadd.f32 %v2415, %v2416
      %v2418 = vsel %vm2408, %v2276, 0.0
      %v2419 = vadd.f32 %v2417, %v2418
      %v2420 = vsel %vm2408, %v2279, 0.0
      %v2421 = vadd.f32 %v2419, %v2420
      %v2422 = vsel %vm2408, %v2281, 0.0
      %v2423 = vadd.f32 %v2421, %v2422
      %v2424 = vsel %vm2408, %v2284, 0.0
      %v2425 = vadd.f32 %v2423, %v2424
      %v2426 = vsel %vm2408, %v2286, 0.0
      %v2427 = vadd.f32 %v2425, %v2426
      %v2428 = vsel %vm2408, %v2289, 0.0
      %v2429 = vadd.f32 %v2427, %v2428
      %v2430 = vsel %vm2408, %v2291, 0.0
      %v2431 = vadd.f32 %v2429, %v2430
      %v2432 = vsel %vm2408, %v2294, 0.0
      %v2433 = vadd.f32 %v2431, %v2432
      %v2434 = vsel %vm2408, %v2296, 0.0
      %v2435 = vadd.f32 %v2433, %v2434
      %v2436 = vsel %vm2408, %v2299, 0.0
      %v2437 = vadd.f32 %v2435, %v2436
      %v2438 = vsel %vm2408, %v2301, 0.0
      %v2439 = vadd.f32 %v2437, %v2438
      %v2440 = vsel %vm2408, %v2304, 0.0
      %v2441 = vadd.f32 %v2439, %v2440
      %v2442 = vsel %vm2408, %v2306, 0.0
      %v2443 = vadd.f32 %v2441, %v2442
      %v2444 = vsel %vm2408, %v2309, 0.0
      %v2445 = vadd.f32 %v2443, %v2444
      %v2446 = vsel %vm2408, %v2311, 0.0
      %v2447 = vadd.f32 %v2445, %v2446
      %v2448 = vsel %vm2408, %v2314, 0.0
      %v2449 = vadd.f32 %v2447, %v2448
      %v2450 = vsel %vm2408, %v2316, 0.0
      %v2451 = vadd.f32 %v2449, %v2450
      %v2452 = vsel %vm2408, %v2319, 0.0
      %v2453 = vadd.f32 %v2451, %v2452
      %v2454 = vsel %vm2408, %v2321, 0.0
      %v2455 = vadd.f32 %v2453, %v2454
      %v2456 = vsel %vm2408, %v2324, 0.0
      %v2457 = vadd.f32 %v2455, %v2456
      %v2458 = vsel %vm2408, %v2326, 0.0
      %v2459 = vadd.f32 %v2457, %v2458
      %v2460 = vsel %vm2408, %v2329, 0.0
      %v2461 = vadd.f32 %v2459, %v2460
      %v2462 = vsel %vm2408, %v2331, 0.0
      %v2463 = vadd.f32 %v2461, %v2462
      %v2464 = vsel %vm2408, %v2334, 0.0
      %v2465 = vadd.f32 %v2463, %v2464
      %v2466 = vsel %vm2408, %v2336, 0.0
      %v2467 = vadd.f32 %v2465, %v2466
      %v2468 = vsel %vm2408, %v2339, 0.0
      %v2469 = vadd.f32 %v2467, %v2468
      %v2470 = vsel %vm2408, %v2341, 0.0
      %v2471 = vadd.f32 %v2469, %v2470
      %v2472 = vrot.slane %v2471, 4
      %v2473 = vadd.f32 %v2471, %v2472
      %v2474 = vrot.slane %v2473, 2
      %v2475 = vadd.f32 %v2473, %v2474
      %v2476 = vrot.slane %v2475, 1
      %v2477 = vadd.f32 %v2475, %v2476
      %vm2478 = vcmask 24576
      %2479 = vst.msk [vmem:[%s212] sm:$0x1] %vm2478, %v2477
      %v2480 = vmul.f32 %v2264, %v2264
      %v2481 = vmul.f32 %v2266, %v2266
      %v2482 = vmul.f32 %v2269, %v2269
      %v2483 = vmul.f32 %v2271, %v2271
      %v2484 = vmul.f32 %v2274, %v2274
      %v2485 = vmul.f32 %v2276, %v2276
      %v2486 = vmul.f32 %v2279, %v2279
      %v2487 = vmul.f32 %v2281, %v2281
      %v2488 = vmul.f32 %v2284, %v2284
      %v2489 = vmul.f32 %v2286, %v2286
      %v2490 = vmul.f32 %v2289, %v2289
      %v2491 = vmul.f32 %v2291, %v2291
      %v2492 = vmul.f32 %v2294, %v2294
      %v2493 = vmul.f32 %v2296, %v2296
      %v2494 = vmul.f32 %v2299, %v2299
      %v2495 = vmul.f32 %v2301, %v2301
      %v2496 = vmul.f32 %v2304, %v2304
      %v2497 = vmul.f32 %v2306, %v2306
      %v2498 = vmul.f32 %v2309, %v2309
      %v2499 = vmul.f32 %v2311, %v2311
      %v2500 = vmul.f32 %v2314, %v2314
      %v2501 = vmul.f32 %v2316, %v2316
      %v2502 = vmul.f32 %v2319, %v2319
      %v2503 = vmul.f32 %v2321, %v2321
      %v2504 = vmul.f32 %v2324, %v2324
      %v2505 = vmul.f32 %v2326, %v2326
      %v2506 = vmul.f32 %v2329, %v2329
      %v2507 = vmul.f32 %v2331, %v2331
      %v2508 = vmul.f32 %v2334, %v2334
      %v2509 = vmul.f32 %v2336, %v2336
      %v2510 = vmul.f32 %v2339, %v2339
      %v2511 = vmul.f32 %v2341, %v2341
      %v2512 = vsel %vm2408, %v2480, 0.0
      %v2513 = vsel %vm2408, %v2481, 0.0
      %v2514 = vadd.f32 %v2512, %v2513
      %v2515 = vsel %vm2408, %v2482, 0.0
      %v2516 = vadd.f32 %v2514, %v2515
      %v2517 = vsel %vm2408, %v2483, 0.0
      %v2518 = vadd.f32 %v2516, %v2517
      %v2519 = vsel %vm2408, %v2484, 0.0
      %v2520 = vadd.f32 %v2518, %v2519
      %v2521 = vsel %vm2408, %v2485, 0.0
      %v2522 = vadd.f32 %v2520, %v2521
      %v2523 = vsel %vm2408, %v2486, 0.0
      %v2524 = vadd.f32 %v2522, %v2523
      %v2525 = vsel %vm2408, %v2487, 0.0
      %v2526 = vadd.f32 %v2524, %v2525
      %v2527 = vsel %vm2408, %v2488, 0.0
      %v2528 = vadd.f32 %v2526, %v2527
      %v2529 = vsel %vm2408, %v2489, 0.0
      %v2530 = vadd.f32 %v2528, %v2529
      %v2531 = vsel %vm2408, %v2490, 0.0
      %v2532 = vadd.f32 %v2530, %v2531
      %v2533 = vsel %vm2408, %v2491, 0.0
      %v2534 = vadd.f32 %v2532, %v2533
      %v2535 = vsel %vm2408, %v2492, 0.0
      %v2536 = vadd.f32 %v2534, %v2535
      %v2537 = vsel %vm2408, %v2493, 0.0
      %v2538 = vadd.f32 %v2536, %v2537
      %v2539 = vsel %vm2408, %v2494, 0.0
      %v2540 = vadd.f32 %v2538, %v2539
      %v2541 = vsel %vm2408, %v2495, 0.0
      %v2542 = vadd.f32 %v2540, %v2541
      %v2543 = vsel %vm2408, %v2496, 0.0
      %v2544 = vadd.f32 %v2542, %v2543
      %v2545 = vsel %vm2408, %v2497, 0.0
      %v2546 = vadd.f32 %v2544, %v2545
      %v2547 = vsel %vm2408, %v2498, 0.0
      %v2548 = vadd.f32 %v2546, %v2547
      %v2549 = vsel %vm2408, %v2499, 0.0
      %v2550 = vadd.f32 %v2548, %v2549
      %v2551 = vsel %vm2408, %v2500, 0.0
      %v2552 = vadd.f32 %v2550, %v2551
      %v2553 = vsel %vm2408, %v2501, 0.0
      %v2554 = vadd.f32 %v2552, %v2553
      %v2555 = vsel %vm2408, %v2502, 0.0
      %v2556 = vadd.f32 %v2554, %v2555
      %v2557 = vsel %vm2408, %v2503, 0.0
      %v2558 = vadd.f32 %v2556, %v2557
      %v2559 = vsel %vm2408, %v2504, 0.0
      %v2560 = vadd.f32 %v2558, %v2559
      %v2561 = vsel %vm2408, %v2505, 0.0
      %v2562 = vadd.f32 %v2560, %v2561
      %v2563 = vsel %vm2408, %v2506, 0.0
      %v2564 = vadd.f32 %v2562, %v2563
      %v2565 = vsel %vm2408, %v2507, 0.0
      %v2566 = vadd.f32 %v2564, %v2565
      %v2567 = vsel %vm2408, %v2508, 0.0
      %v2568 = vadd.f32 %v2566, %v2567
      %v2569 = vsel %vm2408, %v2509, 0.0
      %v2570 = vadd.f32 %v2568, %v2569
      %v2571 = vsel %vm2408, %v2510, 0.0
      %v2572 = vadd.f32 %v2570, %v2571
      %v2573 = vsel %vm2408, %v2511, 0.0
      %v2574 = vadd.f32 %v2572, %v2573
      %v2575 = vrot.slane %v2574, 4
      %v2576 = vadd.f32 %v2574, %v2575
      %v2577 = vrot.slane %v2576, 2
      %v2578 = vadd.f32 %v2576, %v2577
      %v2579 = vrot.slane %v2578, 1
      %v2580 = vadd.f32 %v2578, %v2579
      %2581 = vst.msk [vmem:[%s215] sm:$0x1] %vm2478, %v2580
      %s2582 = smul.u32 32, %s16
      %p2583 = scmp.lt.s32.totalorder %s2582, 63
      %s2584 = scalar_select %p2583, %s2582, 63
      %s2585 = smul.addr %s2584, 4
      %s2586 = scalar_lea.vmem %s2, %s2585
      %p2587 = scmp.lt.s32.totalorder %s16, 1
      %s2588 = scalar_select %p2587, %s16, 1
      %s2589 = scalar_lea.vmem %s3, %s2588
      %p2590 = scmp.lt.s32.totalorder %s16, 1
      %s2591 = scalar_select %p2590, %s16, 1
      %s2592 = scalar_lea.vmem %s4, %s2591
      // Predicated region
      $region29: #{up_block_forward.6} parent=27 // pred_check
        %p2593 = pneg %p81
      $region30: #{up_block_forward.6} parent=27 // pred_check_branch
        %2595 = sbr.rel (%p2593) target = $region32
      $region31: #{up_block_forward.6} parent=27 // pred_region
        %s2596 = smul.u32 32, %s16
      $region32: #{up_block_forward.6} parent=27 // pred_fallthru
        _
      // Predicated region
      $region33: #{up_block_forward.6} parent=27 // pred_check
        %p2597 = pneg %p107
      $region34: #{up_block_forward.6} parent=27 // pred_check_branch
        %2599 = sbr.rel (%p2597) target = $region36
      $region35: #{up_block_forward.6} parent=27 // pred_region
        _
      $region36: #{up_block_forward.6} parent=27 // pred_fallthru
        _
      // Predicated region
      $region37: #{up_block_forward.6} parent=27 // pred_check
        %p2600 = pneg %p133
      $region38: #{up_block_forward.6} parent=27 // pred_check_branch
        %2602 = sbr.rel (%p2600) target = $region40
      $region39: #{up_block_forward.6} parent=27 // pred_region
        _
      $region40: #{up_block_forward.6} parent=27 // pred_fallthru
        _
    $region28: #{up_block_forward.6} parent=5 // pred_fallthru
      _
    %p2603 = scmp.le.s32.totalorder 2, %s11
    // Predicated region
    $region41: #{up_block_forward.6} parent=5 // pred_check
      %p2604 = pneg %p2603
    $region42: #{up_block_forward.6} parent=5 // pred_check_branch
      %2606 = sbr.rel (%p2604) target = $region44
    $region43: #{up_block_forward.6} parent=5 // pred_region
      %s2607 = ssub.s32 %s11, 2
      // Predicated region
      $region45: #{up_block_forward.6} parent=43 // pred_check
        %p2608 = pneg %p87
      $region46: #{up_block_forward.6} parent=43 // pred_check_branch
        %2610 = sbr.rel (%p2608) target = $region48
      $region47: #{up_block_forward.6} parent=43 // pred_region
        %s2611 = smul.u32 32, %s17
        %p2612 = scmp.lt.s32.totalorder %s2611, 63
        %s2613 = scalar_select %p2612, %s2611, 63
        %s2614 = smul.addr %s2613, 4
        %s2615 = scalar_lea.vmem %s2, %s2614
      $region48: #{up_block_forward.6} parent=43 // pred_fallthru
        _
      // Predicated region
      $region49: #{up_block_forward.6} parent=43 // pred_check
        %p2616 = pneg %p113
      $region50: #{up_block_forward.6} parent=43 // pred_check_branch
        %2618 = sbr.rel (%p2616) target = $region52
      $region51: #{up_block_forward.6} parent=43 // pred_region
        %p2619 = scmp.lt.s32.totalorder %s17, 1
        %s2620 = scalar_select %p2619, %s17, 1
        %s2621 = scalar_lea.vmem %s3, %s2620
      $region52: #{up_block_forward.6} parent=43 // pred_fallthru
        _
      // Predicated region
      $region53: #{up_block_forward.6} parent=43 // pred_check
        %p2622 = pneg %p139
      $region54: #{up_block_forward.6} parent=43 // pred_check_branch
        %2624 = sbr.rel (%p2622) target = $region56
      $region55: #{up_block_forward.6} parent=43 // pred_region
        %p2625 = scmp.lt.s32.totalorder %s17, 1
        %s2626 = scalar_select %p2625, %s17, 1
        %s2627 = scalar_lea.vmem %s4, %s2626
      $region56: #{up_block_forward.6} parent=43 // pred_fallthru
        _
    $region44: #{up_block_forward.6} parent=5 // pred_fallthru
      _
  $region6: #{up_block_forward.6} parent=0 // loop_footer
    %s15 = sadd.s32 1, %s11
  $region7: #{up_block_forward.6} parent=0 // loop_footer_branch
    %10 = sbr.rel target = $region3
  $region8: #{up_block_forward.6} parent=0 // loop_exit
    _

// kernel: up_block_forward.8
$region0: #{up_block_forward.8}
  #allocation0 [shape = 'u32[]', space=smem, size = 0x4, offset = 0x4, fixed_abs, tag = 'smem constant byte address 0x4 - core index']
  #allocation1 [shape = 'u32[72,128]{1,0:T(1,128)}', space=vmem, size = 0x9000, scoped, tag = 'internal scratch']
  %s0 = inlined_call_operand.vmem [shape: bf16[2,18,18,4], index: 0, kind: input, shape index: {}]
  %s1 = inlined_call_operand.vmem [shape: bf16[36,4], index: 1, kind: input, shape index: {}]
  %s2 = inlined_call_operand.vmem [shape: bf16[512,4], index: 2, kind: output, shape index: {0}]
  %s3 = inlined_call_operand.vmem [shape: f32[2,1,4], index: 3, kind: output, shape index: {1}]
  %s4 = inlined_call_operand.vmem [shape: f32[2,1,4], index: 4, kind: output, shape index: {2}]
  %5 = xla_tuple %s2, %s3, %s4
  %s6 = sld [smem:[#allocation0]]
  $region57: #{up_block_forward.8} parent=0
    _
  %s8 = ssub.s32 1, %s6
  %s9 = scalar_select 0, %s8, %s6
  loop: start=0, step=1, limit=4
  $region2: #{up_block_forward.8} parent=0 // loop_pre_header
    _
  $region3: #{up_block_forward.8} parent=0 // loop_header
    %s11 = sphi 0, %s15
    %p12 = scmp.ge.s32.totalorder %s11, 4
    %s21 = sphi 0, %s23
    %s24 = sphi 0, %s21
    %s25 = sphi 0, %s24
    %s41 = sphi 0, %s25
    %s45 = sphi 0, %s45
    %s47 = sphi 0, %s45
    %s48 = sphi 0, %s47
    %s62 = sphi 0, %s48
    %s68 = sphi 0, %s70
    %s71 = sphi 0, %s68
    %s72 = sphi 0, %s71
    %s88 = sphi 0, %s72
    %s94 = sphi 0, %s96
    %s97 = sphi 0, %s94
    %s98 = sphi 0, %s97
    %s114 = sphi 0, %s98
    %s120 = sphi 0, %s122
    %s123 = sphi 0, %s120
    %s124 = sphi 0, %s123
    %s140 = sphi 0, %s124
  $region4: #{up_block_forward.8} parent=0 // loop_header_branch
    %14 = sbr.rel (%p12) target = $region8
  $region5: #{up_block_forward.8} parent=0 // loop_body
    %s16 = ssub.s32 %s11, 1
    %s17 = ssub.s32 %s11, 2
    %s18 = sadd.s32 %s11, 1
    %s19 = ssub.s32 %s11, %s18
    %p20 = scmp.eq.s32.totalorder %s19, 0
    %s22 = sadd.s32 %s21, 1
    %s23 = scalar_select %p20, %s21, %s22
    %p26 = pneg %p20
    %p27 = scmp.eq.s32.totalorder %s11, 1
    %p28 = por %p26, %p27
    %p29 = scmp.ne.s32.totalorder %s21, %s24
    %p30 = scmp.eq.s32.totalorder %s11, 0
    %p31 = por %p29, %p30
    %p32 = scmp.ne.s32.totalorder %s21, %s24
    %p33 = scmp.eq.s32.totalorder %s16, 1
    %p34 = por %p32, %p33
    %p35 = scmp.ne.s32.totalorder %s24, %s25
    %p36 = scmp.eq.s32.totalorder %s16, 0
    %p37 = por %p35, %p36
    %p38 = scmp.ne.s32.totalorder %s24, %s25
    %p39 = scmp.eq.s32.totalorder %s17, 1
    %p40 = por %p38, %p39
    %p42 = scmp.ne.s32.totalorder %s25, %s41
    %p43 = scmp.eq.s32.totalorder %s17, 0
    %p44 = por %p42, %p43
    %s46 = sadd.s32 %s45, 1
    %p49 = scmp.eq.s32.totalorder %s11, 1
    %p50 = scmp.ne.s32.totalorder %s45, %s47
    %p51 = scmp.eq.s32.totalorder %s11, 0
    %p52 = por %p50, %p51
    %p53 = scmp.ne.s32.totalorder %s45, %s47
    %p54 = scmp.eq.s32.totalorder %s16, 1
    %p55 = por %p53, %p54
    %p56 = scmp.ne.s32.totalorder %s47, %s48
    %p57 = scmp.eq.s32.totalorder %s16, 0
    %p58 = por %p56, %p57
    %p59 = scmp.ne.s32.totalorder %s47, %s48
    %p60 = scmp.eq.s32.totalorder %s17, 1
    %p61 = por %p59, %p60
    %p63 = scmp.ne.s32.totalorder %s48, %s62
    %p64 = scmp.eq.s32.totalorder %s17, 0
    %p65 = por %p63, %p64
    %s66 = ssub.s32 %s11, %s18
    %p67 = scmp.eq.s32.totalorder %s66, 0
    %s69 = sadd.s32 %s68, 1
    %s70 = scalar_select %p67, %s68, %s69
    %p73 = pneg %p67
    %p74 = scmp.eq.s32.totalorder %s11, 1
    %p75 = por %p73, %p74
    %p76 = scmp.ne.s32.totalorder %s68, %s71
    %p77 = scmp.eq.s32.totalorder %s11, 0
    %p78 = por %p76, %p77
    %p79 = scmp.ne.s32.totalorder %s68, %s71
    %p80 = scmp.eq.s32.totalorder %s16, 1
    %p81 = por %p79, %p80
    %p82 = scmp.ne.s32.totalorder %s71, %s72
    %p83 = scmp.eq.s32.totalorder %s16, 0
    %p84 = por %p82, %p83
    %p85 = scmp.ne.s32.totalorder %s71, %s72
    %p86 = scmp.eq.s32.totalorder %s17, 1
    %p87 = por %p85, %p86
    %p89 = scmp.ne.s32.totalorder %s72, %s88
    %p90 = scmp.eq.s32.totalorder %s17, 0
    %p91 = por %p89, %p90
    %s92 = ssub.s32 %s11, %s18
    %p93 = scmp.eq.s32.totalorder %s92, 0
    %s95 = sadd.s32 %s94, 1
    %s96 = scalar_select %p93, %s94, %s95
    %p99 = pneg %p93
    %p100 = scmp.eq.s32.totalorder %s11, 1
    %p101 = por %p99, %p100
    %p102 = scmp.ne.s32.totalorder %s94, %s97
    %p103 = scmp.eq.s32.totalorder %s11, 0
    %p104 = por %p102, %p103
    %p105 = scmp.ne.s32.totalorder %s94, %s97
    %p106 = scmp.eq.s32.totalorder %s16, 1
    %p107 = por %p105, %p106
    %p108 = scmp.ne.s32.totalorder %s97, %s98
    %p109 = scmp.eq.s32.totalorder %s16, 0
    %p110 = por %p108, %p109
    %p111 = scmp.ne.s32.totalorder %s97, %s98
    %p112 = scmp.eq.s32.totalorder %s17, 1
    %p113 = por %p111, %p112
    %p115 = scmp.ne.s32.totalorder %s98, %s114
    %p116 = scmp.eq.s32.totalorder %s17, 0
    %p117 = por %p115, %p116
    %s118 = ssub.s32 %s11, %s18
    %p119 = scmp.eq.s32.totalorder %s118, 0
    %s121 = sadd.s32 %s120, 1
    %s122 = scalar_select %p119, %s120, %s121
    %p125 = pneg %p119
    %p126 = scmp.eq.s32.totalorder %s11, 1
    %p127 = por %p125, %p126
    %p128 = scmp.ne.s32.totalorder %s120, %s123
    %p129 = scmp.eq.s32.totalorder %s11, 0
    %p130 = por %p128, %p129
    %p131 = scmp.ne.s32.totalorder %s120, %s123
    %p132 = scmp.eq.s32.totalorder %s16, 1
    %p133 = por %p131, %p132
    %p134 = scmp.ne.s32.totalorder %s123, %s124
    %p135 = scmp.eq.s32.totalorder %s16, 0
    %p136 = por %p134, %p135
    %p137 = scmp.ne.s32.totalorder %s123, %s124
    %p138 = scmp.eq.s32.totalorder %s17, 1
    %p139 = por %p137, %p138
    %p141 = scmp.ne.s32.totalorder %s124, %s140
    %p142 = scmp.eq.s32.totalorder %s17, 0
    %p143 = por %p141, %p142
    %p144 = scmp.le.s32.totalorder 1, %s11
    %p145 = scmp.lt.s32.totalorder %s11, 3
    %p146 = pnand %p144, %p145
    %p147 = pneg %p146
    // Predicated region
    $region9: #{up_block_forward.8} parent=5 // pred_check
      _
    $region10: #{up_block_forward.8} parent=5 // pred_check_branch
      %149 = sbr.rel (%p146) target = $region12
    $region11: #{up_block_forward.8} parent=5 // pred_region
      %s150 = ssub.s32 %s11, 1
      // Predicated region
      $region13: #{up_block_forward.8} parent=11 // pred_check
        %p151 = pneg %p58
      $region14: #{up_block_forward.8} parent=11 // pred_check_branch
        %153 = sbr.rel (%p151) target = $region16
      $region15: #{up_block_forward.8} parent=11 // pred_region
        _
      $region16: #{up_block_forward.8} parent=11 // pred_fallthru
        _
    $region12: #{up_block_forward.8} parent=5 // pred_fallthru
      _
    %p154 = scmp.lt.s32.totalorder %s11, 2
    // Predicated region
    $region17: #{up_block_forward.8} parent=5 // pred_check
      %p155 = pneg %p154
    $region18: #{up_block_forward.8} parent=5 // pred_check_branch
      %157 = sbr.rel (%p155) target = $region20
    $region19: #{up_block_forward.8} parent=5 // pred_region
      // Predicated region
      $region21: #{up_block_forward.8} parent=19 // pred_check
        %p158 = pneg %p31
      $region22: #{up_block_forward.8} parent=19 // pred_check_branch
        %160 = sbr.rel (%p158) target = $region24
      $region23: #{up_block_forward.8} parent=19 // pred_region
        %p161 = scmp.lt.s32.totalorder %s11, 1
        %s162 = scalar_select %p161, %s11, 1
        %s163 = smul.addr %s162, 54
        %s164 = smul.addr %s163, 4
        %s165 = scalar_lea.vmem %s0, %s164
      $region24: #{up_block_forward.8} parent=19 // pred_fallthru
        _
    $region20: #{up_block_forward.8} parent=5 // pred_fallthru
      _
    %p166 = scmp.le.s32.totalorder 1, %s11
    %p167 = scmp.lt.s32.totalorder %s11, 3
    %p168 = pnand %p166, %p167
    %p169 = pneg %p168
    // Predicated region
    $region25: #{up_block_forward.8} parent=5 // pred_check
      _
    $region26: #{up_block_forward.8} parent=5 // pred_check_branch
      %171 = sbr.rel (%p168) target = $region28
    $region27: #{up_block_forward.8} parent=5 // pred_region
      %s172 = ssub.s32 %s11, 1
      %p173 = scmp.lt.s32.totalorder %s16, 1
      %s174 = scalar_select %p173, %s16, 1
      %s175 = smul.addr %s174, 54
      %s176 = smul.addr %s175, 4
      %s177 = scalar_lea.vmem %s0, %s176
      %p178 = pneg %p37
      %p179 = pneg %p34
      %p180 = pneg %p58
      %p181 = pneg %p55
      %p182 = pneg %p84
      %p183 = pneg %p81
      %s184 = smul.u32 32, %s16
      %p185 = scmp.lt.s32.totalorder %s184, 63
      %s186 = scalar_select %p185, %s184, 63
      %s187 = smul.addr %s186, 4
      %s188 = scalar_lea.vmem %s2, %s187
      %p189 = pneg %p110
      %p190 = pneg %p107
      %p191 = scmp.lt.s32.totalorder %s16, 1
      %s192 = scalar_select %p191, %s16, 1
      %s193 = scalar_lea.vmem %s3, %s192
      %p194 = pneg %p136
      %p195 = pneg %p133
      %p196 = scmp.lt.s32.totalorder %s16, 1
      %s197 = scalar_select %p196, %s16, 1
      %s198 = scalar_lea.vmem %s4, %s197
      %p199 = scmp.lt.s32.totalorder %s16, 1
      %s200 = scalar_select %p199, %s16, 1
      %s201 = smul.addr %s200, 54
      %s202 = smul.addr %s201, 4
      %s203 = scalar_lea.vmem %s0, %s202
      %s204 = smul.u32 32, %s16
      %p205 = scmp.lt.s32.totalorder %s204, 63
      %s206 = scalar_select %p205, %s204, 63
      %s207 = smul.addr %s206, 4
      %s208 = scalar_lea.vmem %s2, %s207
      %s209 = smul.u32 32, %s16
      %p210 = scmp.lt.s32.totalorder %s16, 1
      %s211 = scalar_select %p210, %s16, 1
      %s212 = scalar_lea.vmem %s3, %s211
      %p213 = scmp.lt.s32.totalorder %s16, 1
      %s214 = scalar_select %p213, %s16, 1
      %s215 = scalar_lea.vmem %s4, %s214
      %v217 = vld [vmem:[%s203] sm:$0xf]
      %v218 = vld [vmem:[%s203 + $0x4] sm:$0xf]
      %v219 = vld [vmem:[%s203 + $0xc] sm:$0xf]
      %v220 = vld [vmem:[%s203 + $0x10] sm:$0xf]
      %v221 = vld [vmem:[%s203 + $0x18] sm:$0xf]
      %v222 = vld [vmem:[%s203 + $0x1c] sm:$0xf]
      %v223 = vld [vmem:[%s203 + $0x24] sm:$0xf]
      %v224 = vld [vmem:[%s203 + $0x28] sm:$0xf]
      %v225 = vld [vmem:[%s203 + $0x30] sm:$0xf]
      %v226 = vld [vmem:[%s203 + $0x34] sm:$0xf]
      %v227 = vld [vmem:[%s203 + $0x3c] sm:$0xf]
      %v228 = vld [vmem:[%s203 + $0x40] sm:$0xf]
      %v229 = vld [vmem:[%s203 + $0x48] sm:$0xf]
      %v230 = vld [vmem:[%s203 + $0x4c] sm:$0xf]
      %v231 = vld [vmem:[%s203 + $0x54] sm:$0xf]
      %v232 = vld [vmem:[%s203 + $0x58] sm:$0xf]
      %v233 = vld [vmem:[%s203 + $0x60] sm:$0xf]
      %v234 = vld [vmem:[%s203 + $0x64] sm:$0xf]
      %v235 = vld [vmem:[%s203 + $0x6c] sm:$0xf]
      %v236 = vld [vmem:[%s203 + $0x70] sm:$0xf]
      %v237 = vld [vmem:[%s203 + $0x78] sm:$0xf]
      %v238 = vld [vmem:[%s203 + $0x7c] sm:$0xf]
      %v239 = vld [vmem:[%s203 + $0x84] sm:$0xf]
      %v240 = vld [vmem:[%s203 + $0x88] sm:$0xf]
      %v241 = vld [vmem:[%s203 + $0x90] sm:$0xf]
      %v242 = vld [vmem:[%s203 + $0x94] sm:$0xf]
      %v243 = vld [vmem:[%s203 + $0x9c] sm:$0xf]
      %v244 = vld [vmem:[%s203 + $0xa0] sm:$0xf]
      %v245 = vld [vmem:[%s203 + $0xa8] sm:$0xf]
      %v246 = vld [vmem:[%s203 + $0xac] sm:$0xf]
      %v247 = vld [vmem:[%s203 + $0xb4] sm:$0xf]
      %v248 = vld [vmem:[%s203 + $0xb8] sm:$0xf]
      %v249 = vld [vmem:[%s203 + $0x8] sm:$0x1]
      %v250 = vld [vmem:[%s203 + $0x14] sm:$0x1]
      %v251 = vld [vmem:[%s203 + $0x20] sm:$0x1]
      %v252 = vld [vmem:[%s203 + $0x2c] sm:$0x1]
      %v253 = vld [vmem:[%s203 + $0x38] sm:$0x1]
      %v254 = vld [vmem:[%s203 + $0x44] sm:$0x1]
      %v255 = vld [vmem:[%s203 + $0x50] sm:$0x1]
      %v256 = vld [vmem:[%s203 + $0x5c] sm:$0x1]
      %v257 = vld [vmem:[%s203 + $0x68] sm:$0x1]
      %v258 = vld [vmem:[%s203 + $0x74] sm:$0x1]
      %v259 = vld [vmem:[%s203 + $0x80] sm:$0x1]
      %v260 = vld [vmem:[%s203 + $0x8c] sm:$0x1]
      %v261 = vld [vmem:[%s203 + $0x98] sm:$0x1]
      %v262 = vld [vmem:[%s203 + $0xa4] sm:$0x1]
      %v263 = vld [vmem:[%s203 + $0xb0] sm:$0x1]
      %v264 = vld [vmem:[%s203 + $0xbc] sm:$0x1]
      %v265 = vld [vmem:[%s203] sm:$0xe]
      %v266 = vld [vmem:[%s203 + $0xc] sm:$0xe]
      %v267 = vld [vmem:[%s203 + $0x18] sm:$0xe]
      %v268 = vld [vmem:[%s203 + $0x24] sm:$0xe]
      %v269 = vld [vmem:[%s203 + $0x30] sm:$0xe]
      %v270 = vld [vmem:[%s203 + $0x3c] sm:$0xe]
      %v271 = vld [vmem:[%s203 + $0x48] sm:$0xe]
      %v272 = vld [vmem:[%s203 + $0x54] sm:$0xe]
      %v273 = vld [vmem:[%s203 + $0x60] sm:$0xe]
      %v274 = vld [vmem:[%s203 + $0x6c] sm:$0xe]
      %v275 = vld [vmem:[%s203 + $0x78] sm:$0xe]
      %v276 = vld [vmem:[%s203 + $0x84] sm:$0xe]
      %v277 = vld [vmem:[%s203 + $0x90] sm:$0xe]
      %v278 = vld [vmem:[%s203 + $0x9c] sm:$0xe]
      %v279 = vld [vmem:[%s203 + $0xa8] sm:$0xe]
      %v280 = vld [vmem:[%s203 + $0xb4] sm:$0xe]
      %s281 = scalar_lea.vmem %s203, 12
      %v282 = vld [vmem:[%s281] sm:$0xf]
      %v283 = vld [vmem:[%s281 + $0x4] sm:$0xf]
      %v284 = vld [vmem:[%s281 + $0xc] sm:$0xf]
      %v285 = vld [vmem:[%s281 + $0x10] sm:$0xf]
      %v286 = vld [vmem:[%s281 + $0x18] sm:$0xf]
      %v287 = vld [vmem:[%s281 + $0x1c] sm:$0xf]
      %v288 = vld [vmem:[%s281 + $0x24] sm:$0xf]
      %v289 = vld [vmem:[%s281 + $0x28] sm:$0xf]
      %v290 = vld [vmem:[%s281 + $0x30] sm:$0xf]
      %v291 = vld [vmem:[%s281 + $0x34] sm:$0xf]
      %v292 = vld [vmem:[%s281 + $0x3c] sm:$0xf]
      %v293 = vld [vmem:[%s281 + $0x40] sm:$0xf]
      %v294 = vld [vmem:[%s281 + $0x48] sm:$0xf]
      %v295 = vld [vmem:[%s281 + $0x4c] sm:$0xf]
      %v296 = vld [vmem:[%s281 + $0x54] sm:$0xf]
      %v297 = vld [vmem:[%s281 + $0x58] sm:$0xf]
      %v298 = vld [vmem:[%s281 + $0x60] sm:$0xf]
      %v299 = vld [vmem:[%s281 + $0x64] sm:$0xf]
      %v300 = vld [vmem:[%s281 + $0x6c] sm:$0xf]
      %v301 = vld [vmem:[%s281 + $0x70] sm:$0xf]
      %v302 = vld [vmem:[%s281 + $0x78] sm:$0xf]
      %v303 = vld [vmem:[%s281 + $0x7c] sm:$0xf]
      %v304 = vld [vmem:[%s281 + $0x84] sm:$0xf]
      %v305 = vld [vmem:[%s281 + $0x88] sm:$0xf]
      %v306 = vld [vmem:[%s281 + $0x90] sm:$0xf]
      %v307 = vld [vmem:[%s281 + $0x94] sm:$0xf]
      %v308 = vld [vmem:[%s281 + $0x9c] sm:$0xf]
      %v309 = vld [vmem:[%s281 + $0xa0] sm:$0xf]
      %v310 = vld [vmem:[%s281 + $0xa8] sm:$0xf]
      %v311 = vld [vmem:[%s281 + $0xac] sm:$0xf]
      %v312 = vld [vmem:[%s281 + $0xb4] sm:$0xf]
      %v313 = vld [vmem:[%s281 + $0xb8] sm:$0xf]
      %v314 = vld [vmem:[%s281 + $0x8] sm:$0x1]
      %v315 = vld [vmem:[%s281 + $0x14] sm:$0x1]
      %v316 = vld [vmem:[%s281 + $0x20] sm:$0x1]
      %v317 = vld [vmem:[%s281 + $0x2c] sm:$0x1]
      %v318 = vld [vmem:[%s281 + $0x38] sm:$0x1]
      %v319 = vld [vmem:[%s281 + $0x44] sm:$0x1]
      %v320 = vld [vmem:[%s281 + $0x50] sm:$0x1]
      %v321 = vld [vmem:[%s281 + $0x5c] sm:$0x1]
      %v322 = vld [vmem:[%s281 + $0x68] sm:$0x1]
      %v323 = vld [vmem:[%s281 + $0x74] sm:$0x1]
      %v324 = vld [vmem:[%s281 + $0x80] sm:$0x1]
      %v325 = vld [vmem:[%s281 + $0x8c] sm:$0x1]
      %v326 = vld [vmem:[%s281 + $0x98] sm:$0x1]
      %v327 = vld [vmem:[%s281 + $0xa4] sm:$0x1]
      %v328 = vld [vmem:[%s281 + $0xb0] sm:$0x1]
      %v329 = vld [vmem:[%s281 + $0xbc] sm:$0x1]
      %v330 = vld [vmem:[%s281] sm:$0xe]
      %v331 = vld [vmem:[%s281 + $0xc] sm:$0xe]
      %v332 = vld [vmem:[%s281 + $0x18] sm:$0xe]
      %v333 = vld [vmem:[%s281 + $0x24] sm:$0xe]
      %v334 = vld [vmem:[%s281 + $0x30] sm:$0xe]
      %v335 = vld [vmem:[%s281 + $0x3c] sm:$0xe]
      %v336 = vld [vmem:[%s281 + $0x48] sm:$0xe]
      %v337 = vld [vmem:[%s281 + $0x54] sm:$0xe]
      %v338 = vld [vmem:[%s281 + $0x60] sm:$0xe]
      %v339 = vld [vmem:[%s281 + $0x6c] sm:$0xe]
      %v340 = vld [vmem:[%s281 + $0x78] sm:$0xe]
      %v341 = vld [vmem:[%s281 + $0x84] sm:$0xe]
      %v342 = vld [vmem:[%s281 + $0x90] sm:$0xe]
      %v343 = vld [vmem:[%s281 + $0x9c] sm:$0xe]
      %v344 = vld [vmem:[%s281 + $0xa8] sm:$0xe]
      %v345 = vld [vmem:[%s281 + $0xb4] sm:$0xe]
      %s346 = scalar_lea.vmem %s203, 24
      %v347 = vld [vmem:[%s346] sm:$0xf]
      %v348 = vld [vmem:[%s346 + $0x4] sm:$0xf]
      %v349 = vld [vmem:[%s346 + $0xc] sm:$0xf]
      %v350 = vld [vmem:[%s346 + $0x10] sm:$0xf]
      %v351 = vld [vmem:[%s346 + $0x18] sm:$0xf]
      %v352 = vld [vmem:[%s346 + $0x1c] sm:$0xf]
      %v353 = vld [vmem:[%s346 + $0x24] sm:$0xf]
      %v354 = vld [vmem:[%s346 + $0x28] sm:$0xf]
      %v355 = vld [vmem:[%s346 + $0x30] sm:$0xf]
      %v356 = vld [vmem:[%s346 + $0x34] sm:$0xf]
      %v357 = vld [vmem:[%s346 + $0x3c] sm:$0xf]
      %v358 = vld [vmem:[%s346 + $0x40] sm:$0xf]
      %v359 = vld [vmem:[%s346 + $0x48] sm:$0xf]
      %v360 = vld [vmem:[%s346 + $0x4c] sm:$0xf]
      %v361 = vld [vmem:[%s346 + $0x54] sm:$0xf]
      %v362 = vld [vmem:[%s346 + $0x58] sm:$0xf]
      %v363 = vld [vmem:[%s346 + $0x60] sm:$0xf]
      %v364 = vld [vmem:[%s346 + $0x64] sm:$0xf]
      %v365 = vld [vmem:[%s346 + $0x6c] sm:$0xf]
      %v366 = vld [vmem:[%s346 + $0x70] sm:$0xf]
      %v367 = vld [vmem:[%s346 + $0x78] sm:$0xf]
      %v368 = vld [vmem:[%s346 + $0x7c] sm:$0xf]
      %v369 = vld [vmem:[%s346 + $0x84] sm:$0xf]
      %v370 = vld [vmem:[%s346 + $0x88] sm:$0xf]
      %v371 = vld [vmem:[%s346 + $0x90] sm:$0xf]
      %v372 = vld [vmem:[%s346 + $0x94] sm:$0xf]
      %v373 = vld [vmem:[%s346 + $0x9c] sm:$0xf]
      %v374 = vld [vmem:[%s346 + $0xa0] sm:$0xf]
      %v375 = vld [vmem:[%s346 + $0xa8] sm:$0xf]
      %v376 = vld [vmem:[%s346 + $0xac] sm:$0xf]
      %v377 = vld [vmem:[%s346 + $0xb4] sm:$0xf]
      %v378 = vld [vmem:[%s346 + $0xb8] sm:$0xf]
      %v379 = vld [vmem:[%s346 + $0x8] sm:$0x1]
      %v380 = vld [vmem:[%s346 + $0x14] sm:$0x1]
      %v381 = vld [vmem:[%s346 + $0x20] sm:$0x1]
      %v382 = vld [vmem:[%s346 + $0x2c] sm:$0x1]
      %v383 = vld [vmem:[%s346 + $0x38] sm:$0x1]
      %v384 = vld [vmem:[%s346 + $0x44] sm:$0x1]
      %v385 = vld [vmem:[%s346 + $0x50] sm:$0x1]
      %v386 = vld [vmem:[%s346 + $0x5c] sm:$0x1]
      %v387 = vld [vmem:[%s346 + $0x68] sm:$0x1]
      %v388 = vld [vmem:[%s346 + $0x74] sm:$0x1]
      %v389 = vld [vmem:[%s346 + $0x80] sm:$0x1]
      %v390 = vld [vmem:[%s346 + $0x8c] sm:$0x1]
      %v391 = vld [vmem:[%s346 + $0x98] sm:$0x1]
      %v392 = vld [vmem:[%s346 + $0xa4] sm:$0x1]
      %v393 = vld [vmem:[%s346 + $0xb0] sm:$0x1]
      %v394 = vld [vmem:[%s346 + $0xbc] sm:$0x1]
      %v395 = vld [vmem:[%s346] sm:$0xe]
      %v396 = vld [vmem:[%s346 + $0xc] sm:$0xe]
      %v397 = vld [vmem:[%s346 + $0x18] sm:$0xe]
      %v398 = vld [vmem:[%s346 + $0x24] sm:$0xe]
      %v399 = vld [vmem:[%s346 + $0x30] sm:$0xe]
      %v400 = vld [vmem:[%s346 + $0x3c] sm:$0xe]
      %v401 = vld [vmem:[%s346 + $0x48] sm:$0xe]
      %v402 = vld [vmem:[%s346 + $0x54] sm:$0xe]
      %v403 = vld [vmem:[%s346 + $0x60] sm:$0xe]
      %v404 = vld [vmem:[%s346 + $0x6c] sm:$0xe]
      %v405 = vld [vmem:[%s346 + $0x78] sm:$0xe]
      %v406 = vld [vmem:[%s346 + $0x84] sm:$0xe]
      %v407 = vld [vmem:[%s346 + $0x90] sm:$0xe]
      %v408 = vld [vmem:[%s346 + $0x9c] sm:$0xe]
      %v409 = vld [vmem:[%s346 + $0xa8] sm:$0xe]
      %v410 = vld [vmem:[%s346 + $0xb4] sm:$0xe]
      %v443 = vunpack.c.l.b16 %v217
      %v444 = vunpack.c.l.b16 %v218
      %v445 = vunpack.c.l.b16 %v219
      %v446 = vunpack.c.l.b16 %v220
      %v447 = vunpack.c.l.b16 %v221
      %v448 = vunpack.c.l.b16 %v222
      %v449 = vunpack.c.l.b16 %v223
      %v450 = vunpack.c.l.b16 %v224
      %v451 = vunpack.c.l.b16 %v225
      %v452 = vunpack.c.l.b16 %v226
      %v453 = vunpack.c.l.b16 %v227
      %v454 = vunpack.c.l.b16 %v228
      %v455 = vunpack.c.l.b16 %v229
      %v456 = vunpack.c.l.b16 %v230
      %v457 = vunpack.c.l.b16 %v231
      %v458 = vunpack.c.l.b16 %v232
      %v459 = vunpack.c.l.b16 %v233
      %v460 = vunpack.c.l.b16 %v234
      %v461 = vunpack.c.l.b16 %v235
      %v462 = vunpack.c.l.b16 %v236
      %v463 = vunpack.c.l.b16 %v237
      %v464 = vunpack.c.l.b16 %v238
      %v465 = vunpack.c.l.b16 %v239
      %v466 = vunpack.c.l.b16 %v240
      %v467 = vunpack.c.l.b16 %v241
      %v468 = vunpack.c.l.b16 %v242
      %v469 = vunpack.c.l.b16 %v243
      %v470 = vunpack.c.l.b16 %v244
      %v471 = vunpack.c.l.b16 %v245
      %v472 = vunpack.c.l.b16 %v246
      %v473 = vunpack.c.l.b16 %v247
      %v474 = vunpack.c.l.b16 %v248
      %v475 = vpack.c.b16 %v444, %v443
      %v476 = vpack.c.b16 %v446, %v445
      %v477 = vpack.c.b16 %v448, %v447
      %v478 = vpack.c.b16 %v450, %v449
      %v479 = vpack.c.b16 %v452, %v451
      %v480 = vpack.c.b16 %v454, %v453
      %v481 = vpack.c.b16 %v456, %v455
      %v482 = vpack.c.b16 %v458, %v457
      %v483 = vpack.c.b16 %v460, %v459
      %v484 = vpack.c.b16 %v462, %v461
      %v485 = vpack.c.b16 %v464, %v463
      %v486 = vpack.c.b16 %v466, %v465
      %v487 = vpack.c.b16 %v468, %v467
      %v488 = vpack.c.b16 %v470, %v469
      %v489 = vpack.c.b16 %v472, %v471
      %v490 = vpack.c.b16 %v474, %v473
      %v507 = vunpack.c.l.b16 %v249
      %v508 = vunpack.c.l.b16 %v250
      %v509 = vunpack.c.l.b16 %v251
      %v510 = vunpack.c.l.b16 %v252
      %v511 = vunpack.c.l.b16 %v253
      %v512 = vunpack.c.l.b16 %v254
      %v513 = vunpack.c.l.b16 %v255
      %v514 = vunpack.c.l.b16 %v256
      %v515 = vunpack.c.l.b16 %v257
      %v516 = vunpack.c.l.b16 %v258
      %v517 = vunpack.c.l.b16 %v259
      %v518 = vunpack.c.l.b16 %v260
      %v519 = vunpack.c.l.b16 %v261
      %v520 = vunpack.c.l.b16 %v262
      %v521 = vunpack.c.l.b16 %v263
      %v522 = vunpack.c.l.b16 %v264
      %v523 = vpack.c.b16 %v507, %v507
      %v524 = vpack.c.b16 %v508, %v508
      %v525 = vpack.c.b16 %v509, %v509
      %v526 = vpack.c.b16 %v510, %v510
      %v527 = vpack.c.b16 %v511, %v511
      %v528 = vpack.c.b16 %v512, %v512
      %v529 = vpack.c.b16 %v513, %v513
      %v530 = vpack.c.b16 %v514, %v514
      %v531 = vpack.c.b16 %v515, %v515
      %v532 = vpack.c.b16 %v516, %v516
      %v533 = vpack.c.b16 %v517, %v517
      %v534 = vpack.c.b16 %v518, %v518
      %v535 = vpack.c.b16 %v519, %v519
      %v536 = vpack.c.b16 %v520, %v520
      %v537 = vpack.c.b16 %v521, %v521
      %v538 = vpack.c.b16 %v522, %v522
      %vm539 = vsmask.f32 7424
      %v541 = vshrl.u32 %v475, 16
      %v543 = vshll.u32 %v475, 16
      %v545 = vrot.slane %v543, 1
      %v546 = vor.u32 %v541, %v545
      %v548 = vshll.u32 %v523, 16
      %v550 = vrot.slane %v548, 1
      %v551 = vsel %vm539, %v546, %v550
      %v553 = vshrl.u32 %v476, 16
      %v555 = vshll.u32 %v476, 16
      %v557 = vrot.slane %v555, 1
      %v558 = vor.u32 %v553, %v557
      %v560 = vshll.u32 %v524, 16
      %v562 = vrot.slane %v560, 1
      %v563 = vsel %vm539, %v558, %v562
      %v565 = vshrl.u32 %v477, 16
      %v567 = vshll.u32 %v477, 16
      %v569 = vrot.slane %v567, 1
      %v570 = vor.u32 %v565, %v569
      %v572 = vshll.u32 %v525, 16
      %v574 = vrot.slane %v572, 1
      %v575 = vsel %vm539, %v570, %v574
      %v577 = vshrl.u32 %v478, 16
      %v579 = vshll.u32 %v478, 16
      %v581 = vrot.slane %v579, 1
      %v582 = vor.u32 %v577, %v581
      %v584 = vshll.u32 %v526, 16
      %v586 = vrot.slane %v584, 1
      %v587 = vsel %vm539, %v582, %v586
      %v589 = vshrl.u32 %v479, 16
      %v591 = vshll.u32 %v479, 16
      %v593 = vrot.slane %v591, 1
      %v594 = vor.u32 %v589, %v593
      %v596 = vshll.u32 %v527, 16
      %v598 = vrot.slane %v596, 1
      %v599 = vsel %vm539, %v594, %v598
      %v601 = vshrl.u32 %v480, 16
      %v603 = vshll.u32 %v480, 16
      %v605 = vrot.slane %v603, 1
      %v606 = vor.u32 %v601, %v605
      %v608 = vshll.u32 %v528, 16
      %v610 = vrot.slane %v608, 1
      %v611 = vsel %vm539, %v606, %v610
      %v613 = vshrl.u32 %v481, 16
      %v615 = vshll.u32 %v481, 16
      %v617 = vrot.slane %v615, 1
      %v618 = vor.u32 %v613, %v617
      %v620 = vshll.u32 %v529, 16
      %v622 = vrot.slane %v620, 1
      %v623 = vsel %vm539, %v618, %v622
      %v625 = vshrl.u32 %v482, 16
      %v627 = vshll.u32 %v482, 16
      %v629 = vrot.slane %v627, 1
      %v630 = vor.u32 %v625, %v629
      %v632 = vshll.u32 %v530, 16
      %v634 = vrot.slane %v632, 1
      %v635 = vsel %vm539, %v630, %v634
      %v637 = vshrl.u32 %v483, 16
      %v639 = vshll.u32 %v483, 16
      %v641 = vrot.slane %v639, 1
      %v642 = vor.u32 %v637, %v641
      %v644 = vshll.u32 %v531, 16
      %v646 = vrot.slane %v644, 1
      %v647 = vsel %vm539, %v642, %v646
      %v649 = vshrl.u32 %v484, 16
      %v651 = vshll.u32 %v484, 16
      %v653 = vrot.slane %v651, 1
      %v654 = vor.u32 %v649, %v653
      %v656 = vshll.u32 %v532, 16
      %v658 = vrot.slane %v656, 1
      %v659 = vsel %vm539, %v654, %v658
      %v661 = vshrl.u32 %v485, 16
      %v663 = vshll.u32 %v485, 16
      %v665 = vrot.slane %v663, 1
      %v666 = vor.u32 %v661, %v665
      %v668 = vshll.u32 %v533, 16
      %v670 = vrot.slane %v668, 1
      %v671 = vsel %vm539, %v666, %v670
      %v673 = vshrl.u32 %v486, 16
      %v675 = vshll.u32 %v486, 16
      %v677 = vrot.slane %v675, 1
      %v678 = vor.u32 %v673, %v677
      %v680 = vshll.u32 %v534, 16
      %v682 = vrot.slane %v680, 1
      %v683 = vsel %vm539, %v678, %v682
      %v685 = vshrl.u32 %v487, 16
      %v687 = vshll.u32 %v487, 16
      %v689 = vrot.slane %v687, 1
      %v690 = vor.u32 %v685, %v689
      %v692 = vshll.u32 %v535, 16
      %v694 = vrot.slane %v692, 1
      %v695 = vsel %vm539, %v690, %v694
      %v697 = vshrl.u32 %v488, 16
      %v699 = vshll.u32 %v488, 16
      %v701 = vrot.slane %v699, 1
      %v702 = vor.u32 %v697, %v701
      %v704 = vshll.u32 %v536, 16
      %v706 = vrot.slane %v704, 1
      %v707 = vsel %vm539, %v702, %v706
      %v709 = vshrl.u32 %v489, 16
      %v711 = vshll.u32 %v489, 16
      %v713 = vrot.slane %v711, 1
      %v714 = vor.u32 %v709, %v713
      %v716 = vshll.u32 %v537, 16
      %v718 = vrot.slane %v716, 1
      %v719 = vsel %vm539, %v714, %v718
      %v721 = vshrl.u32 %v490, 16
      %v723 = vshll.u32 %v490, 16
      %v725 = vrot.slane %v723, 1
      %v726 = vor.u32 %v721, %v725
      %v728 = vshll.u32 %v538, 16
      %v730 = vrot.slane %v728, 1
      %v731 = vsel %vm539, %v726, %v730
      %732 = vrot.lane.b32.xlu0 %v551, 4
      %v733 = vpop.permute.xlu0 %732
      %734 = vrot.lane.b32.xlu0 %v563, 4
      %v735 = vpop.permute.xlu0 %734
      %736 = vrot.lane.b32.xlu0 %v575, 4
      %v737 = vpop.permute.xlu0 %736
      %738 = vrot.lane.b32.xlu0 %v587, 4
      %v739 = vpop.permute.xlu0 %738
      %740 = vrot.lane.b32.xlu0 %v599, 4
      %v741 = vpop.permute.xlu0 %740
      %742 = vrot.lane.b32.xlu0 %v611, 4
      %v743 = vpop.permute.xlu0 %742
      %744 = vrot.lane.b32.xlu0 %v623, 4
      %v745 = vpop.permute.xlu0 %744
      %746 = vrot.lane.b32.xlu0 %v635, 4
      %v747 = vpop.permute.xlu0 %746
      %748 = vrot.lane.b32.xlu0 %v647, 4
      %v749 = vpop.permute.xlu0 %748
      %750 = vrot.lane.b32.xlu0 %v659, 4
      %v751 = vpop.permute.xlu0 %750
      %752 = vrot.lane.b32.xlu0 %v671, 4
      %v753 = vpop.permute.xlu0 %752
      %754 = vrot.lane.b32.xlu0 %v683, 4
      %v755 = vpop.permute.xlu0 %754
      %756 = vrot.lane.b32.xlu0 %v695, 4
      %v757 = vpop.permute.xlu0 %756
      %758 = vrot.lane.b32.xlu0 %v707, 4
      %v759 = vpop.permute.xlu0 %758
      %760 = vrot.lane.b32.xlu0 %v719, 4
      %v761 = vpop.permute.xlu0 %760
      %762 = vrot.lane.b32.xlu0 %v731, 4
      %v763 = vpop.permute.xlu0 %762
      %v780 = vunpack.c.l.b16 %v265
      %v781 = vunpack.c.l.b16 %v266
      %v782 = vunpack.c.l.b16 %v267
      %v783 = vunpack.c.l.b16 %v268
      %v784 = vunpack.c.l.b16 %v269
      %v785 = vunpack.c.l.b16 %v270
      %v786 = vunpack.c.l.b16 %v271
      %v787 = vunpack.c.l.b16 %v272
      %v788 = vunpack.c.l.b16 %v273
      %v789 = vunpack.c.l.b16 %v274
      %v790 = vunpack.c.l.b16 %v275
      %v791 = vunpack.c.l.b16 %v276
      %v792 = vunpack.c.l.b16 %v277
      %v793 = vunpack.c.l.b16 %v278
      %v794 = vunpack.c.l.b16 %v279
      %v795 = vunpack.c.l.b16 %v280
      %v796 = vpack.c.b16 %v444, %v780
      %v797 = vpack.c.b16 %v446, %v781
      %v798 = vpack.c.b16 %v448, %v782
      %v799 = vpack.c.b16 %v450, %v783
      %v800 = vpack.c.b16 %v452, %v784
      %v801 = vpack.c.b16 %v454, %v785
      %v802 = vpack.c.b16 %v456, %v786
      %v803 = vpack.c.b16 %v458, %v787
      %v804 = vpack.c.b16 %v460, %v788
      %v805 = vpack.c.b16 %v462, %v789
      %v806 = vpack.c.b16 %v464, %v790
      %v807 = vpack.c.b16 %v466, %v791
      %v808 = vpack.c.b16 %v468, %v792
      %v809 = vpack.c.b16 %v470, %v793
      %v810 = vpack.c.b16 %v472, %v794
      %v811 = vpack.c.b16 %v474, %v795
      %vm812 = vcmask 1046528
      %v813 = vrot.slane %v796, 1
      %v814 = vrot.slane %v523, 1
      %v815 = vsel %vm812, %v813, %v814
      %v816 = vrot.slane %v797, 1
      %v817 = vrot.slane %v524, 1
      %v818 = vsel %vm812, %v816, %v817
      %v819 = vrot.slane %v798, 1
      %v820 = vrot.slane %v525, 1
      %v821 = vsel %vm812, %v819, %v820
      %v822 = vrot.slane %v799, 1
      %v823 = vrot.slane %v526, 1
      %v824 = vsel %vm812, %v822, %v823
      %v825 = vrot.slane %v800, 1
      %v826 = vrot.slane %v527, 1
      %v827 = vsel %vm812, %v825, %v826
      %v828 = vrot.slane %v801, 1
      %v829 = vrot.slane %v528, 1
      %v830 = vsel %vm812, %v828, %v829
      %v831 = vrot.slane %v802, 1
      %v832 = vrot.slane %v529, 1
      %v833 = vsel %vm812, %v831, %v832
      %v834 = vrot.slane %v803, 1
      %v835 = vrot.slane %v530, 1
      %v836 = vsel %vm812, %v834, %v835
      %v837 = vrot.slane %v804, 1
      %v838 = vrot.slane %v531, 1
      %v839 = vsel %vm812, %v837, %v838
      %v840 = vrot.slane %v805, 1
      %v841 = vrot.slane %v532, 1
      %v842 = vsel %vm812, %v840, %v841
      %v843 = vrot.slane %v806, 1
      %v844 = vrot.slane %v533, 1
      %v845 = vsel %vm812, %v843, %v844
      %v846 = vrot.slane %v807, 1
      %v847 = vrot.slane %v534, 1
      %v848 = vsel %vm812, %v846, %v847
      %v849 = vrot.slane %v808, 1
      %v850 = vrot.slane %v535, 1
      %v851 = vsel %vm812, %v849, %v850
      %v852 = vrot.slane %v809, 1
      %v853 = vrot.slane %v536, 1
      %v854 = vsel %vm812, %v852, %v853
      %v855 = vrot.slane %v810, 1
      %v856 = vrot.slane %v537, 1
      %v857 = vsel %vm812, %v855, %v856
      %v858 = vrot.slane %v811, 1
      %v859 = vrot.slane %v538, 1
      %v860 = vsel %vm812, %v858, %v859
      %861 = vrot.lane.b32.xlu0 %v815, 8
      %v862 = vpop.permute.xlu0 %861
      %863 = vrot.lane.b32.xlu0 %v818, 8
      %v864 = vpop.permute.xlu0 %863
      %865 = vrot.lane.b32.xlu0 %v821, 8
      %v866 = vpop.permute.xlu0 %865
      %867 = vrot.lane.b32.xlu0 %v824, 8
      %v868 = vpop.permute.xlu0 %867
      %869 = vrot.lane.b32.xlu0 %v827, 8
      %v870 = vpop.permute.xlu0 %869
      %871 = vrot.lane.b32.xlu0 %v830, 8
      %v872 = vpop.permute.xlu0 %871
      %873 = vrot.lane.b32.xlu0 %v833, 8
      %v874 = vpop.permute.xlu0 %873
      %875 = vrot.lane.b32.xlu0 %v836, 8
      %v876 = vpop.permute.xlu0 %875
      %877 = vrot.lane.b32.xlu0 %v839, 8
      %v878 = vpop.permute.xlu0 %877
      %879 = vrot.lane.b32.xlu0 %v842, 8
      %v880 = vpop.permute.xlu0 %879
      %881 = vrot.lane.b32.xlu0 %v845, 8
      %v882 = vpop.permute.xlu0 %881
      %883 = vrot.lane.b32.xlu0 %v848, 8
      %v884 = vpop.permute.xlu0 %883
      %885 = vrot.lane.b32.xlu0 %v851, 8
      %v886 = vpop.permute.xlu0 %885
      %887 = vrot.lane.b32.xlu0 %v854, 8
      %v888 = vpop.permute.xlu0 %887
      %889 = vrot.lane.b32.xlu0 %v857, 8
      %v890 = vpop.permute.xlu0 %889
      %891 = vrot.lane.b32.xlu0 %v860, 8
      %v892 = vpop.permute.xlu0 %891
      %v925 = vunpack.c.l.b16 %v282
      %v926 = vunpack.c.l.b16 %v283
      %v927 = vunpack.c.l.b16 %v284
      %v928 = vunpack.c.l.b16 %v285
      %v929 = vunpack.c.l.b16 %v286
      %v930 = vunpack.c.l.b16 %v287
      %v931 = vunpack.c.l.b16 %v288
      %v932 = vunpack.c.l.b16 %v289
      %v933 = vunpack.c.l.b16 %v290
      %v934 = vunpack.c.l.b16 %v291
      %v935 = vunpack.c.l.b16 %v292
      %v936 = vunpack.c.l.b16 %v293
      %v937 = vunpack.c.l.b16 %v294
      %v938 = vunpack.c.l.b16 %v295
      %v939 = vunpack.c.l.b16 %v296
      %v940 = vunpack.c.l.b16 %v297
      %v941 = vunpack.c.l.b16 %v298
      %v942 = vunpack.c.l.b16 %v299
      %v943 = vunpack.c.l.b16 %v300
      %v944 = vunpack.c.l.b16 %v301
      %v945 = vunpack.c.l.b16 %v302
      %v946 = vunpack.c.l.b16 %v303
      %v947 = vunpack.c.l.b16 %v304
      %v948 = vunpack.c.l.b16 %v305
      %v949 = vunpack.c.l.b16 %v306
      %v950 = vunpack.c.l.b16 %v307
      %v951 = vunpack.c.l.b16 %v308
      %v952 = vunpack.c.l.b16 %v309
      %v953 = vunpack.c.l.b16 %v310
      %v954 = vunpack.c.l.b16 %v311
      %v955 = vunpack.c.l.b16 %v312
      %v956 = vunpack.c.l.b16 %v313
      %v957 = vpack.c.b16 %v926, %v925
      %v958 = vpack.c.b16 %v928, %v927
      %v959 = vpack.c.b16 %v930, %v929
      %v960 = vpack.c.b16 %v932, %v931
      %v961 = vpack.c.b16 %v934, %v933
      %v962 = vpack.c.b16 %v936, %v935
      %v963 = vpack.c.b16 %v938, %v937
      %v964 = vpack.c.b16 %v940, %v939
      %v965 = vpack.c.b16 %v942, %v941
      %v966 = vpack.c.b16 %v944, %v943
      %v967 = vpack.c.b16 %v946, %v945
      %v968 = vpack.c.b16 %v948, %v947
      %v969 = vpack.c.b16 %v950, %v949
      %v970 = vpack.c.b16 %v952, %v951
      %v971 = vpack.c.b16 %v954, %v953
      %v972 = vpack.c.b16 %v956, %v955
      %973 = vrot.lane.b32.xlu0 %v957, 12
      %v974 = vpop.permute.xlu0 %973
      %975 = vrot.lane.b32.xlu0 %v958, 12
      %v976 = vpop.permute.xlu0 %975
      %977 = vrot.lane.b32.xlu0 %v959, 12
      %v978 = vpop.permute.xlu0 %977
      %979 = vrot.lane.b32.xlu0 %v960, 12
      %v980 = vpop.permute.xlu0 %979
      %981 = vrot.lane.b32.xlu0 %v961, 12
      %v982 = vpop.permute.xlu0 %981
      %983 = vrot.lane.b32.xlu0 %v962, 12
      %v984 = vpop.permute.xlu0 %983
      %985 = vrot.lane.b32.xlu0 %v963, 12
      %v986 = vpop.permute.xlu0 %985
      %987 = vrot.lane.b32.xlu0 %v964, 12
      %v988 = vpop.permute.xlu0 %987
      %989 = vrot.lane.b32.xlu0 %v965, 12
      %v990 = vpop.permute.xlu0 %989
      %991 = vrot.lane.b32.xlu0 %v966, 12
      %v992 = vpop.permute.xlu0 %991
      %993 = vrot.lane.b32.xlu0 %v967, 12
      %v994 = vpop.permute.xlu0 %993
      %995 = vrot.lane.b32.xlu0 %v968, 12
      %v996 = vpop.permute.xlu0 %995
      %997 = vrot.lane.b32.xlu0 %v969, 12
      %v998 = vpop.permute.xlu0 %997
      %999 = vrot.lane.b32.xlu0 %v970, 12
      %v1000 = vpop.permute.xlu0 %999
      %1001 = vrot.lane.b32.xlu0 %v971, 12
      %v1002 = vpop.permute.xlu0 %1001
      %1003 = vrot.lane.b32.xlu0 %v972, 12
      %v1004 = vpop.permute.xlu0 %1003
      %v1021 = vunpack.c.l.b16 %v314
      %v1022 = vunpack.c.l.b16 %v315
      %v1023 = vunpack.c.l.b16 %v316
      %v1024 = vunpack.c.l.b16 %v317
      %v1025 = vunpack.c.l.b16 %v318
      %v1026 = vunpack.c.l.b16 %v319
      %v1027 = vunpack.c.l.b16 %v320
      %v1028 = vunpack.c.l.b16 %v321
      %v1029 = vunpack.c.l.b16 %v322
      %v1030 = vunpack.c.l.b16 %v323
      %v1031 = vunpack.c.l.b16 %v324
      %v1032 = vunpack.c.l.b16 %v325
      %v1033 = vunpack.c.l.b16 %v326
      %v1034 = vunpack.c.l.b16 %v327
      %v1035 = vunpack.c.l.b16 %v328
      %v1036 = vunpack.c.l.b16 %v329
      %v1037 = vpack.c.b16 %v1021, %v1021
      %v1038 = vpack.c.b16 %v1022, %v1022
      %v1039 = vpack.c.b16 %v1023, %v1023
      %v1040 = vpack.c.b16 %v1024, %v1024
      %v1041 = vpack.c.b16 %v1025, %v1025
      %v1042 = vpack.c.b16 %v1026, %v1026
      %v1043 = vpack.c.b16 %v1027, %v1027
      %v1044 = vpack.c.b16 %v1028, %v1028
      %v1045 = vpack.c.b16 %v1029, %v1029
      %v1046 = vpack.c.b16 %v1030, %v1030
      %v1047 = vpack.c.b16 %v1031, %v1031
      %v1048 = vpack.c.b16 %v1032, %v1032
      %v1049 = vpack.c.b16 %v1033, %v1033
      %v1050 = vpack.c.b16 %v1034, %v1034
      %v1051 = vpack.c.b16 %v1035, %v1035
      %v1052 = vpack.c.b16 %v1036, %v1036
      %v1054 = vshrl.u32 %v957, 16
      %v1056 = vshll.u32 %v957, 16
      %v1058 = vrot.slane %v1056, 1
      %v1059 = vor.u32 %v1054, %v1058
      %v1061 = vshll.u32 %v1037, 16
      %v1063 = vrot.slane %v1061, 1
      %v1064 = vsel %vm539, %v1059, %v1063
      %v1066 = vshrl.u32 %v958, 16
      %v1068 = vshll.u32 %v958, 16
      %v1070 = vrot.slane %v1068, 1
      %v1071 = vor.u32 %v1066, %v1070
      %v1073 = vshll.u32 %v1038, 16
      %v1075 = vrot.slane %v1073, 1
      %v1076 = vsel %vm539, %v1071, %v1075
      %v1078 = vshrl.u32 %v959, 16
      %v1080 = vshll.u32 %v959, 16
      %v1082 = vrot.slane %v1080, 1
      %v1083 = vor.u32 %v1078, %v1082
      %v1085 = vshll.u32 %v1039, 16
      %v1087 = vrot.slane %v1085, 1
      %v1088 = vsel %vm539, %v1083, %v1087
      %v1090 = vshrl.u32 %v960, 16
      %v1092 = vshll.u32 %v960, 16
      %v1094 = vrot.slane %v1092, 1
      %v1095 = vor.u32 %v1090, %v1094
      %v1097 = vshll.u32 %v1040, 16
      %v1099 = vrot.slane %v1097, 1
      %v1100 = vsel %vm539, %v1095, %v1099
      %v1102 = vshrl.u32 %v961, 16
      %v1104 = vshll.u32 %v961, 16
      %v1106 = vrot.slane %v1104, 1
      %v1107 = vor.u32 %v1102, %v1106
      %v1109 = vshll.u32 %v1041, 16
      %v1111 = vrot.slane %v1109, 1
      %v1112 = vsel %vm539, %v1107, %v1111
      %v1114 = vshrl.u32 %v962, 16
      %v1116 = vshll.u32 %v962, 16
      %v1118 = vrot.slane %v1116, 1
      %v1119 = vor.u32 %v1114, %v1118
      %v1121 = vshll.u32 %v1042, 16
      %v1123 = vrot.slane %v1121, 1
      %v1124 = vsel %vm539, %v1119, %v1123
      %v1126 = vshrl.u32 %v963, 16
      %v1128 = vshll.u32 %v963, 16
      %v1130 = vrot.slane %v1128, 1
      %v1131 = vor.u32 %v1126, %v1130
      %v1133 = vshll.u32 %v1043, 16
      %v1135 = vrot.slane %v1133, 1
      %v1136 = vsel %vm539, %v1131, %v1135
      %v1138 = vshrl.u32 %v964, 16
      %v1140 = vshll.u32 %v964, 16
      %v1142 = vrot.slane %v1140, 1
      %v1143 = vor.u32 %v1138, %v1142
      %v1145 = vshll.u32 %v1044, 16
      %v1147 = vrot.slane %v1145, 1
      %v1148 = vsel %vm539, %v1143, %v1147
      %v1150 = vshrl.u32 %v965, 16
      %v1152 = vshll.u32 %v965, 16
      %v1154 = vrot.slane %v1152, 1
      %v1155 = vor.u32 %v1150, %v1154
      %v1157 = vshll.u32 %v1045, 16
      %v1159 = vrot.slane %v1157, 1
      %v1160 = vsel %vm539, %v1155, %v1159
      %v1162 = vshrl.u32 %v966, 16
      %v1164 = vshll.u32 %v966, 16
      %v1166 = vrot.slane %v1164, 1
      %v1167 = vor.u32 %v1162, %v1166
      %v1169 = vshll.u32 %v1046, 16
      %v1171 = vrot.slane %v1169, 1
      %v1172 = vsel %vm539, %v1167, %v1171
      %v1174 = vshrl.u32 %v967, 16
      %v1176 = vshll.u32 %v967, 16
      %v1178 = vrot.slane %v1176, 1
      %v1179 = vor.u32 %v1174, %v1178
      %v1181 = vshll.u32 %v1047, 16
      %v1183 = vrot.slane %v1181, 1
      %v1184 = vsel %vm539, %v1179, %v1183
      %v1186 = vshrl.u32 %v968, 16
      %v1188 = vshll.u32 %v968, 16
      %v1190 = vrot.slane %v1188, 1
      %v1191 = vor.u32 %v1186, %v1190
      %v1193 = vshll.u32 %v1048, 16
      %v1195 = vrot.slane %v1193, 1
      %v1196 = vsel %vm539, %v1191, %v1195
      %v1198 = vshrl.u32 %v969, 16
      %v1200 = vshll.u32 %v969, 16
      %v1202 = vrot.slane %v1200, 1
      %v1203 = vor.u32 %v1198, %v1202
      %v1205 = vshll.u32 %v1049, 16
      %v1207 = vrot.slane %v1205, 1
      %v1208 = vsel %vm539, %v1203, %v1207
      %v1210 = vshrl.u32 %v970, 16
      %v1212 = vshll.u32 %v970, 16
      %v1214 = vrot.slane %v1212, 1
      %v1215 = vor.u32 %v1210, %v1214
      %v1217 = vshll.u32 %v1050, 16
      %v1219 = vrot.slane %v1217, 1
      %v1220 = vsel %vm539, %v1215, %v1219
      %v1222 = vshrl.u32 %v971, 16
      %v1224 = vshll.u32 %v971, 16
      %v1226 = vrot.slane %v1224, 1
      %v1227 = vor.u32 %v1222, %v1226
      %v1229 = vshll.u32 %v1051, 16
      %v1231 = vrot.slane %v1229, 1
      %v1232 = vsel %vm539, %v1227, %v1231
      %v1234 = vshrl.u32 %v972, 16
      %v1236 = vshll.u32 %v972, 16
      %v1238 = vrot.slane %v1236, 1
      %v1239 = vor.u32 %v1234, %v1238
      %v1241 = vshll.u32 %v1052, 16
      %v1243 = vrot.slane %v1241, 1
      %v1244 = vsel %vm539, %v1239, %v1243
      %1245 = vrot.lane.b32.xlu0 %v1064, 16
      %v1246 = vpop.permute.xlu0 %1245
      %1247 = vrot.lane.b32.xlu0 %v1076, 16
      %v1248 = vpop.permute.xlu0 %1247
      %1249 = vrot.lane.b32.xlu0 %v1088, 16
      %v1250 = vpop.permute.xlu0 %1249
      %1251 = vrot.lane.b32.xlu0 %v1100, 16
      %v1252 = vpop.permute.xlu0 %1251
      %1253 = vrot.lane.b32.xlu0 %v1112, 16
      %v1254 = vpop.permute.xlu0 %1253
      %1255 = vrot.lane.b32.xlu0 %v1124, 16
      %v1256 = vpop.permute.xlu0 %1255
      %1257 = vrot.lane.b32.xlu0 %v1136, 16
      %v1258 = vpop.permute.xlu0 %1257
      %1259 = vrot.lane.b32.xlu0 %v1148, 16
      %v1260 = vpop.permute.xlu0 %1259
      %1261 = vrot.lane.b32.xlu0 %v1160, 16
      %v1262 = vpop.permute.xlu0 %1261
      %1263 = vrot.lane.b32.xlu0 %v1172, 16
      %v1264 = vpop.permute.xlu0 %1263
      %1265 = vrot.lane.b32.xlu0 %v1184, 16
      %v1266 = vpop.permute.xlu0 %1265
      %1267 = vrot.lane.b32.xlu0 %v1196, 16
      %v1268 = vpop.permute.xlu0 %1267
      %1269 = vrot.lane.b32.xlu0 %v1208, 16
      %v1270 = vpop.permute.xlu0 %1269
      %1271 = vrot.lane.b32.xlu0 %v1220, 16
      %v1272 = vpop.permute.xlu0 %1271
      %1273 = vrot.lane.b32.xlu0 %v1232, 16
      %v1274 = vpop.permute.xlu0 %1273
      %1275 = vrot.lane.b32.xlu0 %v1244, 16
      %v1276 = vpop.permute.xlu0 %1275
      %v1293 = vunpack.c.l.b16 %v330
      %v1294 = vunpack.c.l.b16 %v331
      %v1295 = vunpack.c.l.b16 %v332
      %v1296 = vunpack.c.l.b16 %v333
      %v1297 = vunpack.c.l.b16 %v334
      %v1298 = vunpack.c.l.b16 %v335
      %v1299 = vunpack.c.l.b16 %v336
      %v1300 = vunpack.c.l.b16 %v337
      %v1301 = vunpack.c.l.b16 %v338
      %v1302 = vunpack.c.l.b16 %v339
      %v1303 = vunpack.c.l.b16 %v340
      %v1304 = vunpack.c.l.b16 %v341
      %v1305 = vunpack.c.l.b16 %v342
      %v1306 = vunpack.c.l.b16 %v343
      %v1307 = vunpack.c.l.b16 %v344
      %v1308 = vunpack.c.l.b16 %v345
      %v1309 = vpack.c.b16 %v926, %v1293
      %v1310 = vpack.c.b16 %v928, %v1294
      %v1311 = vpack.c.b16 %v930, %v1295
      %v1312 = vpack.c.b16 %v932, %v1296
      %v1313 = vpack.c.b16 %v934, %v1297
      %v1314 = vpack.c.b16 %v936, %v1298
      %v1315 = vpack.c.b16 %v938, %v1299
      %v1316 = vpack.c.b16 %v940, %v1300
      %v1317 = vpack.c.b16 %v942, %v1301
      %v1318 = vpack.c.b16 %v944, %v1302
      %v1319 = vpack.c.b16 %v946, %v1303
      %v1320 = vpack.c.b16 %v948, %v1304
      %v1321 = vpack.c.b16 %v950, %v1305
      %v1322 = vpack.c.b16 %v952, %v1306
      %v1323 = vpack.c.b16 %v954, %v1307
      %v1324 = vpack.c.b16 %v956, %v1308
      %v1325 = vrot.slane %v1309, 1
      %v1326 = vrot.slane %v1037, 1
      %v1327 = vsel %vm812, %v1325, %v1326
      %v1328 = vrot.slane %v1310, 1
      %v1329 = vrot.slane %v1038, 1
      %v1330 = vsel %vm812, %v1328, %v1329
      %v1331 = vrot.slane %v1311, 1
      %v1332 = vrot.slane %v1039, 1
      %v1333 = vsel %vm812, %v1331, %v1332
      %v1334 = vrot.slane %v1312, 1
      %v1335 = vrot.slane %v1040, 1
      %v1336 = vsel %vm812, %v1334, %v1335
      %v1337 = vrot.slane %v1313, 1
      %v1338 = vrot.slane %v1041, 1
      %v1339 = vsel %vm812, %v1337, %v1338
      %v1340 = vrot.slane %v1314, 1
      %v1341 = vrot.slane %v1042, 1
      %v1342 = vsel %vm812, %v1340, %v1341
      %v1343 = vrot.slane %v1315, 1
      %v1344 = vrot.slane %v1043, 1
      %v1345 = vsel %vm812, %v1343, %v1344
      %v1346 = vrot.slane %v1316, 1
      %v1347 = vrot.slane %v1044, 1
      %v1348 = vsel %vm812, %v1346, %v1347
      %v1349 = vrot.slane %v1317, 1
      %v1350 = vrot.slane %v1045, 1
      %v1351 = vsel %vm812, %v1349, %v1350
      %v1352 = vrot.slane %v1318, 1
      %v1353 = vrot.slane %v1046, 1
      %v1354 = vsel %vm812, %v1352, %v1353
      %v1355 = vrot.slane %v1319, 1
      %v1356 = vrot.slane %v1047, 1
      %v1357 = vsel %vm812, %v1355, %v1356
      %v1358 = vrot.slane %v1320, 1
      %v1359 = vrot.slane %v1048, 1
      %v1360 = vsel %vm812, %v1358, %v1359
      %v1361 = vrot.slane %v1321, 1
      %v1362 = vrot.slane %v1049, 1
      %v1363 = vsel %vm812, %v1361, %v1362
      %v1364 = vrot.slane %v1322, 1
      %v1365 = vrot.slane %v1050, 1
      %v1366 = vsel %vm812, %v1364, %v1365
      %v1367 = vrot.slane %v1323, 1
      %v1368 = vrot.slane %v1051, 1
      %v1369 = vsel %vm812, %v1367, %v1368
      %v1370 = vrot.slane %v1324, 1
      %v1371 = vrot.slane %v1052, 1
      %v1372 = vsel %vm812, %v1370, %v1371
      %1373 = vrot.lane.b32.xlu0 %v1327, 20
      %v1374 = vpop.permute.xlu0 %1373
      %1375 = vrot.lane.b32.xlu0 %v1330, 20
      %v1376 = vpop.permute.xlu0 %1375
      %1377 = vrot.lane.b32.xlu0 %v1333, 20
      %v1378 = vpop.permute.xlu0 %1377
      %1379 = vrot.lane.b32.xlu0 %v1336, 20
      %v1380 = vpop.permute.xlu0 %1379
      %1381 = vrot.lane.b32.xlu0 %v1339, 20
      %v1382 = vpop.permute.xlu0 %1381
      %1383 = vrot.lane.b32.xlu0 %v1342, 20
      %v1384 = vpop.permute.xlu0 %1383
      %1385 = vrot.lane.b32.xlu0 %v1345, 20
      %v1386 = vpop.permute.xlu0 %1385
      %1387 = vrot.lane.b32.xlu0 %v1348, 20
      %v1388 = vpop.permute.xlu0 %1387
      %1389 = vrot.lane.b32.xlu0 %v1351, 20
      %v1390 = vpop.permute.xlu0 %1389
      %1391 = vrot.lane.b32.xlu0 %v1354, 20
      %v1392 = vpop.permute.xlu0 %1391
      %1393 = vrot.lane.b32.xlu0 %v1357, 20
      %v1394 = vpop.permute.xlu0 %1393
      %1395 = vrot.lane.b32.xlu0 %v1360, 20
      %v1396 = vpop.permute.xlu0 %1395
      %1397 = vrot.lane.b32.xlu0 %v1363, 20
      %v1398 = vpop.permute.xlu0 %1397
      %1399 = vrot.lane.b32.xlu0 %v1366, 20
      %v1400 = vpop.permute.xlu0 %1399
      %1401 = vrot.lane.b32.xlu0 %v1369, 20
      %v1402 = vpop.permute.xlu0 %1401
      %1403 = vrot.lane.b32.xlu0 %v1372, 20
      %v1404 = vpop.permute.xlu0 %1403
      %v1437 = vunpack.c.l.b16 %v347
      %v1438 = vunpack.c.l.b16 %v348
      %v1439 = vunpack.c.l.b16 %v349
      %v1440 = vunpack.c.l.b16 %v350
      %v1441 = vunpack.c.l.b16 %v351
      %v1442 = vunpack.c.l.b16 %v352
      %v1443 = vunpack.c.l.b16 %v353
      %v1444 = vunpack.c.l.b16 %v354
      %v1445 = vunpack.c.l.b16 %v355
      %v1446 = vunpack.c.l.b16 %v356
      %v1447 = vunpack.c.l.b16 %v357
      %v1448 = vunpack.c.l.b16 %v358
      %v1449 = vunpack.c.l.b16 %v359
      %v1450 = vunpack.c.l.b16 %v360
      %v1451 = vunpack.c.l.b16 %v361
      %v1452 = vunpack.c.l.b16 %v362
      %v1453 = vunpack.c.l.b16 %v363
      %v1454 = vunpack.c.l.b16 %v364
      %v1455 = vunpack.c.l.b16 %v365
      %v1456 = vunpack.c.l.b16 %v366
      %v1457 = vunpack.c.l.b16 %v367
      %v1458 = vunpack.c.l.b16 %v368
      %v1459 = vunpack.c.l.b16 %v369
      %v1460 = vunpack.c.l.b16 %v370
      %v1461 = vunpack.c.l.b16 %v371
      %v1462 = vunpack.c.l.b16 %v372
      %v1463 = vunpack.c.l.b16 %v373
      %v1464 = vunpack.c.l.b16 %v374
      %v1465 = vunpack.c.l.b16 %v375
      %v1466 = vunpack.c.l.b16 %v376
      %v1467 = vunpack.c.l.b16 %v377
      %v1468 = vunpack.c.l.b16 %v378
      %v1469 = vpack.c.b16 %v1438, %v1437
      %v1470 = vpack.c.b16 %v1440, %v1439
      %v1471 = vpack.c.b16 %v1442, %v1441
      %v1472 = vpack.c.b16 %v1444, %v1443
      %v1473 = vpack.c.b16 %v1446, %v1445
      %v1474 = vpack.c.b16 %v1448, %v1447
      %v1475 = vpack.c.b16 %v1450, %v1449
      %v1476 = vpack.c.b16 %v1452, %v1451
      %v1477 = vpack.c.b16 %v1454, %v1453
      %v1478 = vpack.c.b16 %v1456, %v1455
      %v1479 = vpack.c.b16 %v1458, %v1457
      %v1480 = vpack.c.b16 %v1460, %v1459
      %v1481 = vpack.c.b16 %v1462, %v1461
      %v1482 = vpack.c.b16 %v1464, %v1463
      %v1483 = vpack.c.b16 %v1466, %v1465
      %v1484 = vpack.c.b16 %v1468, %v1467
      %1485 = vrot.lane.b32.xlu0 %v1469, 24
      %v1486 = vpop.permute.xlu0 %1485
      %1487 = vrot.lane.b32.xlu0 %v1470, 24
      %v1488 = vpop.permute.xlu0 %1487
      %1489 = vrot.lane.b32.xlu0 %v1471, 24
      %v1490 = vpop.permute.xlu0 %1489
      %1491 = vrot.lane.b32.xlu0 %v1472, 24
      %v1492 = vpop.permute.xlu0 %1491
      %1493 = vrot.lane.b32.xlu0 %v1473, 24
      %v1494 = vpop.permute.xlu0 %1493
      %1495 = vrot.lane.b32.xlu0 %v1474, 24
      %v1496 = vpop.permute.xlu0 %1495
      %1497 = vrot.lane.b32.xlu0 %v1475, 24
      %v1498 = vpop.permute.xlu0 %1497
      %1499 = vrot.lane.b32.xlu0 %v1476, 24
      %v1500 = vpop.permute.xlu0 %1499
      %1501 = vrot.lane.b32.xlu0 %v1477, 24
      %v1502 = vpop.permute.xlu0 %1501
      %1503 = vrot.lane.b32.xlu0 %v1478, 24
      %v1504 = vpop.permute.xlu0 %1503
      %1505 = vrot.lane.b32.xlu0 %v1479, 24
      %v1506 = vpop.permute.xlu0 %1505
      %1507 = vrot.lane.b32.xlu0 %v1480, 24
      %v1508 = vpop.permute.xlu0 %1507
      %1509 = vrot.lane.b32.xlu0 %v1481, 24
      %v1510 = vpop.permute.xlu0 %1509
      %1511 = vrot.lane.b32.xlu0 %v1482, 24
      %v1512 = vpop.permute.xlu0 %1511
      %1513 = vrot.lane.b32.xlu0 %v1483, 24
      %v1514 = vpop.permute.xlu0 %1513
      %1515 = vrot.lane.b32.xlu0 %v1484, 24
      %v1516 = vpop.permute.xlu0 %1515
      %v1533 = vunpack.c.l.b16 %v379
      %v1534 = vunpack.c.l.b16 %v380
      %v1535 = vunpack.c.l.b16 %v381
      %v1536 = vunpack.c.l.b16 %v382
      %v1537 = vunpack.c.l.b16 %v383
      %v1538 = vunpack.c.l.b16 %v384
      %v1539 = vunpack.c.l.b16 %v385
      %v1540 = vunpack.c.l.b16 %v386
      %v1541 = vunpack.c.l.b16 %v387
      %v1542 = vunpack.c.l.b16 %v388
      %v1543 = vunpack.c.l.b16 %v389
      %v1544 = vunpack.c.l.b16 %v390
      %v1545 = vunpack.c.l.b16 %v391
      %v1546 = vunpack.c.l.b16 %v392
      %v1547 = vunpack.c.l.b16 %v393
      %v1548 = vunpack.c.l.b16 %v394
      %v1549 = vpack.c.b16 %v1533, %v1533
      %v1550 = vpack.c.b16 %v1534, %v1534
      %v1551 = vpack.c.b16 %v1535, %v1535
      %v1552 = vpack.c.b16 %v1536, %v1536
      %v1553 = vpack.c.b16 %v1537, %v1537
      %v1554 = vpack.c.b16 %v1538, %v1538
      %v1555 = vpack.c.b16 %v1539, %v1539
      %v1556 = vpack.c.b16 %v1540, %v1540
      %v1557 = vpack.c.b16 %v1541, %v1541
      %v1558 = vpack.c.b16 %v1542, %v1542
      %v1559 = vpack.c.b16 %v1543, %v1543
      %v1560 = vpack.c.b16 %v1544, %v1544
      %v1561 = vpack.c.b16 %v1545, %v1545
      %v1562 = vpack.c.b16 %v1546, %v1546
      %v1563 = vpack.c.b16 %v1547, %v1547
      %v1564 = vpack.c.b16 %v1548, %v1548
      %v1566 = vshrl.u32 %v1469, 16
      %v1568 = vshll.u32 %v1469, 16
      %v1570 = vrot.slane %v1568, 1
      %v1571 = vor.u32 %v1566, %v1570
      %v1573 = vshll.u32 %v1549, 16
      %v1575 = vrot.slane %v1573, 1
      %v1576 = vsel %vm539, %v1571, %v1575
      %v1578 = vshrl.u32 %v1470, 16
      %v1580 = vshll.u32 %v1470, 16
      %v1582 = vrot.slane %v1580, 1
      %v1583 = vor.u32 %v1578, %v1582
      %v1585 = vshll.u32 %v1550, 16
      %v1587 = vrot.slane %v1585, 1
      %v1588 = vsel %vm539, %v1583, %v1587
      %v1590 = vshrl.u32 %v1471, 16
      %v1592 = vshll.u32 %v1471, 16
      %v1594 = vrot.slane %v1592, 1
      %v1595 = vor.u32 %v1590, %v1594
      %v1597 = vshll.u32 %v1551, 16
      %v1599 = vrot.slane %v1597, 1
      %v1600 = vsel %vm539, %v1595, %v1599
      %v1602 = vshrl.u32 %v1472, 16
      %v1604 = vshll.u32 %v1472, 16
      %v1606 = vrot.slane %v1604, 1
      %v1607 = vor.u32 %v1602, %v1606
      %v1609 = vshll.u32 %v1552, 16
      %v1611 = vrot.slane %v1609, 1
      %v1612 = vsel %vm539, %v1607, %v1611
      %v1614 = vshrl.u32 %v1473, 16
      %v1616 = vshll.u32 %v1473, 16
      %v1618 = vrot.slane %v1616, 1
      %v1619 = vor.u32 %v1614, %v1618
      %v1621 = vshll.u32 %v1553, 16
      %v1623 = vrot.slane %v1621, 1
      %v1624 = vsel %vm539, %v1619, %v1623
      %v1626 = vshrl.u32 %v1474, 16
      %v1628 = vshll.u32 %v1474, 16
      %v1630 = vrot.slane %v1628, 1
      %v1631 = vor.u32 %v1626, %v1630
      %v1633 = vshll.u32 %v1554, 16
      %v1635 = vrot.slane %v1633, 1
      %v1636 = vsel %vm539, %v1631, %v1635
      %v1638 = vshrl.u32 %v1475, 16
      %v1640 = vshll.u32 %v1475, 16
      %v1642 = vrot.slane %v1640, 1
      %v1643 = vor.u32 %v1638, %v1642
      %v1645 = vshll.u32 %v1555, 16
      %v1647 = vrot.slane %v1645, 1
      %v1648 = vsel %vm539, %v1643, %v1647
      %v1650 = vshrl.u32 %v1476, 16
      %v1652 = vshll.u32 %v1476, 16
      %v1654 = vrot.slane %v1652, 1
      %v1655 = vor.u32 %v1650, %v1654
      %v1657 = vshll.u32 %v1556, 16
      %v1659 = vrot.slane %v1657, 1
      %v1660 = vsel %vm539, %v1655, %v1659
      %v1662 = vshrl.u32 %v1477, 16
      %v1664 = vshll.u32 %v1477, 16
      %v1666 = vrot.slane %v1664, 1
      %v1667 = vor.u32 %v1662, %v1666
      %v1669 = vshll.u32 %v1557, 16
      %v1671 = vrot.slane %v1669, 1
      %v1672 = vsel %vm539, %v1667, %v1671
      %v1674 = vshrl.u32 %v1478, 16
      %v1676 = vshll.u32 %v1478, 16
      %v1678 = vrot.slane %v1676, 1
      %v1679 = vor.u32 %v1674, %v1678
      %v1681 = vshll.u32 %v1558, 16
      %v1683 = vrot.slane %v1681, 1
      %v1684 = vsel %vm539, %v1679, %v1683
      %v1686 = vshrl.u32 %v1479, 16
      %v1688 = vshll.u32 %v1479, 16
      %v1690 = vrot.slane %v1688, 1
      %v1691 = vor.u32 %v1686, %v1690
      %v1693 = vshll.u32 %v1559, 16
      %v1695 = vrot.slane %v1693, 1
      %v1696 = vsel %vm539, %v1691, %v1695
      %v1698 = vshrl.u32 %v1480, 16
      %v1700 = vshll.u32 %v1480, 16
      %v1702 = vrot.slane %v1700, 1
      %v1703 = vor.u32 %v1698, %v1702
      %v1705 = vshll.u32 %v1560, 16
      %v1707 = vrot.slane %v1705, 1
      %v1708 = vsel %vm539, %v1703, %v1707
      %v1710 = vshrl.u32 %v1481, 16
      %v1712 = vshll.u32 %v1481, 16
      %v1714 = vrot.slane %v1712, 1
      %v1715 = vor.u32 %v1710, %v1714
      %v1717 = vshll.u32 %v1561, 16
      %v1719 = vrot.slane %v1717, 1
      %v1720 = vsel %vm539, %v1715, %v1719
      %v1722 = vshrl.u32 %v1482, 16
      %v1724 = vshll.u32 %v1482, 16
      %v1726 = vrot.slane %v1724, 1
      %v1727 = vor.u32 %v1722, %v1726
      %v1729 = vshll.u32 %v1562, 16
      %v1731 = vrot.slane %v1729, 1
      %v1732 = vsel %vm539, %v1727, %v1731
      %v1734 = vshrl.u32 %v1483, 16
      %v1736 = vshll.u32 %v1483, 16
      %v1738 = vrot.slane %v1736, 1
      %v1739 = vor.u32 %v1734, %v1738
      %v1741 = vshll.u32 %v1563, 16
      %v1743 = vrot.slane %v1741, 1
      %v1744 = vsel %vm539, %v1739, %v1743
      %v1746 = vshrl.u32 %v1484, 16
      %v1748 = vshll.u32 %v1484, 16
      %v1750 = vrot.slane %v1748, 1
      %v1751 = vor.u32 %v1746, %v1750
      %v1753 = vshll.u32 %v1564, 16
      %v1755 = vrot.slane %v1753, 1
      %v1756 = vsel %vm539, %v1751, %v1755
      %1757 = vrot.lane.b32.xlu0 %v1576, 28
      %v1758 = vpop.permute.xlu0 %1757
      %1759 = vrot.lane.b32.xlu0 %v1588, 28
      %v1760 = vpop.permute.xlu0 %1759
      %1761 = vrot.lane.b32.xlu0 %v1600, 28
      %v1762 = vpop.permute.xlu0 %1761
      %1763 = vrot.lane.b32.xlu0 %v1612, 28
      %v1764 = vpop.permute.xlu0 %1763
      %1765 = vrot.lane.b32.xlu0 %v1624, 28
      %v1766 = vpop.permute.xlu0 %1765
      %1767 = vrot.lane.b32.xlu0 %v1636, 28
      %v1768 = vpop.permute.xlu0 %1767
      %1769 = vrot.lane.b32.xlu0 %v1648, 28
      %v1770 = vpop.permute.xlu0 %1769
      %1771 = vrot.lane.b32.xlu0 %v1660, 28
      %v1772 = vpop.permute.xlu0 %1771
      %1773 = vrot.lane.b32.xlu0 %v1672, 28
      %v1774 = vpop.permute.xlu0 %1773
      %1775 = vrot.lane.b32.xlu0 %v1684, 28
      %v1776 = vpop.permute.xlu0 %1775
      %1777 = vrot.lane.b32.xlu0 %v1696, 28
      %v1778 = vpop.permute.xlu0 %1777
      %1779 = vrot.lane.b32.xlu0 %v1708, 28
      %v1780 = vpop.permute.xlu0 %1779
      %1781 = vrot.lane.b32.xlu0 %v1720, 28
      %v1782 = vpop.permute.xlu0 %1781
      %1783 = vrot.lane.b32.xlu0 %v1732, 28
      %v1784 = vpop.permute.xlu0 %1783
      %1785 = vrot.lane.b32.xlu0 %v1744, 28
      %v1786 = vpop.permute.xlu0 %1785
      %1787 = vrot.lane.b32.xlu0 %v1756, 28
      %v1788 = vpop.permute.xlu0 %1787
      %v1805 = vunpack.c.l.b16 %v395
      %v1806 = vunpack.c.l.b16 %v396
      %v1807 = vunpack.c.l.b16 %v397
      %v1808 = vunpack.c.l.b16 %v398
      %v1809 = vunpack.c.l.b16 %v399
      %v1810 = vunpack.c.l.b16 %v400
      %v1811 = vunpack.c.l.b16 %v401
      %v1812 = vunpack.c.l.b16 %v402
      %v1813 = vunpack.c.l.b16 %v403
      %v1814 = vunpack.c.l.b16 %v404
      %v1815 = vunpack.c.l.b16 %v405
      %v1816 = vunpack.c.l.b16 %v406
      %v1817 = vunpack.c.l.b16 %v407
      %v1818 = vunpack.c.l.b16 %v408
      %v1819 = vunpack.c.l.b16 %v409
      %v1820 = vunpack.c.l.b16 %v410
      %v1821 = vpack.c.b16 %v1438, %v1805
      %v1822 = vpack.c.b16 %v1440, %v1806
      %v1823 = vpack.c.b16 %v1442, %v1807
      %v1824 = vpack.c.b16 %v1444, %v1808
      %v1825 = vpack.c.b16 %v1446, %v1809
      %v1826 = vpack.c.b16 %v1448, %v1810
      %v1827 = vpack.c.b16 %v1450, %v1811
      %v1828 = vpack.c.b16 %v1452, %v1812
      %v1829 = vpack.c.b16 %v1454, %v1813
      %v1830 = vpack.c.b16 %v1456, %v1814
      %v1831 = vpack.c.b16 %v1458, %v1815
      %v1832 = vpack.c.b16 %v1460, %v1816
      %v1833 = vpack.c.b16 %v1462, %v1817
      %v1834 = vpack.c.b16 %v1464, %v1818
      %v1835 = vpack.c.b16 %v1466, %v1819
      %v1836 = vpack.c.b16 %v1468, %v1820
      %v1837 = vrot.slane %v1821, 1
      %v1838 = vrot.slane %v1549, 1
      %v1839 = vsel %vm812, %v1837, %v1838
      %v1840 = vrot.slane %v1822, 1
      %v1841 = vrot.slane %v1550, 1
      %v1842 = vsel %vm812, %v1840, %v1841
      %v1843 = vrot.slane %v1823, 1
      %v1844 = vrot.slane %v1551, 1
      %v1845 = vsel %vm812, %v1843, %v1844
      %v1846 = vrot.slane %v1824, 1
      %v1847 = vrot.slane %v1552, 1
      %v1848 = vsel %vm812, %v1846, %v1847
      %v1849 = vrot.slane %v1825, 1
      %v1850 = vrot.slane %v1553, 1
      %v1851 = vsel %vm812, %v1849, %v1850
      %v1852 = vrot.slane %v1826, 1
      %v1853 = vrot.slane %v1554, 1
      %v1854 = vsel %vm812, %v1852, %v1853
      %v1855 = vrot.slane %v1827, 1
      %v1856 = vrot.slane %v1555, 1
      %v1857 = vsel %vm812, %v1855, %v1856
      %v1858 = vrot.slane %v1828, 1
      %v1859 = vrot.slane %v1556, 1
      %v1860 = vsel %vm812, %v1858, %v1859
      %v1861 = vrot.slane %v1829, 1
      %v1862 = vrot.slane %v1557, 1
      %v1863 = vsel %vm812, %v1861, %v1862
      %v1864 = vrot.slane %v1830, 1
      %v1865 = vrot.slane %v1558, 1
      %v1866 = vsel %vm812, %v1864, %v1865
      %v1867 = vrot.slane %v1831, 1
      %v1868 = vrot.slane %v1559, 1
      %v1869 = vsel %vm812, %v1867, %v1868
      %v1870 = vrot.slane %v1832, 1
      %v1871 = vrot.slane %v1560, 1
      %v1872 = vsel %vm812, %v1870, %v1871
      %v1873 = vrot.slane %v1833, 1
      %v1874 = vrot.slane %v1561, 1
      %v1875 = vsel %vm812, %v1873, %v1874
      %v1876 = vrot.slane %v1834, 1
      %v1877 = vrot.slane %v1562, 1
      %v1878 = vsel %vm812, %v1876, %v1877
      %v1879 = vrot.slane %v1835, 1
      %v1880 = vrot.slane %v1563, 1
      %v1881 = vsel %vm812, %v1879, %v1880
      %v1882 = vrot.slane %v1836, 1
      %v1883 = vrot.slane %v1564, 1
      %v1884 = vsel %vm812, %v1882, %v1883
      %1885 = vrot.lane.b32.xlu0 %v1839, 32
      %v1886 = vpop.permute.xlu0 %1885
      %1887 = vrot.lane.b32.xlu0 %v1842, 32
      %v1888 = vpop.permute.xlu0 %1887
      %1889 = vrot.lane.b32.xlu0 %v1845, 32
      %v1890 = vpop.permute.xlu0 %1889
      %1891 = vrot.lane.b32.xlu0 %v1848, 32
      %v1892 = vpop.permute.xlu0 %1891
      %1893 = vrot.lane.b32.xlu0 %v1851, 32
      %v1894 = vpop.permute.xlu0 %1893
      %1895 = vrot.lane.b32.xlu0 %v1854, 32
      %v1896 = vpop.permute.xlu0 %1895
      %1897 = vrot.lane.b32.xlu0 %v1857, 32
      %v1898 = vpop.permute.xlu0 %1897
      %1899 = vrot.lane.b32.xlu0 %v1860, 32
      %v1900 = vpop.permute.xlu0 %1899
      %1901 = vrot.lane.b32.xlu0 %v1863, 32
      %v1902 = vpop.permute.xlu0 %1901
      %1903 = vrot.lane.b32.xlu0 %v1866, 32
      %v1904 = vpop.permute.xlu0 %1903
      %1905 = vrot.lane.b32.xlu0 %v1869, 32
      %v1906 = vpop.permute.xlu0 %1905
      %1907 = vrot.lane.b32.xlu0 %v1872, 32
      %v1908 = vpop.permute.xlu0 %1907
      %1909 = vrot.lane.b32.xlu0 %v1875, 32
      %v1910 = vpop.permute.xlu0 %1909
      %1911 = vrot.lane.b32.xlu0 %v1878, 32
      %v1912 = vpop.permute.xlu0 %1911
      %1913 = vrot.lane.b32.xlu0 %v1881, 32
      %v1914 = vpop.permute.xlu0 %1913
      %1915 = vrot.lane.b32.xlu0 %v1884, 32
      %v1916 = vpop.permute.xlu0 %1915
      %vm1917 = vcmask 31744
      %v1919 = vsel %vm1917, %v475, %v733
      %v1921 = vsel %vm1917, %v476, %v735
      %v1923 = vsel %vm1917, %v477, %v737
      %v1925 = vsel %vm1917, %v478, %v739
      %v1927 = vsel %vm1917, %v479, %v741
      %v1929 = vsel %vm1917, %v480, %v743
      %v1931 = vsel %vm1917, %v481, %v745
      %v1933 = vsel %vm1917, %v482, %v747
      %v1935 = vsel %vm1917, %v483, %v749
      %v1937 = vsel %vm1917, %v484, %v751
      %v1939 = vsel %vm1917, %v485, %v753
      %v1941 = vsel %vm1917, %v486, %v755
      %v1943 = vsel %vm1917, %v487, %v757
      %v1945 = vsel %vm1917, %v488, %v759
      %v1947 = vsel %vm1917, %v489, %v761
      %v1949 = vsel %vm1917, %v490, %v763
      %vm1950 = vcmask 64512
      %v1952 = vsel %vm1950, %v1919, %v862
      %v1954 = vsel %vm1950, %v1921, %v864
      %v1956 = vsel %vm1950, %v1923, %v866
      %v1958 = vsel %vm1950, %v1925, %v868
      %v1960 = vsel %vm1950, %v1927, %v870
      %v1962 = vsel %vm1950, %v1929, %v872
      %v1964 = vsel %vm1950, %v1931, %v874
      %v1966 = vsel %vm1950, %v1933, %v876
      %v1968 = vsel %vm1950, %v1935, %v878
      %v1970 = vsel %vm1950, %v1937, %v880
      %v1972 = vsel %vm1950, %v1939, %v882
      %v1974 = vsel %vm1950, %v1941, %v884
      %v1976 = vsel %vm1950, %v1943, %v886
      %v1978 = vsel %vm1950, %v1945, %v888
      %v1980 = vsel %vm1950, %v1947, %v890
      %v1982 = vsel %vm1950, %v1949, %v892
      %vm1983 = vcmask 97280
      %v1985 = vsel %vm1983, %v1952, %v974
      %v1987 = vsel %vm1983, %v1954, %v976
      %v1989 = vsel %vm1983, %v1956, %v978
      %v1991 = vsel %vm1983, %v1958, %v980
      %v1993 = vsel %vm1983, %v1960, %v982
      %v1995 = vsel %vm1983, %v1962, %v984
      %v1997 = vsel %vm1983, %v1964, %v986
      %v1999 = vsel %vm1983, %v1966, %v988
      %v2001 = vsel %vm1983, %v1968, %v990
      %v2003 = vsel %vm1983, %v1970, %v992
      %v2005 = vsel %vm1983, %v1972, %v994
      %v2007 = vsel %vm1983, %v1974, %v996
      %v2009 = vsel %vm1983, %v1976, %v998
      %v2011 = vsel %vm1983, %v1978, %v1000
      %v2013 = vsel %vm1983, %v1980, %v1002
      %v2015 = vsel %vm1983, %v1982, %v1004
      %vm2016 = vcmask 130048
      %v2018 = vsel %vm2016, %v1985, %v1246
      %v2020 = vsel %vm2016, %v1987, %v1248
      %v2022 = vsel %vm2016, %v1989, %v1250
      %v2024 = vsel %vm2016, %v1991, %v1252
      %v2026 = vsel %vm2016, %v1993, %v1254
      %v2028 = vsel %vm2016, %v1995, %v1256
      %v2030 = vsel %vm2016, %v1997, %v1258
      %v2032 = vsel %vm2016, %v1999, %v1260
      %v2034 = vsel %vm2016, %v2001, %v1262
      %v2036 = vsel %vm2016, %v2003, %v1264
      %v2038 = vsel %vm2016, %v2005, %v1266
      %v2040 = vsel %vm2016, %v2007, %v1268
      %v2042 = vsel %vm2016, %v2009, %v1270
      %v2044 = vsel %vm2016, %v2011, %v1272
      %v2046 = vsel %vm2016, %v2013, %v1274
      %v2048 = vsel %vm2016, %v2015, %v1276
      %vm2049 = vcmask 162816
      %v2051 = vsel %vm2049, %v2018, %v1374
      %v2053 = vsel %vm2049, %v2020, %v1376
      %v2055 = vsel %vm2049, %v2022, %v1378
      %v2057 = vsel %vm2049, %v2024, %v1380
      %v2059 = vsel %vm2049, %v2026, %v1382
      %v2061 = vsel %vm2049, %v2028, %v1384
      %v2063 = vsel %vm2049, %v2030, %v1386
      %v2065 = vsel %vm2049, %v2032, %v1388
      %v2067 = vsel %vm2049, %v2034, %v1390
      %v2069 = vsel %vm2049, %v2036, %v1392
      %v2071 = vsel %vm2049, %v2038, %v1394
      %v2073 = vsel %vm2049, %v2040, %v1396
      %v2075 = vsel %vm2049, %v2042, %v1398
      %v2077 = vsel %vm2049, %v2044, %v1400
      %v2079 = vsel %vm2049, %v2046, %v1402
      %v2081 = vsel %vm2049, %v2048, %v1404
      %vm2082 = vcmask 195584
      %v2084 = vsel %vm2082, %v2051, %v1486
      %v2086 = vsel %vm2082, %v2053, %v1488
      %v2088 = vsel %vm2082, %v2055, %v1490
      %v2090 = vsel %vm2082, %v2057, %v1492
      %v2092 = vsel %vm2082, %v2059, %v1494
      %v2094 = vsel %vm2082, %v2061, %v1496
      %v2096 = vsel %vm2082, %v2063, %v1498
      %v2098 = vsel %vm2082, %v2065, %v1500
      %v2100 = vsel %vm2082, %v2067, %v1502
      %v2102 = vsel %vm2082, %v2069, %v1504
      %v2104 = vsel %vm2082, %v2071, %v1506
      %v2106 = vsel %vm2082, %v2073, %v1508
      %v2108 = vsel %vm2082, %v2075, %v1510
      %v2110 = vsel %vm2082, %v2077, %v1512
      %v2112 = vsel %vm2082, %v2079, %v1514
      %v2114 = vsel %vm2082, %v2081, %v1516
      %vm2115 = vcmask 228352
      %v2117 = vsel %vm2115, %v2084, %v1758
      %v2119 = vsel %vm2115, %v2086, %v1760
      %v2121 = vsel %vm2115, %v2088, %v1762
      %v2123 = vsel %vm2115, %v2090, %v1764
      %v2125 = vsel %vm2115, %v2092, %v1766
      %v2127 = vsel %vm2115, %v2094, %v1768
      %v2129 = vsel %vm2115, %v2096, %v1770
      %v2131 = vsel %vm2115, %v2098, %v1772
      %v2133 = vsel %vm2115, %v2100, %v1774
      %v2135 = vsel %vm2115, %v2102, %v1776
      %v2137 = vsel %vm2115, %v2104, %v1778
      %v2139 = vsel %vm2115, %v2106, %v1780
      %v2141 = vsel %vm2115, %v2108, %v1782
      %v2143 = vsel %vm2115, %v2110, %v1784
      %v2145 = vsel %vm2115, %v2112, %v1786
      %v2147 = vsel %vm2115, %v2114, %v1788
      %vm2148 = vcmask 261120
      %v2150 = vsel %vm2148, %v2117, %v1886
      %v2152 = vsel %vm2148, %v2119, %v1888
      %v2154 = vsel %vm2148, %v2121, %v1890
      %v2156 = vsel %vm2148, %v2123, %v1892
      %v2158 = vsel %vm2148, %v2125, %v1894
      %v2160 = vsel %vm2148, %v2127, %v1896
      %v2162 = vsel %vm2148, %v2129, %v1898
      %v2164 = vsel %vm2148, %v2131, %v1900
      %v2166 = vsel %vm2148, %v2133, %v1902
      %v2168 = vsel %vm2148, %v2135, %v1904
      %v2170 = vsel %vm2148, %v2137, %v1906
      %v2172 = vsel %vm2148, %v2139, %v1908
      %v2174 = vsel %vm2148, %v2141, %v1910
      %v2176 = vsel %vm2148, %v2143, %v1912
      %v2178 = vsel %vm2148, %v2145, %v1914
      %v2180 = vsel %vm2148, %v2147, %v1916
      %v2181 = vld [vmem:[%s1] sm:$0xf]
      %v2182 = vld [vmem:[%s1 + $0x4] sm:$0xf]
      %v2183 = vld [vmem:[%s1 + $0x8] sm:$0xf]
      %v2184 = vld [vmem:[%s1 + $0xc] sm:$0xf]
      %v2185 = vld [vmem:[%s1 + $0x10] sm:$0x3]
      %v2191 = vunpack.c.l.b16 %v2181
      %v2192 = vunpack.c.l.b16 %v2182
      %v2193 = vunpack.c.l.b16 %v2183
      %v2194 = vunpack.c.l.b16 %v2184
      %v2195 = vunpack.c.l.b16 %v2185
      %v2196 = vpack.c.b16 %v2192, %v2191
      %v2197 = vpack.c.b16 %v2194, %v2193
      %v2198 = vpack.c.b16 %v2195, %v2195
      %vm2201 = vcmask 293888
      %v2202 = vsel %vm2201, %v2150, 0
      %v2204 = vsel %vm2201, %v2152, 0
      %v2206 = vsel %vm2201, %v2154, 0
      %v2208 = vsel %vm2201, %v2156, 0
      %v2210 = vsel %vm2201, %v2158, 0
      %v2212 = vsel %vm2201, %v2160, 0
      %v2214 = vsel %vm2201, %v2162, 0
      %v2216 = vsel %vm2201, %v2164, 0
      %v2218 = vsel %vm2201, %v2166, 0
      %v2220 = vsel %vm2201, %v2168, 0
      %v2222 = vsel %vm2201, %v2170, 0
      %v2224 = vsel %vm2201, %v2172, 0
      %v2226 = vsel %vm2201, %v2174, 0
      %v2228 = vsel %vm2201, %v2176, 0
      %v2230 = vsel %vm2201, %v2178, 0
      %v2232 = vsel %vm2201, %v2180, 0
      %vm2234 = vcmask 1041408
      %v2236 = vsel %vm2234, %v2198, 0
      %2238 = vmatpush.bf16.msra.mxu0 0
      %2239 = vmatpush.bf16.msra.mxu0 0
      %2240 = vmatpush.bf16.msra.mxu0 0
      %2241 = vmatpush.bf16.msra.mxu0 0
      %2242 = vmatpush.bf16.msra.mxu0 0
      %2243 = vmatpush.bf16.msra.mxu0 %v2236
      %2244 = vmatpush.bf16.msra.mxu0 %v2197
      %2245 = vmatpush.bf16.msra.mxu0 %v2196
      %2246 = vmatmul.bf16.gmra.mxu0 %v2202
      %v2247 = vpop.f32.mrf.mxu0
      %v2248 = vadd.f32 0.0, %v2247
      %v2249 = vpop.f32.mrf.mxu0
      %v2250 = vadd.f32 0.0, %v2249
      %2251 = vmatmul.bf16.gmra.mxu0 %v2204
      %v2252 = vpop.f32.mrf.mxu0
      %v2253 = vadd.f32 0.0, %v2252
      %v2254 = vpop.f32.mrf.mxu0
      %v2255 = vadd.f32 0.0, %v2254
      %2256 = vmatmul.bf16.gmra.mxu0 %v2206
      %v2257 = vpop.f32.mrf.mxu0
      %v2258 = vadd.f32 0.0, %v2257
      %v2259 = vpop.f32.mrf.mxu0
      %v2260 = vadd.f32 0.0, %v2259
      %2261 = vmatmul.bf16.gmra.mxu0 %v2208
      %v2262 = vpop.f32.mrf.mxu0
      %v2263 = vadd.f32 0.0, %v2262
      %v2264 = vpop.f32.mrf.mxu0
      %v2265 = vadd.f32 0.0, %v2264
      %2266 = vmatmul.bf16.gmra.mxu0 %v2210
      %v2267 = vpop.f32.mrf.mxu0
      %v2268 = vadd.f32 0.0, %v2267
      %v2269 = vpop.f32.mrf.mxu0
      %v2270 = vadd.f32 0.0, %v2269
      %2271 = vmatmul.bf16.gmra.mxu0 %v2212
      %v2272 = vpop.f32.mrf.mxu0
      %v2273 = vadd.f32 0.0, %v2272
      %v2274 = vpop.f32.mrf.mxu0
      %v2275 = vadd.f32 0.0, %v2274
      %2276 = vmatmul.bf16.gmra.mxu0 %v2214
      %v2277 = vpop.f32.mrf.mxu0
      %v2278 = vadd.f32 0.0, %v2277
      %v2279 = vpop.f32.mrf.mxu0
      %v2280 = vadd.f32 0.0, %v2279
      %2281 = vmatmul.bf16.gmra.mxu0 %v2216
      %v2282 = vpop.f32.mrf.mxu0
      %v2283 = vadd.f32 0.0, %v2282
      %v2284 = vpop.f32.mrf.mxu0
      %v2285 = vadd.f32 0.0, %v2284
      %2286 = vmatmul.bf16.gmra.mxu0 %v2218
      %v2287 = vpop.f32.mrf.mxu0
      %v2288 = vadd.f32 0.0, %v2287
      %v2289 = vpop.f32.mrf.mxu0
      %v2290 = vadd.f32 0.0, %v2289
      %2291 = vmatmul.bf16.gmra.mxu0 %v2220
      %v2292 = vpop.f32.mrf.mxu0
      %v2293 = vadd.f32 0.0, %v2292
      %v2294 = vpop.f32.mrf.mxu0
      %v2295 = vadd.f32 0.0, %v2294
      %2296 = vmatmul.bf16.gmra.mxu0 %v2222
      %v2297 = vpop.f32.mrf.mxu0
      %v2298 = vadd.f32 0.0, %v2297
      %v2299 = vpop.f32.mrf.mxu0
      %v2300 = vadd.f32 0.0, %v2299
      %2301 = vmatmul.bf16.gmra.mxu0 %v2224
      %v2302 = vpop.f32.mrf.mxu0
      %v2303 = vadd.f32 0.0, %v2302
      %v2304 = vpop.f32.mrf.mxu0
      %v2305 = vadd.f32 0.0, %v2304
      %2306 = vmatmul.bf16.gmra.mxu0 %v2226
      %v2307 = vpop.f32.mrf.mxu0
      %v2308 = vadd.f32 0.0, %v2307
      %v2309 = vpop.f32.mrf.mxu0
      %v2310 = vadd.f32 0.0, %v2309
      %2311 = vmatmul.bf16.gmra.mxu0 %v2228
      %v2312 = vpop.f32.mrf.mxu0
      %v2313 = vadd.f32 0.0, %v2312
      %v2314 = vpop.f32.mrf.mxu0
      %v2315 = vadd.f32 0.0, %v2314
      %2316 = vmatmul.bf16.gmra.mxu0 %v2230
      %v2317 = vpop.f32.mrf.mxu0
      %v2318 = vadd.f32 0.0, %v2317
      %v2319 = vpop.f32.mrf.mxu0
      %v2320 = vadd.f32 0.0, %v2319
      %2321 = vmatmul.bf16.gmra.mxu0 %v2232
      %v2322 = vpop.f32.mrf.mxu0
      %v2323 = vadd.f32 0.0, %v2322
      %v2324 = vpop.f32.mrf.mxu0
      %v2325 = vadd.f32 0.0, %v2324
      %2326 = vdwg.mxu0
      %v2327 = vpack.c.bf16 %v2248, %v2248
      %v2328 = vpack.c.bf16 %v2250, %v2250
      %v2329 = vpack.c.bf16 %v2253, %v2253
      %v2330 = vpack.c.bf16 %v2255, %v2255
      %v2331 = vpack.c.bf16 %v2258, %v2258
      %v2332 = vpack.c.bf16 %v2260, %v2260
      %v2333 = vpack.c.bf16 %v2263, %v2263
      %v2334 = vpack.c.bf16 %v2265, %v2265
      %v2335 = vpack.c.bf16 %v2268, %v2268
      %v2336 = vpack.c.bf16 %v2270, %v2270
      %v2337 = vpack.c.bf16 %v2273, %v2273
      %v2338 = vpack.c.bf16 %v2275, %v2275
      %v2339 = vpack.c.bf16 %v2278, %v2278
      %v2340 = vpack.c.bf16 %v2280, %v2280
      %v2341 = vpack.c.bf16 %v2283, %v2283
      %v2342 = vpack.c.bf16 %v2285, %v2285
      %v2343 = vpack.c.bf16 %v2288, %v2288
      %v2344 = vpack.c.bf16 %v2290, %v2290
      %v2345 = vpack.c.bf16 %v2293, %v2293
      %v2346 = vpack.c.bf16 %v2295, %v2295
      %v2347 = vpack.c.bf16 %v2298, %v2298
      %v2348 = vpack.c.bf16 %v2300, %v2300
      %v2349 = vpack.c.bf16 %v2303, %v2303
      %v2350 = vpack.c.bf16 %v2305, %v2305
      %v2351 = vpack.c.bf16 %v2308, %v2308
      %v2352 = vpack.c.bf16 %v2310, %v2310
      %v2353 = vpack.c.bf16 %v2313, %v2313
      %v2354 = vpack.c.bf16 %v2315, %v2315
      %v2355 = vpack.c.bf16 %v2318, %v2318
      %v2356 = vpack.c.bf16 %v2320, %v2320
      %v2357 = vpack.c.bf16 %v2323, %v2323
      %v2358 = vpack.c.bf16 %v2325, %v2325
      %vm2359 = vcmask 27648
      %2360 = vst.msk [vmem:[%s208] sm:$0xf] %vm2359, %v2327
      %2361 = vst.msk [vmem:[%s208 + $0x4] sm:$0xf] %vm2359, %v2328
      %2362 = vst.msk [vmem:[%s208 + $0x8] sm:$0xf] %vm2359, %v2329
      %2363 = vst.msk [vmem:[%s208 + $0xc] sm:$0xf] %vm2359, %v2330
      %2364 = vst.msk [vmem:[%s208 + $0x10] sm:$0xf] %vm2359, %v2331
      %2365 = vst.msk [vmem:[%s208 + $0x14] sm:$0xf] %vm2359, %v2332
      %2366 = vst.msk [vmem:[%s208 + $0x18] sm:$0xf] %vm2359, %v2333
      %2367 = vst.msk [vmem:[%s208 + $0x1c] sm:$0xf] %vm2359, %v2334
      %2368 = vst.msk [vmem:[%s208 + $0x20] sm:$0xf] %vm2359, %v2335
      %2369 = vst.msk [vmem:[%s208 + $0x24] sm:$0xf] %vm2359, %v2336
      %2370 = vst.msk [vmem:[%s208 + $0x28] sm:$0xf] %vm2359, %v2337
      %2371 = vst.msk [vmem:[%s208 + $0x2c] sm:$0xf] %vm2359, %v2338
      %2372 = vst.msk [vmem:[%s208 + $0x30] sm:$0xf] %vm2359, %v2339
      %2373 = vst.msk [vmem:[%s208 + $0x34] sm:$0xf] %vm2359, %v2340
      %2374 = vst.msk [vmem:[%s208 + $0x38] sm:$0xf] %vm2359, %v2341
      %2375 = vst.msk [vmem:[%s208 + $0x3c] sm:$0xf] %vm2359, %v2342
      %2376 = vst.msk [vmem:[%s208 + $0x40] sm:$0xf] %vm2359, %v2343
      %2377 = vst.msk [vmem:[%s208 + $0x44] sm:$0xf] %vm2359, %v2344
      %2378 = vst.msk [vmem:[%s208 + $0x48] sm:$0xf] %vm2359, %v2345
      %2379 = vst.msk [vmem:[%s208 + $0x4c] sm:$0xf] %vm2359, %v2346
      %2380 = vst.msk [vmem:[%s208 + $0x50] sm:$0xf] %vm2359, %v2347
      %2381 = vst.msk [vmem:[%s208 + $0x54] sm:$0xf] %vm2359, %v2348
      %2382 = vst.msk [vmem:[%s208 + $0x58] sm:$0xf] %vm2359, %v2349
      %2383 = vst.msk [vmem:[%s208 + $0x5c] sm:$0xf] %vm2359, %v2350
      %2384 = vst.msk [vmem:[%s208 + $0x60] sm:$0xf] %vm2359, %v2351
      %2385 = vst.msk [vmem:[%s208 + $0x64] sm:$0xf] %vm2359, %v2352
      %2386 = vst.msk [vmem:[%s208 + $0x68] sm:$0xf] %vm2359, %v2353
      %2387 = vst.msk [vmem:[%s208 + $0x6c] sm:$0xf] %vm2359, %v2354
      %2388 = vst.msk [vmem:[%s208 + $0x70] sm:$0xf] %vm2359, %v2355
      %2389 = vst.msk [vmem:[%s208 + $0x74] sm:$0xf] %vm2359, %v2356
      %2390 = vst.msk [vmem:[%s208 + $0x78] sm:$0xf] %vm2359, %v2357
      %2391 = vst.msk [vmem:[%s208 + $0x7c] sm:$0xf] %vm2359, %v2358
      %v2392 = vsel %vm1917, %v2248, 0.0
      %v2393 = vsel %vm1917, %v2250, 0.0
      %v2394 = vadd.f32 %v2392, %v2393
      %v2395 = vsel %vm1917, %v2253, 0.0
      %v2396 = vadd.f32 %v2394, %v2395
      %v2397 = vsel %vm1917, %v2255, 0.0
      %v2398 = vadd.f32 %v2396, %v2397
      %v2399 = vsel %vm1917, %v2258, 0.0
      %v2400 = vadd.f32 %v2398, %v2399
      %v2401 = vsel %vm1917, %v2260, 0.0
      %v2402 = vadd.f32 %v2400, %v2401
      %v2403 = vsel %vm1917, %v2263, 0.0
      %v2404 = vadd.f32 %v2402, %v2403
      %v2405 = vsel %vm1917, %v2265, 0.0
      %v2406 = vadd.f32 %v2404, %v2405
      %v2407 = vsel %vm1917, %v2268, 0.0
      %v2408 = vadd.f32 %v2406, %v2407
      %v2409 = vsel %vm1917, %v2270, 0.0
      %v2410 = vadd.f32 %v2408, %v2409
      %v2411 = vsel %vm1917, %v2273, 0.0
      %v2412 = vadd.f32 %v2410, %v2411
      %v2413 = vsel %vm1917, %v2275, 0.0
      %v2414 = vadd.f32 %v2412, %v2413
      %v2415 = vsel %vm1917, %v2278, 0.0
      %v2416 = vadd.f32 %v2414, %v2415
      %v2417 = vsel %vm1917, %v2280, 0.0
      %v2418 = vadd.f32 %v2416, %v2417
      %v2419 = vsel %vm1917, %v2283, 0.0
      %v2420 = vadd.f32 %v2418, %v2419
      %v2421 = vsel %vm1917, %v2285, 0.0
      %v2422 = vadd.f32 %v2420, %v2421
      %v2423 = vsel %vm1917, %v2288, 0.0
      %v2424 = vadd.f32 %v2422, %v2423
      %v2425 = vsel %vm1917, %v2290, 0.0
      %v2426 = vadd.f32 %v2424, %v2425
      %v2427 = vsel %vm1917, %v2293, 0.0
      %v2428 = vadd.f32 %v2426, %v2427
      %v2429 = vsel %vm1917, %v2295, 0.0
      %v2430 = vadd.f32 %v2428, %v2429
      %v2431 = vsel %vm1917, %v2298, 0.0
      %v2432 = vadd.f32 %v2430, %v2431
      %v2433 = vsel %vm1917, %v2300, 0.0
      %v2434 = vadd.f32 %v2432, %v2433
      %v2435 = vsel %vm1917, %v2303, 0.0
      %v2436 = vadd.f32 %v2434, %v2435
      %v2437 = vsel %vm1917, %v2305, 0.0
      %v2438 = vadd.f32 %v2436, %v2437
      %v2439 = vsel %vm1917, %v2308, 0.0
      %v2440 = vadd.f32 %v2438, %v2439
      %v2441 = vsel %vm1917, %v2310, 0.0
      %v2442 = vadd.f32 %v2440, %v2441
      %v2443 = vsel %vm1917, %v2313, 0.0
      %v2444 = vadd.f32 %v2442, %v2443
      %v2445 = vsel %vm1917, %v2315, 0.0
      %v2446 = vadd.f32 %v2444, %v2445
      %v2447 = vsel %vm1917, %v2318, 0.0
      %v2448 = vadd.f32 %v2446, %v2447
      %v2449 = vsel %vm1917, %v2320, 0.0
      %v2450 = vadd.f32 %v2448, %v2449
      %v2451 = vsel %vm1917, %v2323, 0.0
      %v2452 = vadd.f32 %v2450, %v2451
      %v2453 = vsel %vm1917, %v2325, 0.0
      %v2454 = vadd.f32 %v2452, %v2453
      %v2455 = vrot.slane %v2454, 4
      %v2456 = vadd.f32 %v2454, %v2455
      %v2457 = vrot.slane %v2456, 2
      %v2458 = vadd.f32 %v2456, %v2457
      %v2459 = vrot.slane %v2458, 1
      %v2460 = vadd.f32 %v2458, %v2459
      %vm2461 = vcmask 24576
      %2462 = vst.msk [vmem:[%s212] sm:$0x1] %vm2461, %v2460
      %v2463 = vmul.f32 %v2248, %v2248
      %v2464 = vmul.f32 %v2250, %v2250
      %v2465 = vmul.f32 %v2253, %v2253
      %v2466 = vmul.f32 %v2255, %v2255
      %v2467 = vmul.f32 %v2258, %v2258
      %v2468 = vmul.f32 %v2260, %v2260
      %v2469 = vmul.f32 %v2263, %v2263
      %v2470 = vmul.f32 %v2265, %v2265
      %v2471 = vmul.f32 %v2268, %v2268
      %v2472 = vmul.f32 %v2270, %v2270
      %v2473 = vmul.f32 %v2273, %v2273
      %v2474 = vmul.f32 %v2275, %v2275
      %v2475 = vmul.f32 %v2278, %v2278
      %v2476 = vmul.f32 %v2280, %v2280
      %v2477 = vmul.f32 %v2283, %v2283
      %v2478 = vmul.f32 %v2285, %v2285
      %v2479 = vmul.f32 %v2288, %v2288
      %v2480 = vmul.f32 %v2290, %v2290
      %v2481 = vmul.f32 %v2293, %v2293
      %v2482 = vmul.f32 %v2295, %v2295
      %v2483 = vmul.f32 %v2298, %v2298
      %v2484 = vmul.f32 %v2300, %v2300
      %v2485 = vmul.f32 %v2303, %v2303
      %v2486 = vmul.f32 %v2305, %v2305
      %v2487 = vmul.f32 %v2308, %v2308
      %v2488 = vmul.f32 %v2310, %v2310
      %v2489 = vmul.f32 %v2313, %v2313
      %v2490 = vmul.f32 %v2315, %v2315
      %v2491 = vmul.f32 %v2318, %v2318
      %v2492 = vmul.f32 %v2320, %v2320
      %v2493 = vmul.f32 %v2323, %v2323
      %v2494 = vmul.f32 %v2325, %v2325
      %v2495 = vsel %vm1917, %v2463, 0.0
      %v2496 = vsel %vm1917, %v2464, 0.0
      %v2497 = vadd.f32 %v2495, %v2496
      %v2498 = vsel %vm1917, %v2465, 0.0
      %v2499 = vadd.f32 %v2497, %v2498
      %v2500 = vsel %vm1917, %v2466, 0.0
      %v2501 = vadd.f32 %v2499, %v2500
      %v2502 = vsel %vm1917, %v2467, 0.0
      %v2503 = vadd.f32 %v2501, %v2502
      %v2504 = vsel %vm1917, %v2468, 0.0
      %v2505 = vadd.f32 %v2503, %v2504
      %v2506 = vsel %vm1917, %v2469, 0.0
      %v2507 = vadd.f32 %v2505, %v2506
      %v2508 = vsel %vm1917, %v2470, 0.0
      %v2509 = vadd.f32 %v2507, %v2508
      %v2510 = vsel %vm1917, %v2471, 0.0
      %v2511 = vadd.f32 %v2509, %v2510
      %v2512 = vsel %vm1917, %v2472, 0.0
      %v2513 = vadd.f32 %v2511, %v2512
      %v2514 = vsel %vm1917, %v2473, 0.0
      %v2515 = vadd.f32 %v2513, %v2514
      %v2516 = vsel %vm1917, %v2474, 0.0
      %v2517 = vadd.f32 %v2515, %v2516
      %v2518 = vsel %vm1917, %v2475, 0.0
      %v2519 = vadd.f32 %v2517, %v2518
      %v2520 = vsel %vm1917, %v2476, 0.0
      %v2521 = vadd.f32 %v2519, %v2520
      %v2522 = vsel %vm1917, %v2477, 0.0
      %v2523 = vadd.f32 %v2521, %v2522
      %v2524 = vsel %vm1917, %v2478, 0.0
      %v2525 = vadd.f32 %v2523, %v2524
      %v2526 = vsel %vm1917, %v2479, 0.0
      %v2527 = vadd.f32 %v2525, %v2526
      %v2528 = vsel %vm1917, %v2480, 0.0
      %v2529 = vadd.f32 %v2527, %v2528
      %v2530 = vsel %vm1917, %v2481, 0.0
      %v2531 = vadd.f32 %v2529, %v2530
      %v2532 = vsel %vm1917, %v2482, 0.0
      %v2533 = vadd.f32 %v2531, %v2532
      %v2534 = vsel %vm1917, %v2483, 0.0
      %v2535 = vadd.f32 %v2533, %v2534
      %v2536 = vsel %vm1917, %v2484, 0.0
      %v2537 = vadd.f32 %v2535, %v2536
      %v2538 = vsel %vm1917, %v2485, 0.0
      %v2539 = vadd.f32 %v2537, %v2538
      %v2540 = vsel %vm1917, %v2486, 0.0
      %v2541 = vadd.f32 %v2539, %v2540
      %v2542 = vsel %vm1917, %v2487, 0.0
      %v2543 = vadd.f32 %v2541, %v2542
      %v2544 = vsel %vm1917, %v2488, 0.0
      %v2545 = vadd.f32 %v2543, %v2544
      %v2546 = vsel %vm1917, %v2489, 0.0
      %v2547 = vadd.f32 %v2545, %v2546
      %v2548 = vsel %vm1917, %v2490, 0.0
      %v2549 = vadd.f32 %v2547, %v2548
      %v2550 = vsel %vm1917, %v2491, 0.0
      %v2551 = vadd.f32 %v2549, %v2550
      %v2552 = vsel %vm1917, %v2492, 0.0
      %v2553 = vadd.f32 %v2551, %v2552
      %v2554 = vsel %vm1917, %v2493, 0.0
      %v2555 = vadd.f32 %v2553, %v2554
      %v2556 = vsel %vm1917, %v2494, 0.0
      %v2557 = vadd.f32 %v2555, %v2556
      %v2558 = vrot.slane %v2557, 4
      %v2559 = vadd.f32 %v2557, %v2558
      %v2560 = vrot.slane %v2559, 2
      %v2561 = vadd.f32 %v2559, %v2560
      %v2562 = vrot.slane %v2561, 1
      %v2563 = vadd.f32 %v2561, %v2562
      %2564 = vst.msk [vmem:[%s215] sm:$0x1] %vm2461, %v2563
      %s2565 = smul.u32 32, %s16
      %p2566 = scmp.lt.s32.totalorder %s2565, 63
      %s2567 = scalar_select %p2566, %s2565, 63
      %s2568 = smul.addr %s2567, 4
      %s2569 = scalar_lea.vmem %s2, %s2568
      %p2570 = scmp.lt.s32.totalorder %s16, 1
      %s2571 = scalar_select %p2570, %s16, 1
      %s2572 = scalar_lea.vmem %s3, %s2571
      %p2573 = scmp.lt.s32.totalorder %s16, 1
      %s2574 = scalar_select %p2573, %s16, 1
      %s2575 = scalar_lea.vmem %s4, %s2574
      // Predicated region
      $region29: #{up_block_forward.8} parent=27 // pred_check
        %p2576 = pneg %p81
      $region30: #{up_block_forward.8} parent=27 // pred_check_branch
        %2578 = sbr.rel (%p2576) target = $region32
      $region31: #{up_block_forward.8} parent=27 // pred_region
        %s2579 = smul.u32 32, %s16
      $region32: #{up_block_forward.8} parent=27 // pred_fallthru
        _
      // Predicated region
      $region33: #{up_block_forward.8} parent=27 // pred_check
        %p2580 = pneg %p107
      $region34: #{up_block_forward.8} parent=27 // pred_check_branch
        %2582 = sbr.rel (%p2580) target = $region36
      $region35: #{up_block_forward.8} parent=27 // pred_region
        _
      $region36: #{up_block_forward.8} parent=27 // pred_fallthru
        _
      // Predicated region
      $region37: #{up_block_forward.8} parent=27 // pred_check
        %p2583 = pneg %p133
      $region38: #{up_block_forward.8} parent=27 // pred_check_branch
        %2585 = sbr.rel (%p2583) target = $region40
      $region39: #{up_block_forward.8} parent=27 // pred_region
        _
      $region40: #{up_block_forward.8} parent=27 // pred_fallthru
        _
    $region28: #{up_block_forward.8} parent=5 // pred_fallthru
      _
    %p2586 = scmp.le.s32.totalorder 2, %s11
    // Predicated region
    $region41: #{up_block_forward.8} parent=5 // pred_check
      %p2587 = pneg %p2586
    $region42: #{up_block_forward.8} parent=5 // pred_check_branch
      %2589 = sbr.rel (%p2587) target = $region44
    $region43: #{up_block_forward.8} parent=5 // pred_region
      %s2590 = ssub.s32 %s11, 2
      // Predicated region
      $region45: #{up_block_forward.8} parent=43 // pred_check
        %p2591 = pneg %p87
      $region46: #{up_block_forward.8} parent=43 // pred_check_branch
        %2593 = sbr.rel (%p2591) target = $region48
      $region47: #{up_block_forward.8} parent=43 // pred_region
        %s2594 = smul.u32 32, %s17
        %p2595 = scmp.lt.s32.totalorder %s2594, 63
        %s2596 = scalar_select %p2595, %s2594, 63
        %s2597 = smul.addr %s2596, 4
        %s2598 = scalar_lea.vmem %s2, %s2597
      $region48: #{up_block_forward.8} parent=43 // pred_fallthru
        _
      // Predicated region
      $region49: #{up_block_forward.8} parent=43 // pred_check
        %p2599 = pneg %p113
      $region50: #{up_block_forward.8} parent=43 // pred_check_branch
        %2601 = sbr.rel (%p2599) target = $region52
      $region51: #{up_block_forward.8} parent=43 // pred_region
        %p2602 = scmp.lt.s32.totalorder %s17, 1
        %s2603 = scalar_select %p2602, %s17, 1
        %s2604 = scalar_lea.vmem %s3, %s2603
      $region52: #{up_block_forward.8} parent=43 // pred_fallthru
        _
      // Predicated region
      $region53: #{up_block_forward.8} parent=43 // pred_check
        %p2605 = pneg %p139
      $region54: #{up_block_forward.8} parent=43 // pred_check_branch
        %2607 = sbr.rel (%p2605) target = $region56
      $region55: #{up_block_forward.8} parent=43 // pred_region
        %p2608 = scmp.lt.s32.totalorder %s17, 1
        %s2609 = scalar_select %p2608, %s17, 1
        %s2610 = scalar_lea.vmem %s4, %s2609
      $region56: #{up_block_forward.8} parent=43 // pred_fallthru
        _
    $region44: #{up_block_forward.8} parent=5 // pred_fallthru
      _
  $region6: #{up_block_forward.8} parent=0 // loop_footer
    %s15 = sadd.s32 1, %s11
  $region7: #{up_block_forward.8} parent=0 // loop_footer_branch
    %10 = sbr.rel target = $region3
  $region8: #{up_block_forward.8} parent=0 // loop_exit
    _

</llo_original>
